<compile_context>
chip_gen: v7x
topology: tpu7x:2x2x1
jax: 0.10.0
libtpu: 0.0.40
codegen_flags: <defaults>
</compile_context>

<pallas_src>
import math

import jax
import jax.numpy as jnp
from jax import lax
from jax.experimental import pallas as pl
from jax.experimental.pallas import tpu as pltpu

N_NODES = 12                 # in_dim = 192 = 12 nodes * 16 features
GCN_IN = 2
GCN_HID = 16
IN_DIM = N_NODES * GCN_HID   # 192
MID = 64
OUT_CH = 3 + 3 + 2 + 2       # 10
BN_EPS = 1e-5
LEAKY_SLOPE = 0.01           # F.leaky_relu default

# Largest packed (B*T padded to 128) column count processed as one block.
MAX_PACKED_COLS = 4096


def _round_up(v, m):
    return (v + m - 1) // m * m


# --------------------------------------------------------------------------
# Fused Pallas kernel. Everything is channel-major (C, cols) with the packed
# time/batch axis on lanes. `t_seg` is the per-segment length used to mask
# conv reads that would cross a segment (= batch element) boundary.
# --------------------------------------------------------------------------
def _make_kernel(t_seg):
    def kernel(x_ref,                      # (1, 24, NC)   input, channel-major
               wf_ref, gsh_ref,            # (192,24)bf16, (192,1)f32  GCN+BN folded
               wstk_ref,                   # (224,192)bf16 [Watt; a1-proj; pad; a2-proj; pad]
               w1_ref, sh1_ref,            # (64,192)bf16, (64,1)f32   conv1(k=1)+BN
               w2_ref, sh2_ref,            # (64,192)bf16, (64,1)f32   conv2(k=3,d=1)+BN
               w3_ref, sh3_ref,            # (64,192)bf16, (64,1)f32   conv3(k=3,d=2)+BN
               wc_ref,                     # (10,192)bf16              classifier(k=3,d=2)
               out_ref,                    # (1, 10, NC) f32
               im_ref):                    # (192, NC) bf16 scratch (im2col slab)
        nc = x_ref.shape[-1]
        x = x_ref[0].astype(jnp.bfloat16)                          # (24, NC)

        # Segment-boundary masks for the dilated convs (pad == dilation).
        col = lax.broadcasted_iota(jnp.int32, (1, nc), 1)
        tmod = col % t_seg
        m_prev = (tmod >= 1, tmod >= 2)          # data from t-d exists in segment
        m_next = (tmod < t_seg - 1, tmod < t_seg - 2)   # data from t+d exists

        # --- GraphConvolution + bias + BatchNorm1d(16) + ReLU (all folded) ---
        h = jnp.dot(wf_ref[...], x, preferred_element_type=jnp.float32) + gsh_ref[...]
        h = jnp.maximum(h, 0.0)                                    # (192, NC) f32

        # --- GraphAttentionLayer: one stacked MXU pass -> wh / ei / ej ---
        big = jnp.dot(wstk_ref[...], h.astype(jnp.bfloat16),
                      preferred_element_type=jnp.float32)          # (224, NC)
        wh = big[:IN_DIM]                                          # (192, NC)
        ei = big[IN_DIM:IN_DIM + N_NODES]                          # (12, NC)  a1.Wh_i
        ej = big[IN_DIM + 16:IN_DIM + 16 + N_NODES]                # (12, NC)  a2.Wh_j

        # e[j,i,col] = leaky_relu(ei[i]+ej[j]); softmax over i (torch dim=1).
        e = ei[None, :, :] + ej[:, None, :]                        # (12, 12, NC)
        e = jnp.where(e > 0, e, LEAKY_SLOPE * e)
        e = jnp.exp(e - jnp.max(e, axis=1, keepdims=True))
        att = e * pl.reciprocal(jnp.sum(e, axis=1, keepdims=True), approx=True)

        # h'[i*16+k] = sum_j att[j,i] * wh[j*16+k]  (flat (192,NC) accumulation)
        hp = None
        for j in range(N_NODES):
            a_rep = jnp.broadcast_to(att[j][:, None, :],
                                     (N_NODES, GCN_HID, nc)).reshape(IN_DIM, nc)
            wh_t = jnp.broadcast_to(wh[j * GCN_HID:(j + 1) * GCN_HID][None, :, :],
                                    (N_NODES, GCN_HID, nc)).reshape(IN_DIM, nc)
            term = a_rep * wh_t
            hp = term if hp is None else hp + term                 # (192, NC) f32

        # --- temporal stack: k=3 convs as roll-based im2col + one MXU pass ---
        def assemble(y, d):
            prev = jnp.where(m_prev[d - 1], pltpu.roll(y, d, 1), 0.0)       # y[t-d]
            nxt = jnp.where(m_next[d - 1], pltpu.roll(y, nc - d, 1), 0.0)   # y[t+d]
            im_ref[0:MID, :] = prev.astype(jnp.bfloat16)
            im_ref[MID:2 * MID, :] = y.astype(jnp.bfloat16)
            im_ref[2 * MID:3 * MID, :] = nxt.astype(jnp.bfloat16)

        # conv1 (k=1) + BN + ReLU
        y = jnp.maximum(
            jnp.dot(w1_ref[...], hp.astype(jnp.bfloat16),
                    preferred_element_type=jnp.float32) + sh1_ref[...], 0.0)
        # conv2 (k=3, pad=1, dil=1) + BN + ReLU
        assemble(y, 1)
        y = jnp.maximum(
            jnp.dot(w2_ref[...], im_ref[...],
                    preferred_element_type=jnp.float32) + sh2_ref[...], 0.0)
        # conv3 (k=3, pad=2, dil=2) + BN + ReLU
        assemble(y, 2)
        y = jnp.maximum(
            jnp.dot(w3_ref[...], im_ref[...],
                    preferred_element_type=jnp.float32) + sh3_ref[...], 0.0)
        # classifier conv (k=3, pad=2, dil=2), no BN/ReLU
        assemble(y, 2)
        out_ref[0] = jnp.dot(wc_ref[...], im_ref[...],
                             preferred_element_type=jnp.float32)   # (10, NC)

    return kernel


# --------------------------------------------------------------------------
# Wrapper: fold adj/W/BN into lane-dense fused bf16 weights, pack B*T onto
# lanes (or fall back to per-batch blocks), call the kernel.
# --------------------------------------------------------------------------
def _full_spec(a):
    nd = a.ndim
    return pl.BlockSpec(a.shape, lambda i, _nd=nd: (0,) * _nd)


def _prepare_weights(params):
    eye = jnp.eye(N_NODES, dtype=jnp.float32)
    bn_s = params['bn1_scale'].reshape(-1)                       # (16,)
    bn_sh = params['bn1_shift'].reshape(-1)
    b_gc = params['b_gc'].reshape(-1)

    # fused GCN:  h[i*16+k] = bn_s[k] * (sum_{j,c} adj[i,j] W_gc[c,k] x[j*2+c] + b[k]) + bn_sh[k]
    wf = jnp.kron(params['adj'], params['w_gc'].T)               # (192, 24)
    g_scale = jnp.tile(bn_s, N_NODES)[:, None]                   # (192, 1)
    g_shift = jnp.tile(b_gc * bn_s + bn_sh, N_NODES)[:, None]    # (192, 1)
    wf_s = (wf * g_scale).astype(jnp.bfloat16)

    # stacked attention projections: [kron(I,W^T); kron(I,(W a1)^T); 0; kron(I,(W a2)^T); 0]
    watt_bt = jnp.kron(eye, params['w_att'].T)                   # (192, 192)
    proj1 = jnp.kron(eye, (params['w_att'] @ params['a1']).reshape(1, GCN_HID))
    proj2 = jnp.kron(eye, (params['w_att'] @ params['a2']).reshape(1, GCN_HID))
    pad4 = jnp.zeros((4, IN_DIM), jnp.float32)
    wstack = jnp.concatenate([watt_bt, proj1, pad4, proj2, pad4],
                             axis=0).astype(jnp.bfloat16)        # (224, 192)

    # temporal convs: BN scale folded into the (im2col-flattened) bf16 weights
    w1_s = (params['w_c1'] * params['s1']).astype(jnp.bfloat16)                       # (64,192)
    w2_s = (params['w_c2'].transpose(0, 2, 1).reshape(MID, 3 * MID)
            * params['s2']).astype(jnp.bfloat16)
    w3_s = (params['w_c3'].transpose(0, 2, 1).reshape(MID, 3 * MID)
            * params['s3']).astype(jnp.bfloat16)
    wc_f = params['w_cls'].transpose(0, 2, 1).reshape(OUT_CH, 3 * MID).astype(jnp.bfloat16)

    return (wf_s, g_shift, wstack,
            w1_s, params['sh1'], w2_s, params['sh2'],
            w3_s, params['sh3'], wc_f)


@jax.jit
def auwgcn_forward(x, params):
    b, t, n, c = x.shape
    assert n == N_NODES and c == GCN_IN
    weights = _prepare_weights(params)

    xc = x.reshape(b, t, n * c).transpose(0, 2, 1)               # (B, 24, T)
    total = b * t
    lpad = _round_up(total, 128)
    packed = lpad <= MAX_PACKED_COLS

    if packed:
        # Pack batch into the lane axis: column p = b*T + t, padded to 128s.
        xg = xc.transpose(1, 0, 2).reshape(1, n * c, total)
        xg = jnp.pad(xg, ((0, 0), (0, 0), (0, lpad - total)))    # (1, 24, Lpad)
        g, ncols = 1, lpad
    else:
        # Fallback: one batch element per (parallel) grid step, T padded to 128.
        # TODO(synk): for very long sequences additionally tile T with a
        # 5-column halo (receptive field of conv2+conv3+classifier).
        tp = _round_up(t, 128)
        xg = jnp.pad(xc, ((0, 0), (0, 0), (0, tp - t)))          # (B, 24, Tp)
        g, ncols = b, tp

    in_specs = [pl.BlockSpec((1, n * c, ncols), lambda i: (i, 0, 0))]
    in_specs += [_full_spec(w) for w in weights]

    out = pl.pallas_call(
        _make_kernel(t),
        out_shape=jax.ShapeDtypeStruct((g, OUT_CH, ncols), jnp.float32),
        grid=(g,),
        in_specs=in_specs,
        out_specs=pl.BlockSpec((1, OUT_CH, ncols), lambda i: (i, 0, 0)),
        scratch_shapes=[pltpu.VMEM((3 * MID, ncols), jnp.bfloat16)],
        compiler_params=pltpu.CompilerParams(
            dimension_semantics=("parallel",),
            vmem_limit_bytes=48 * 1024 * 1024),   # fits v7x's 64MiB VMEM too
    )(xg, *weights)

    if packed:
        return out[0, :, :total].reshape(OUT_CH, b, t).transpose(1, 0, 2)
    return out[:, :, :t]


# --------------------------------------------------------------------------
# Deterministic parameter construction (mirrors the module's __init__ shapes)
# --------------------------------------------------------------------------
def init_params(key):
    ks = jax.random.split(key, 12)
    stdv = 1.0 / math.sqrt(GCN_HID)

    def uni(k, shape, s):
        return jax.random.uniform(k, shape, jnp.float32, -s, s)

    w_gc = uni(ks[0], (GCN_IN, GCN_HID), stdv)          # GraphConvolution.weight
    b_gc = uni(ks[1], (1, GCN_HID), stdv)               # GraphConvolution.bias
    w_att = uni(ks[2], (GCN_HID, GCN_HID), stdv)        # GraphAttentionLayer.W
    a_att = uni(ks[3], (2 * GCN_HID, 1), stdv)          # GraphAttentionLayer.a
    a1, a2 = a_att[:GCN_HID], a_att[GCN_HID:]

    def folded_bn(k, shape):
        k1, k2, k3, k4 = jax.random.split(k, 4)
        gamma = jax.random.uniform(k1, shape, jnp.float32, 0.5, 1.5)
        beta = 0.1 * jax.random.normal(k2, shape, jnp.float32)
        mean = 0.1 * jax.random.normal(k3, shape, jnp.float32)
        var = jax.random.uniform(k4, shape, jnp.float32, 0.5, 1.5)
        scale = gamma / jnp.sqrt(var + BN_EPS)
        return scale, beta - mean * scale

    bn1_scale, bn1_shift = folded_bn(ks[4], (1, GCN_HID))
    s1, sh1 = folded_bn(ks[5], (MID, 1))
    s2, sh2 = folded_bn(ks[6], (MID, 1))
    s3, sh3 = folded_bn(ks[7], (MID, 1))

    def kaiming(k, shape):                              # kaiming_normal_, fan_in
        fan_in = shape[1] * (shape[2] if len(shape) == 3 else 1)
        return math.sqrt(2.0 / fan_in) * jax.random.normal(k, shape, jnp.float32)

    w_c1 = kaiming(ks[8], (MID, IN_DIM))                # Conv1d(192,64,k=1) squeezed
    w_c2 = kaiming(ks[9], (MID, MID, 3))                # Conv1d(64,64,k=3,p=1)
    w_c3 = kaiming(ks[10], (MID, MID, 3))               # Conv1d(64,64,k=3,p=2,d=2)
    w_cls = kaiming(ks[11], (OUT_CH, MID, 3))           # Conv1d(64,10,k=3,p=2,d=2)

    # TODO(synk): the original loads adj from assets/{dataset}.npy; replaced here
    # with a deterministic symmetric-normalized ring+self-loop adjacency.
    idx = jnp.arange(N_NODES)
    A = (jnp.abs(idx[:, None] - idx[None, :]) <= 1).astype(jnp.float32)
    deg = A.sum(1)
    adj = A / jnp.sqrt(deg[:, None] * deg[None, :])

    return dict(adj=adj, w_gc=w_gc, b_gc=b_gc,
                bn1_scale=bn1_scale, bn1_shift=bn1_shift,
                w_att=w_att, a1=a1, a2=a2,
                w_c1=w_c1, s1=s1, sh1=sh1,
                w_c2=w_c2, s2=s2, sh2=sh2,
                w_c3=w_c3, s3=s3, sh3=sh3,
                w_cls=w_cls)


# --------------------------------------------------------------------------
# Pure-JAX reference (original, un-fused math, f32 HIGHEST) for correctness
# --------------------------------------------------------------------------
def reference_forward(x, params):
    hp = jax.lax.Precision.HIGHEST
    b, t, n, c = x.shape
    xr = x.reshape(b * t, n, c)
    support = jnp.einsum('bnc,ck->bnk', xr, params['w_gc'], precision=hp)
    h = jnp.einsum('ij,bjk->bik', params['adj'], support,
                   precision=hp) + params['b_gc'][None]
    h = jnp.maximum(h * params['bn1_scale'][None] + params['bn1_shift'][None], 0.0)
    wh = jnp.einsum('bnc,co->bno', h, params['w_att'], precision=hp)
    ei = jnp.einsum('bno,oz->bnz', wh, params['a1'], precision=hp)
    ej = jnp.einsum('bno,oz->bnz', wh, params['a2'], precision=hp)
    e = ei + jnp.swapaxes(ej, 1, 2)
    e = jnp.where(e > 0, e, LEAKY_SLOPE * e)
    att = jax.nn.softmax(e, axis=1)
    h_prime = jnp.einsum('bij,bjk->bik', att, wh, precision=hp)
    xt = h_prime.reshape(b, t, -1).transpose(0, 2, 1)

    def conv1d(y, w, pad, dil):
        return jax.lax.conv_general_dilated(
            y, w, window_strides=(1,), padding=[(pad, pad)],
            rhs_dilation=(dil,), dimension_numbers=('NCH', 'OIH', 'NCH'),
            precision=hp)

    y = conv1d(xt, params['w_c1'][:, :, None], 0, 1)
    y = jnp.maximum(y * params['s1'][None] + params['sh1'][None], 0.0)
    y = conv1d(y, params['w_c2'], 1, 1)
    y = jnp.maximum(y * params['s2'][None] + params['sh2'][None], 0.0)
    y = conv1d(y, params['w_c3'], 2, 2)
    y = jnp.maximum(y * params['s3'][None] + params['sh3'][None], 0.0)
    return conv1d(y, params['w_cls'], 2, 2)


if __name__ == "__main__":
    key = jax.random.PRNGKey(0)
    pkey, xkey = jax.random.split(key)
    params = init_params(pkey)

    B, T = 2, 8
    x = jax.random.normal(xkey, (B, T, N_NODES, GCN_IN), dtype=jnp.float32)

    out = jax.block_until_ready(auwgcn_forward(x, params))
    assert out.shape == (B, OUT_CH, T), out.shape

    ref = reference_forward(x, params)
    max_err = float(jnp.max(jnp.abs(out - ref)))
    # bf16 MXU operands + approx reciprocal: allow a few % relative error.
    tol = 2e-2 + 4e-2 * float(jnp.max(jnp.abs(ref)))
    assert max_err < tol, f"mismatch vs reference: {max_err} (tol {tol})"

    print("KERNEL_OK")
</pallas_src>

<mosaic_0001>
module attributes {stable_mosaic.version = 11 : i64} {
  func.func @kernel(%arg0: i32, %arg1: memref<1x24x128xf32, #tpu.memory_space<vmem>>, %arg2: memref<192x24xbf16, #tpu.memory_space<vmem>>, %arg3: memref<192x1xf32, #tpu.memory_space<vmem>>, %arg4: memref<224x192xbf16, #tpu.memory_space<vmem>>, %arg5: memref<64x192xbf16, #tpu.memory_space<vmem>>, %arg6: memref<64x1xf32, #tpu.memory_space<vmem>>, %arg7: memref<64x192xbf16, #tpu.memory_space<vmem>>, %arg8: memref<64x1xf32, #tpu.memory_space<vmem>>, %arg9: memref<64x192xbf16, #tpu.memory_space<vmem>>, %arg10: memref<64x1xf32, #tpu.memory_space<vmem>>, %arg11: memref<10x192xbf16, #tpu.memory_space<vmem>>, %arg12: memref<1x10x128xf32, #tpu.memory_space<vmem>>, %arg13: memref<192x128xbf16, #tpu.memory_space<vmem>>) attributes {dimension_semantics = [#tpu.dimension_semantics<parallel>], iteration_bounds = array<i64: 1>, scalar_prefetch = 0 : i64, scratch_operands = 1 : i64, tpu.core_type = #tpu.core_type<tc>, window_params = [{transform_indices = @transform_0, window_bounds = array<i64: 1, 24, 128>}, {pipeline_mode = #tpu.pipeline_mode<synchronous>, transform_indices = @transform_1, window_bounds = array<i64: 192, 24>}, {pipeline_mode = #tpu.pipeline_mode<synchronous>, transform_indices = @transform_2, window_bounds = array<i64: 192, 1>}, {pipeline_mode = #tpu.pipeline_mode<synchronous>, transform_indices = @transform_3, window_bounds = array<i64: 224, 192>}, {pipeline_mode = #tpu.pipeline_mode<synchronous>, transform_indices = @transform_4, window_bounds = array<i64: 64, 192>}, {pipeline_mode = #tpu.pipeline_mode<synchronous>, transform_indices = @transform_5, window_bounds = array<i64: 64, 1>}, {pipeline_mode = #tpu.pipeline_mode<synchronous>, transform_indices = @transform_6, window_bounds = array<i64: 64, 192>}, {pipeline_mode = #tpu.pipeline_mode<synchronous>, transform_indices = @transform_7, window_bounds = array<i64: 64, 1>}, {pipeline_mode = #tpu.pipeline_mode<synchronous>, transform_indices = @transform_8, window_bounds = array<i64: 64, 192>}, {pipeline_mode = #tpu.pipeline_mode<synchronous>, transform_indices = @transform_9, window_bounds = array<i64: 64, 1>}, {pipeline_mode = #tpu.pipeline_mode<synchronous>, transform_indices = @transform_10, window_bounds = array<i64: 10, 192>}, {transform_indices = @transform_11, window_bounds = array<i64: 1, 10, 128>}]} {
    %c0 = arith.constant 0 : index
    %c0_0 = arith.constant 0 : index
    %c0_1 = arith.constant 0 : index
    %0 = vector.load %arg1[%c0, %c0_0, %c0_1] : memref<1x24x128xf32, #tpu.memory_space<vmem>>, vector<1x24x128xf32>
    %1 = vector.shape_cast %0 : vector<1x24x128xf32> to vector<24x128xf32>
    %2 = arith.truncf %1 : vector<24x128xf32> to vector<24x128xbf16>
    %3 = tpu.iota {dimensions = array<i32: 1>} : vector<1x128xi32>
    %c8_i32 = arith.constant 8 : i32
    %c0_i32 = arith.constant 0 : i32
    %4 = arith.cmpi eq, %c8_i32, %c0_i32 : i32
    %c1_i32 = arith.constant 1 : i32
    %5 = arith.select %4, %c1_i32, %c8_i32 : i32
    %6 = vector.broadcast %5 : i32 to vector<1x128xi32>
    %7 = arith.remsi %3, %6 : vector<1x128xi32>
    %c0_i32_2 = arith.constant 0 : i32
    %8 = vector.broadcast %c0_i32_2 : i32 to vector<1x128xi32>
    %9 = arith.cmpi ne, %7, %8 : vector<1x128xi32>
    %c0_i32_3 = arith.constant 0 : i32
    %10 = vector.broadcast %c0_i32_3 : i32 to vector<1x128xi32>
    %11 = arith.cmpi slt, %7, %10 : vector<1x128xi32>
    %c0_i32_4 = arith.constant 0 : i32
    %12 = arith.cmpi slt, %5, %c0_i32_4 : i32
    %13 = vector.broadcast %12 : i1 to vector<1x128xi1>
    %14 = vector.broadcast %13 : vector<1x128xi1> to vector<1x128xi1>
    %15 = arith.xori %11, %14 : vector<1x128xi1>
    %16 = arith.andi %15, %9 : vector<1x128xi1>
    %17 = vector.broadcast %5 : i32 to vector<1x128xi32>
    %18 = arith.addi %7, %17 : vector<1x128xi32>
    %19 = arith.select %16, %18, %7 : vector<1x128xi1>, vector<1x128xi32>
    %c1_i32_5 = arith.constant 1 : i32
    %20 = vector.broadcast %c1_i32_5 : i32 to vector<1x128xi32>
    %21 = arith.cmpi sge, %19, %20 : vector<1x128xi32>
    %c2_i32 = arith.constant 2 : i32
    %22 = vector.broadcast %c2_i32 : i32 to vector<1x128xi32>
    %23 = arith.cmpi sge, %19, %22 : vector<1x128xi32>
    %c7_i32 = arith.constant 7 : i32
    %24 = vector.broadcast %c7_i32 : i32 to vector<1x128xi32>
    %25 = arith.cmpi slt, %19, %24 : vector<1x128xi32>
    %c6_i32 = arith.constant 6 : i32
    %26 = vector.broadcast %c6_i32 : i32 to vector<1x128xi32>
    %27 = arith.cmpi slt, %19, %26 : vector<1x128xi32>
    %c0_6 = arith.constant 0 : index
    %c0_7 = arith.constant 0 : index
    %28 = vector.load %arg2[%c0_6, %c0_7] : memref<192x24xbf16, #tpu.memory_space<vmem>>, vector<192x24xbf16>
    %cst = arith.constant dense<0.000000e+00> : vector<192x128xf32>
    %29 = tpu.matmul %28, %2, %cst {dimension_numbers = #tpu.dot_dimension_numbers<[1], [0], [0], [1], [0, 0, 1, 1], [], []>} : vector<192x24xbf16>, vector<24x128xbf16>, vector<192x128xf32> -> vector<192x128xf32>
    %c0_8 = arith.constant 0 : index
    %c0_9 = arith.constant 0 : index
    %30 = vector.load %arg3[%c0_8, %c0_9] : memref<192x1xf32, #tpu.memory_space<vmem>>, vector<192x1xf32>
    %31 = vector.broadcast %30 : vector<192x1xf32> to vector<192x128xf32>
    %32 = arith.addf %29, %31 : vector<192x128xf32>
    %cst_10 = arith.constant 0.000000e+00 : f32
    %33 = vector.broadcast %cst_10 : f32 to vector<192x128xf32>
    %34 = arith.maximumf %32, %33 : vector<192x128xf32>
    %c0_11 = arith.constant 0 : index
    %c0_12 = arith.constant 0 : index
    %35 = vector.load %arg4[%c0_11, %c0_12] : memref<224x192xbf16, #tpu.memory_space<vmem>>, vector<224x192xbf16>
    %36 = arith.truncf %34 : vector<192x128xf32> to vector<192x128xbf16>
    %cst_13 = arith.constant dense<0.000000e+00> : vector<224x128xf32>
    %37 = tpu.matmul %35, %36, %cst_13 {dimension_numbers = #tpu.dot_dimension_numbers<[1], [0], [0], [1], [0, 0, 1, 1], [], []>} : vector<224x192xbf16>, vector<192x128xbf16>, vector<224x128xf32> -> vector<224x128xf32>
    %38 = vector.extract_strided_slice %37 {offsets = [0, 0], sizes = [192, 128], strides = [1, 1]} : vector<224x128xf32> to vector<192x128xf32>
    %39 = vector.extract_strided_slice %37 {offsets = [192, 0], sizes = [12, 128], strides = [1, 1]} : vector<224x128xf32> to vector<12x128xf32>
    %40 = vector.extract_strided_slice %37 {offsets = [208, 0], sizes = [12, 128], strides = [1, 1]} : vector<224x128xf32> to vector<12x128xf32>
    %41 = vector.shape_cast %39 : vector<12x128xf32> to vector<1x12x128xf32>
    %42 = vector.shape_cast %40 : vector<12x128xf32> to vector<12x1x128xf32>
    %43 = vector.broadcast %41 : vector<1x12x128xf32> to vector<12x12x128xf32>
    %44 = vector.broadcast %42 : vector<12x1x128xf32> to vector<12x12x128xf32>
    %45 = arith.addf %43, %44 : vector<12x12x128xf32>
    %cst_14 = arith.constant 0.000000e+00 : f32
    %46 = vector.broadcast %cst_14 : f32 to vector<12x12x128xf32>
    %47 = arith.cmpf ogt, %45, %46 : vector<12x12x128xf32>
    %cst_15 = arith.constant 0.00999999977 : f32
    %48 = vector.broadcast %cst_15 : f32 to vector<12x12x128xf32>
    %49 = arith.mulf %48, %45 : vector<12x12x128xf32>
    %50 = arith.select %47, %45, %49 : vector<12x12x128xi1>, vector<12x12x128xf32>
    %cst_16 = arith.constant dense<0xFF800000> : vector<12x128xf32>
    %51 = vector.multi_reduction <maximumf>, %50, %cst_16 [1] : vector<12x12x128xf32> to vector<12x128xf32>
    %52 = vector.shape_cast %51 : vector<12x128xf32> to vector<12x1x128xf32>
    %53 = vector.broadcast %52 : vector<12x1x128xf32> to vector<12x12x128xf32>
    %54 = arith.subf %50, %53 : vector<12x12x128xf32>
    %55 = math.exp %54 : vector<12x12x128xf32>
    %cst_17 = arith.constant dense<0.000000e+00> : vector<12x128xf32>
    %56 = vector.multi_reduction <add>, %55, %cst_17 [1] : vector<12x12x128xf32> to vector<12x128xf32>
    %57 = vector.shape_cast %56 : vector<12x128xf32> to vector<12x1x128xf32>
    %58 = tpu.reciprocal %57 {approx = true} : vector<12x1x128xf32> -> vector<12x1x128xf32>
    %59 = vector.broadcast %58 : vector<12x1x128xf32> to vector<12x12x128xf32>
    %60 = arith.mulf %55, %59 : vector<12x12x128xf32>
    %61 = vector.extract_strided_slice %60 {offsets = [0, 0, 0], sizes = [1, 12, 128], strides = [1, 1, 1]} : vector<12x12x128xf32> to vector<1x12x128xf32>
    %62 = vector.shape_cast %61 : vector<1x12x128xf32> to vector<12x128xf32>
    %63 = vector.shape_cast %62 : vector<12x128xf32> to vector<12x1x128xf32>
    %64 = vector.shape_cast %63 : vector<12x1x128xf32> to vector<12x1x128xf32>
    %65 = vector.broadcast %64 : vector<12x1x128xf32> to vector<12x16x128xf32>
    %66 = vector.shape_cast %65 : vector<12x16x128xf32> to vector<192x128xf32>
    %67 = vector.extract_strided_slice %38 {offsets = [0, 0], sizes = [16, 128], strides = [1, 1]} : vector<192x128xf32> to vector<16x128xf32>
    %68 = vector.shape_cast %67 : vector<16x128xf32> to vector<1x16x128xf32>
    %69 = vector.shape_cast %68 : vector<1x16x128xf32> to vector<1x16x128xf32>
    %70 = vector.broadcast %69 : vector<1x16x128xf32> to vector<12x16x128xf32>
    %71 = vector.shape_cast %70 : vector<12x16x128xf32> to vector<192x128xf32>
    %72 = arith.mulf %66, %71 : vector<192x128xf32>
    %73 = vector.extract_strided_slice %60 {offsets = [1, 0, 0], sizes = [1, 12, 128], strides = [1, 1, 1]} : vector<12x12x128xf32> to vector<1x12x128xf32>
    %74 = vector.shape_cast %73 : vector<1x12x128xf32> to vector<12x128xf32>
    %75 = vector.shape_cast %74 : vector<12x128xf32> to vector<12x1x128xf32>
    %76 = vector.shape_cast %75 : vector<12x1x128xf32> to vector<12x1x128xf32>
    %77 = vector.broadcast %76 : vector<12x1x128xf32> to vector<12x16x128xf32>
    %78 = vector.shape_cast %77 : vector<12x16x128xf32> to vector<192x128xf32>
    %79 = vector.extract_strided_slice %38 {offsets = [16, 0], sizes = [16, 128], strides = [1, 1]} : vector<192x128xf32> to vector<16x128xf32>
    %80 = vector.shape_cast %79 : vector<16x128xf32> to vector<1x16x128xf32>
    %81 = vector.shape_cast %80 : vector<1x16x128xf32> to vector<1x16x128xf32>
    %82 = vector.broadcast %81 : vector<1x16x128xf32> to vector<12x16x128xf32>
    %83 = vector.shape_cast %82 : vector<12x16x128xf32> to vector<192x128xf32>
    %84 = arith.mulf %78, %83 : vector<192x128xf32>
    %85 = arith.addf %72, %84 : vector<192x128xf32>
    %86 = vector.extract_strided_slice %60 {offsets = [2, 0, 0], sizes = [1, 12, 128], strides = [1, 1, 1]} : vector<12x12x128xf32> to vector<1x12x128xf32>
    %87 = vector.shape_cast %86 : vector<1x12x128xf32> to vector<12x128xf32>
    %88 = vector.shape_cast %87 : vector<12x128xf32> to vector<12x1x128xf32>
    %89 = vector.shape_cast %88 : vector<12x1x128xf32> to vector<12x1x128xf32>
    %90 = vector.broadcast %89 : vector<12x1x128xf32> to vector<12x16x128xf32>
    %91 = vector.shape_cast %90 : vector<12x16x128xf32> to vector<192x128xf32>
    %92 = vector.extract_strided_slice %38 {offsets = [32, 0], sizes = [16, 128], strides = [1, 1]} : vector<192x128xf32> to vector<16x128xf32>
    %93 = vector.shape_cast %92 : vector<16x128xf32> to vector<1x16x128xf32>
    %94 = vector.shape_cast %93 : vector<1x16x128xf32> to vector<1x16x128xf32>
    %95 = vector.broadcast %94 : vector<1x16x128xf32> to vector<12x16x128xf32>
    %96 = vector.shape_cast %95 : vector<12x16x128xf32> to vector<192x128xf32>
    %97 = arith.mulf %91, %96 : vector<192x128xf32>
    %98 = arith.addf %85, %97 : vector<192x128xf32>
    %99 = vector.extract_strided_slice %60 {offsets = [3, 0, 0], sizes = [1, 12, 128], strides = [1, 1, 1]} : vector<12x12x128xf32> to vector<1x12x128xf32>
    %100 = vector.shape_cast %99 : vector<1x12x128xf32> to vector<12x128xf32>
    %101 = vector.shape_cast %100 : vector<12x128xf32> to vector<12x1x128xf32>
    %102 = vector.shape_cast %101 : vector<12x1x128xf32> to vector<12x1x128xf32>
    %103 = vector.broadcast %102 : vector<12x1x128xf32> to vector<12x16x128xf32>
    %104 = vector.shape_cast %103 : vector<12x16x128xf32> to vector<192x128xf32>
    %105 = vector.extract_strided_slice %38 {offsets = [48, 0], sizes = [16, 128], strides = [1, 1]} : vector<192x128xf32> to vector<16x128xf32>
    %106 = vector.shape_cast %105 : vector<16x128xf32> to vector<1x16x128xf32>
    %107 = vector.shape_cast %106 : vector<1x16x128xf32> to vector<1x16x128xf32>
    %108 = vector.broadcast %107 : vector<1x16x128xf32> to vector<12x16x128xf32>
    %109 = vector.shape_cast %108 : vector<12x16x128xf32> to vector<192x128xf32>
    %110 = arith.mulf %104, %109 : vector<192x128xf32>
    %111 = arith.addf %98, %110 : vector<192x128xf32>
    %112 = vector.extract_strided_slice %60 {offsets = [4, 0, 0], sizes = [1, 12, 128], strides = [1, 1, 1]} : vector<12x12x128xf32> to vector<1x12x128xf32>
    %113 = vector.shape_cast %112 : vector<1x12x128xf32> to vector<12x128xf32>
    %114 = vector.shape_cast %113 : vector<12x128xf32> to vector<12x1x128xf32>
    %115 = vector.shape_cast %114 : vector<12x1x128xf32> to vector<12x1x128xf32>
    %116 = vector.broadcast %115 : vector<12x1x128xf32> to vector<12x16x128xf32>
    %117 = vector.shape_cast %116 : vector<12x16x128xf32> to vector<192x128xf32>
    %118 = vector.extract_strided_slice %38 {offsets = [64, 0], sizes = [16, 128], strides = [1, 1]} : vector<192x128xf32> to vector<16x128xf32>
    %119 = vector.shape_cast %118 : vector<16x128xf32> to vector<1x16x128xf32>
    %120 = vector.shape_cast %119 : vector<1x16x128xf32> to vector<1x16x128xf32>
    %121 = vector.broadcast %120 : vector<1x16x128xf32> to vector<12x16x128xf32>
    %122 = vector.shape_cast %121 : vector<12x16x128xf32> to vector<192x128xf32>
    %123 = arith.mulf %117, %122 : vector<192x128xf32>
    %124 = arith.addf %111, %123 : vector<192x128xf32>
    %125 = vector.extract_strided_slice %60 {offsets = [5, 0, 0], sizes = [1, 12, 128], strides = [1, 1, 1]} : vector<12x12x128xf32> to vector<1x12x128xf32>
    %126 = vector.shape_cast %125 : vector<1x12x128xf32> to vector<12x128xf32>
    %127 = vector.shape_cast %126 : vector<12x128xf32> to vector<12x1x128xf32>
    %128 = vector.shape_cast %127 : vector<12x1x128xf32> to vector<12x1x128xf32>
    %129 = vector.broadcast %128 : vector<12x1x128xf32> to vector<12x16x128xf32>
    %130 = vector.shape_cast %129 : vector<12x16x128xf32> to vector<192x128xf32>
    %131 = vector.extract_strided_slice %38 {offsets = [80, 0], sizes = [16, 128], strides = [1, 1]} : vector<192x128xf32> to vector<16x128xf32>
    %132 = vector.shape_cast %131 : vector<16x128xf32> to vector<1x16x128xf32>
    %133 = vector.shape_cast %132 : vector<1x16x128xf32> to vector<1x16x128xf32>
    %134 = vector.broadcast %133 : vector<1x16x128xf32> to vector<12x16x128xf32>
    %135 = vector.shape_cast %134 : vector<12x16x128xf32> to vector<192x128xf32>
    %136 = arith.mulf %130, %135 : vector<192x128xf32>
    %137 = arith.addf %124, %136 : vector<192x128xf32>
    %138 = vector.extract_strided_slice %60 {offsets = [6, 0, 0], sizes = [1, 12, 128], strides = [1, 1, 1]} : vector<12x12x128xf32> to vector<1x12x128xf32>
    %139 = vector.shape_cast %138 : vector<1x12x128xf32> to vector<12x128xf32>
    %140 = vector.shape_cast %139 : vector<12x128xf32> to vector<12x1x128xf32>
    %141 = vector.shape_cast %140 : vector<12x1x128xf32> to vector<12x1x128xf32>
    %142 = vector.broadcast %141 : vector<12x1x128xf32> to vector<12x16x128xf32>
    %143 = vector.shape_cast %142 : vector<12x16x128xf32> to vector<192x128xf32>
    %144 = vector.extract_strided_slice %38 {offsets = [96, 0], sizes = [16, 128], strides = [1, 1]} : vector<192x128xf32> to vector<16x128xf32>
    %145 = vector.shape_cast %144 : vector<16x128xf32> to vector<1x16x128xf32>
    %146 = vector.shape_cast %145 : vector<1x16x128xf32> to vector<1x16x128xf32>
    %147 = vector.broadcast %146 : vector<1x16x128xf32> to vector<12x16x128xf32>
    %148 = vector.shape_cast %147 : vector<12x16x128xf32> to vector<192x128xf32>
    %149 = arith.mulf %143, %148 : vector<192x128xf32>
    %150 = arith.addf %137, %149 : vector<192x128xf32>
    %151 = vector.extract_strided_slice %60 {offsets = [7, 0, 0], sizes = [1, 12, 128], strides = [1, 1, 1]} : vector<12x12x128xf32> to vector<1x12x128xf32>
    %152 = vector.shape_cast %151 : vector<1x12x128xf32> to vector<12x128xf32>
    %153 = vector.shape_cast %152 : vector<12x128xf32> to vector<12x1x128xf32>
    %154 = vector.shape_cast %153 : vector<12x1x128xf32> to vector<12x1x128xf32>
    %155 = vector.broadcast %154 : vector<12x1x128xf32> to vector<12x16x128xf32>
    %156 = vector.shape_cast %155 : vector<12x16x128xf32> to vector<192x128xf32>
    %157 = vector.extract_strided_slice %38 {offsets = [112, 0], sizes = [16, 128], strides = [1, 1]} : vector<192x128xf32> to vector<16x128xf32>
    %158 = vector.shape_cast %157 : vector<16x128xf32> to vector<1x16x128xf32>
    %159 = vector.shape_cast %158 : vector<1x16x128xf32> to vector<1x16x128xf32>
    %160 = vector.broadcast %159 : vector<1x16x128xf32> to vector<12x16x128xf32>
    %161 = vector.shape_cast %160 : vector<12x16x128xf32> to vector<192x128xf32>
    %162 = arith.mulf %156, %161 : vector<192x128xf32>
    %163 = arith.addf %150, %162 : vector<192x128xf32>
    %164 = vector.extract_strided_slice %60 {offsets = [8, 0, 0], sizes = [1, 12, 128], strides = [1, 1, 1]} : vector<12x12x128xf32> to vector<1x12x128xf32>
    %165 = vector.shape_cast %164 : vector<1x12x128xf32> to vector<12x128xf32>
    %166 = vector.shape_cast %165 : vector<12x128xf32> to vector<12x1x128xf32>
    %167 = vector.shape_cast %166 : vector<12x1x128xf32> to vector<12x1x128xf32>
    %168 = vector.broadcast %167 : vector<12x1x128xf32> to vector<12x16x128xf32>
    %169 = vector.shape_cast %168 : vector<12x16x128xf32> to vector<192x128xf32>
    %170 = vector.extract_strided_slice %38 {offsets = [128, 0], sizes = [16, 128], strides = [1, 1]} : vector<192x128xf32> to vector<16x128xf32>
    %171 = vector.shape_cast %170 : vector<16x128xf32> to vector<1x16x128xf32>
    %172 = vector.shape_cast %171 : vector<1x16x128xf32> to vector<1x16x128xf32>
    %173 = vector.broadcast %172 : vector<1x16x128xf32> to vector<12x16x128xf32>
    %174 = vector.shape_cast %173 : vector<12x16x128xf32> to vector<192x128xf32>
    %175 = arith.mulf %169, %174 : vector<192x128xf32>
    %176 = arith.addf %163, %175 : vector<192x128xf32>
    %177 = vector.extract_strided_slice %60 {offsets = [9, 0, 0], sizes = [1, 12, 128], strides = [1, 1, 1]} : vector<12x12x128xf32> to vector<1x12x128xf32>
    %178 = vector.shape_cast %177 : vector<1x12x128xf32> to vector<12x128xf32>
    %179 = vector.shape_cast %178 : vector<12x128xf32> to vector<12x1x128xf32>
    %180 = vector.shape_cast %179 : vector<12x1x128xf32> to vector<12x1x128xf32>
    %181 = vector.broadcast %180 : vector<12x1x128xf32> to vector<12x16x128xf32>
    %182 = vector.shape_cast %181 : vector<12x16x128xf32> to vector<192x128xf32>
    %183 = vector.extract_strided_slice %38 {offsets = [144, 0], sizes = [16, 128], strides = [1, 1]} : vector<192x128xf32> to vector<16x128xf32>
    %184 = vector.shape_cast %183 : vector<16x128xf32> to vector<1x16x128xf32>
    %185 = vector.shape_cast %184 : vector<1x16x128xf32> to vector<1x16x128xf32>
    %186 = vector.broadcast %185 : vector<1x16x128xf32> to vector<12x16x128xf32>
    %187 = vector.shape_cast %186 : vector<12x16x128xf32> to vector<192x128xf32>
    %188 = arith.mulf %182, %187 : vector<192x128xf32>
    %189 = arith.addf %176, %188 : vector<192x128xf32>
    %190 = vector.extract_strided_slice %60 {offsets = [10, 0, 0], sizes = [1, 12, 128], strides = [1, 1, 1]} : vector<12x12x128xf32> to vector<1x12x128xf32>
    %191 = vector.shape_cast %190 : vector<1x12x128xf32> to vector<12x128xf32>
    %192 = vector.shape_cast %191 : vector<12x128xf32> to vector<12x1x128xf32>
    %193 = vector.shape_cast %192 : vector<12x1x128xf32> to vector<12x1x128xf32>
    %194 = vector.broadcast %193 : vector<12x1x128xf32> to vector<12x16x128xf32>
    %195 = vector.shape_cast %194 : vector<12x16x128xf32> to vector<192x128xf32>
    %196 = vector.extract_strided_slice %38 {offsets = [160, 0], sizes = [16, 128], strides = [1, 1]} : vector<192x128xf32> to vector<16x128xf32>
    %197 = vector.shape_cast %196 : vector<16x128xf32> to vector<1x16x128xf32>
    %198 = vector.shape_cast %197 : vector<1x16x128xf32> to vector<1x16x128xf32>
    %199 = vector.broadcast %198 : vector<1x16x128xf32> to vector<12x16x128xf32>
    %200 = vector.shape_cast %199 : vector<12x16x128xf32> to vector<192x128xf32>
    %201 = arith.mulf %195, %200 : vector<192x128xf32>
    %202 = arith.addf %189, %201 : vector<192x128xf32>
    %203 = vector.extract_strided_slice %60 {offsets = [11, 0, 0], sizes = [1, 12, 128], strides = [1, 1, 1]} : vector<12x12x128xf32> to vector<1x12x128xf32>
    %204 = vector.shape_cast %203 : vector<1x12x128xf32> to vector<12x128xf32>
    %205 = vector.shape_cast %204 : vector<12x128xf32> to vector<12x1x128xf32>
    %206 = vector.shape_cast %205 : vector<12x1x128xf32> to vector<12x1x128xf32>
    %207 = vector.broadcast %206 : vector<12x1x128xf32> to vector<12x16x128xf32>
    %208 = vector.shape_cast %207 : vector<12x16x128xf32> to vector<192x128xf32>
    %209 = vector.extract_strided_slice %38 {offsets = [176, 0], sizes = [16, 128], strides = [1, 1]} : vector<192x128xf32> to vector<16x128xf32>
    %210 = vector.shape_cast %209 : vector<16x128xf32> to vector<1x16x128xf32>
    %211 = vector.shape_cast %210 : vector<1x16x128xf32> to vector<1x16x128xf32>
    %212 = vector.broadcast %211 : vector<1x16x128xf32> to vector<12x16x128xf32>
    %213 = vector.shape_cast %212 : vector<12x16x128xf32> to vector<192x128xf32>
    %214 = arith.mulf %208, %213 : vector<192x128xf32>
    %215 = arith.addf %202, %214 : vector<192x128xf32>
    %c0_18 = arith.constant 0 : index
    %c0_19 = arith.constant 0 : index
    %216 = vector.load %arg5[%c0_18, %c0_19] : memref<64x192xbf16, #tpu.memory_space<vmem>>, vector<64x192xbf16>
    %217 = arith.truncf %215 : vector<192x128xf32> to vector<192x128xbf16>
    %cst_20 = arith.constant dense<0.000000e+00> : vector<64x128xf32>
    %218 = tpu.matmul %216, %217, %cst_20 {dimension_numbers = #tpu.dot_dimension_numbers<[1], [0], [0], [1], [0, 0, 1, 1], [], []>} : vector<64x192xbf16>, vector<192x128xbf16>, vector<64x128xf32> -> vector<64x128xf32>
    %c0_21 = arith.constant 0 : index
    %c0_22 = arith.constant 0 : index
    %219 = vector.load %arg6[%c0_21, %c0_22] : memref<64x1xf32, #tpu.memory_space<vmem>>, vector<64x1xf32>
    %220 = vector.broadcast %219 : vector<64x1xf32> to vector<64x128xf32>
    %221 = arith.addf %218, %220 : vector<64x128xf32>
    %cst_23 = arith.constant 0.000000e+00 : f32
    %222 = vector.broadcast %cst_23 : f32 to vector<64x128xf32>
    %223 = arith.maximumf %221, %222 : vector<64x128xf32>
    %c1_i32_24 = arith.constant 1 : i32
    %224 = tpu.dynamic_rotate %223 by %c1_i32_24 dim 1 : vector<64x128xf32>, i32 -> vector<64x128xf32>
    %cst_25 = arith.constant 0.000000e+00 : f32
    %225 = vector.shape_cast %21 : vector<1x128xi1> to vector<1x128xi1>
    %226 = vector.broadcast %225 : vector<1x128xi1> to vector<64x128xi1>
    %227 = vector.broadcast %cst_25 : f32 to vector<64x128xf32>
    %228 = arith.select %226, %224, %227 : vector<64x128xi1>, vector<64x128xf32>
    %c127_i32 = arith.constant 127 : i32
    %229 = tpu.dynamic_rotate %223 by %c127_i32 dim 1 : vector<64x128xf32>, i32 -> vector<64x128xf32>
    %cst_26 = arith.constant 0.000000e+00 : f32
    %230 = vector.shape_cast %25 : vector<1x128xi1> to vector<1x128xi1>
    %231 = vector.broadcast %230 : vector<1x128xi1> to vector<64x128xi1>
    %232 = vector.broadcast %cst_26 : f32 to vector<64x128xf32>
    %233 = arith.select %231, %229, %232 : vector<64x128xi1>, vector<64x128xf32>
    %234 = arith.truncf %228 : vector<64x128xf32> to vector<64x128xbf16>
    %c0_27 = arith.constant 0 : index
    %c0_28 = arith.constant 0 : index
    %235 = vector.load %arg13[%c0_27, %c0_28] : memref<192x128xbf16, #tpu.memory_space<vmem>>, vector<64x128xbf16>
    tpu.vector_store %arg13[%c0_27, %c0_28], %234 {strides = array<i32>} : memref<192x128xbf16, #tpu.memory_space<vmem>>, vector<64x128xbf16>,
    %236 = arith.truncf %223 : vector<64x128xf32> to vector<64x128xbf16>
    %c64 = arith.constant 64 : index
    %c0_29 = arith.constant 0 : index
    %237 = vector.load %arg13[%c64, %c0_29] : memref<192x128xbf16, #tpu.memory_space<vmem>>, vector<64x128xbf16>
    tpu.vector_store %arg13[%c64, %c0_29], %236 {strides = array<i32>} : memref<192x128xbf16, #tpu.memory_space<vmem>>, vector<64x128xbf16>,
    %238 = arith.truncf %233 : vector<64x128xf32> to vector<64x128xbf16>
    %c128 = arith.constant 128 : index
    %c0_30 = arith.constant 0 : index
    %239 = vector.load %arg13[%c128, %c0_30] : memref<192x128xbf16, #tpu.memory_space<vmem>>, vector<64x128xbf16>
    tpu.vector_store %arg13[%c128, %c0_30], %238 {strides = array<i32>} : memref<192x128xbf16, #tpu.memory_space<vmem>>, vector<64x128xbf16>,
    %c0_31 = arith.constant 0 : index
    %c0_32 = arith.constant 0 : index
    %240 = vector.load %arg7[%c0_31, %c0_32] : memref<64x192xbf16, #tpu.memory_space<vmem>>, vector<64x192xbf16>
    %c0_33 = arith.constant 0 : index
    %c0_34 = arith.constant 0 : index
    %241 = vector.load %arg13[%c0_33, %c0_34] : memref<192x128xbf16, #tpu.memory_space<vmem>>, vector<192x128xbf16>
    %cst_35 = arith.constant dense<0.000000e+00> : vector<64x128xf32>
    %242 = tpu.matmul %240, %241, %cst_35 {dimension_numbers = #tpu.dot_dimension_numbers<[1], [0], [0], [1], [0, 0, 1, 1], [], []>} : vector<64x192xbf16>, vector<192x128xbf16>, vector<64x128xf32> -> vector<64x128xf32>
    %c0_36 = arith.constant 0 : index
    %c0_37 = arith.constant 0 : index
    %243 = vector.load %arg8[%c0_36, %c0_37] : memref<64x1xf32, #tpu.memory_space<vmem>>, vector<64x1xf32>
    %244 = vector.broadcast %243 : vector<64x1xf32> to vector<64x128xf32>
    %245 = arith.addf %242, %244 : vector<64x128xf32>
    %cst_38 = arith.constant 0.000000e+00 : f32
    %246 = vector.broadcast %cst_38 : f32 to vector<64x128xf32>
    %247 = arith.maximumf %245, %246 : vector<64x128xf32>
    %c2_i32_39 = arith.constant 2 : i32
    %248 = tpu.dynamic_rotate %247 by %c2_i32_39 dim 1 : vector<64x128xf32>, i32 -> vector<64x128xf32>
    %cst_40 = arith.constant 0.000000e+00 : f32
    %249 = vector.shape_cast %23 : vector<1x128xi1> to vector<1x128xi1>
    %250 = vector.broadcast %249 : vector<1x128xi1> to vector<64x128xi1>
    %251 = vector.broadcast %cst_40 : f32 to vector<64x128xf32>
    %252 = arith.select %250, %248, %251 : vector<64x128xi1>, vector<64x128xf32>
    %c126_i32 = arith.constant 126 : i32
    %253 = tpu.dynamic_rotate %247 by %c126_i32 dim 1 : vector<64x128xf32>, i32 -> vector<64x128xf32>
    %cst_41 = arith.constant 0.000000e+00 : f32
    %254 = vector.shape_cast %27 : vector<1x128xi1> to vector<1x128xi1>
    %255 = vector.broadcast %254 : vector<1x128xi1> to vector<64x128xi1>
    %256 = vector.broadcast %cst_41 : f32 to vector<64x128xf32>
    %257 = arith.select %255, %253, %256 : vector<64x128xi1>, vector<64x128xf32>
    %258 = arith.truncf %252 : vector<64x128xf32> to vector<64x128xbf16>
    %c0_42 = arith.constant 0 : index
    %c0_43 = arith.constant 0 : index
    %259 = vector.load %arg13[%c0_42, %c0_43] : memref<192x128xbf16, #tpu.memory_space<vmem>>, vector<64x128xbf16>
    tpu.vector_store %arg13[%c0_42, %c0_43], %258 {strides = array<i32>} : memref<192x128xbf16, #tpu.memory_space<vmem>>, vector<64x128xbf16>,
    %260 = arith.truncf %247 : vector<64x128xf32> to vector<64x128xbf16>
    %c64_44 = arith.constant 64 : index
    %c0_45 = arith.constant 0 : index
    %261 = vector.load %arg13[%c64_44, %c0_45] : memref<192x128xbf16, #tpu.memory_space<vmem>>, vector<64x128xbf16>
    tpu.vector_store %arg13[%c64_44, %c0_45], %260 {strides = array<i32>} : memref<192x128xbf16, #tpu.memory_space<vmem>>, vector<64x128xbf16>,
    %262 = arith.truncf %257 : vector<64x128xf32> to vector<64x128xbf16>
    %c128_46 = arith.constant 128 : index
    %c0_47 = arith.constant 0 : index
    %263 = vector.load %arg13[%c128_46, %c0_47] : memref<192x128xbf16, #tpu.memory_space<vmem>>, vector<64x128xbf16>
    tpu.vector_store %arg13[%c128_46, %c0_47], %262 {strides = array<i32>} : memref<192x128xbf16, #tpu.memory_space<vmem>>, vector<64x128xbf16>,
    %c0_48 = arith.constant 0 : index
    %c0_49 = arith.constant 0 : index
    %264 = vector.load %arg9[%c0_48, %c0_49] : memref<64x192xbf16, #tpu.memory_space<vmem>>, vector<64x192xbf16>
    %c0_50 = arith.constant 0 : index
    %c0_51 = arith.constant 0 : index
    %265 = vector.load %arg13[%c0_50, %c0_51] : memref<192x128xbf16, #tpu.memory_space<vmem>>, vector<192x128xbf16>
    %cst_52 = arith.constant dense<0.000000e+00> : vector<64x128xf32>
    %266 = tpu.matmul %264, %265, %cst_52 {dimension_numbers = #tpu.dot_dimension_numbers<[1], [0], [0], [1], [0, 0, 1, 1], [], []>} : vector<64x192xbf16>, vector<192x128xbf16>, vector<64x128xf32> -> vector<64x128xf32>
    %c0_53 = arith.constant 0 : index
    %c0_54 = arith.constant 0 : index
    %267 = vector.load %arg10[%c0_53, %c0_54] : memref<64x1xf32, #tpu.memory_space<vmem>>, vector<64x1xf32>
    %268 = vector.broadcast %267 : vector<64x1xf32> to vector<64x128xf32>
    %269 = arith.addf %266, %268 : vector<64x128xf32>
    %cst_55 = arith.constant 0.000000e+00 : f32
    %270 = vector.broadcast %cst_55 : f32 to vector<64x128xf32>
    %271 = arith.maximumf %269, %270 : vector<64x128xf32>
    %c2_i32_56 = arith.constant 2 : i32
    %272 = tpu.dynamic_rotate %271 by %c2_i32_56 dim 1 : vector<64x128xf32>, i32 -> vector<64x128xf32>
    %cst_57 = arith.constant 0.000000e+00 : f32
    %273 = vector.shape_cast %23 : vector<1x128xi1> to vector<1x128xi1>
    %274 = vector.broadcast %273 : vector<1x128xi1> to vector<64x128xi1>
    %275 = vector.broadcast %cst_57 : f32 to vector<64x128xf32>
    %276 = arith.select %274, %272, %275 : vector<64x128xi1>, vector<64x128xf32>
    %c126_i32_58 = arith.constant 126 : i32
    %277 = tpu.dynamic_rotate %271 by %c126_i32_58 dim 1 : vector<64x128xf32>, i32 -> vector<64x128xf32>
    %cst_59 = arith.constant 0.000000e+00 : f32
    %278 = vector.shape_cast %27 : vector<1x128xi1> to vector<1x128xi1>
    %279 = vector.broadcast %278 : vector<1x128xi1> to vector<64x128xi1>
    %280 = vector.broadcast %cst_59 : f32 to vector<64x128xf32>
    %281 = arith.select %279, %277, %280 : vector<64x128xi1>, vector<64x128xf32>
    %282 = arith.truncf %276 : vector<64x128xf32> to vector<64x128xbf16>
    %c0_60 = arith.constant 0 : index
    %c0_61 = arith.constant 0 : index
    %283 = vector.load %arg13[%c0_60, %c0_61] : memref<192x128xbf16, #tpu.memory_space<vmem>>, vector<64x128xbf16>
    tpu.vector_store %arg13[%c0_60, %c0_61], %282 {strides = array<i32>} : memref<192x128xbf16, #tpu.memory_space<vmem>>, vector<64x128xbf16>,
    %284 = arith.truncf %271 : vector<64x128xf32> to vector<64x128xbf16>
    %c64_62 = arith.constant 64 : index
    %c0_63 = arith.constant 0 : index
    %285 = vector.load %arg13[%c64_62, %c0_63] : memref<192x128xbf16, #tpu.memory_space<vmem>>, vector<64x128xbf16>
    tpu.vector_store %arg13[%c64_62, %c0_63], %284 {strides = array<i32>} : memref<192x128xbf16, #tpu.memory_space<vmem>>, vector<64x128xbf16>,
    %286 = arith.truncf %281 : vector<64x128xf32> to vector<64x128xbf16>
    %c128_64 = arith.constant 128 : index
    %c0_65 = arith.constant 0 : index
    %287 = vector.load %arg13[%c128_64, %c0_65] : memref<192x128xbf16, #tpu.memory_space<vmem>>, vector<64x128xbf16>
    tpu.vector_store %arg13[%c128_64, %c0_65], %286 {strides = array<i32>} : memref<192x128xbf16, #tpu.memory_space<vmem>>, vector<64x128xbf16>,
    %c0_66 = arith.constant 0 : index
    %c0_67 = arith.constant 0 : index
    %288 = vector.load %arg11[%c0_66, %c0_67] : memref<10x192xbf16, #tpu.memory_space<vmem>>, vector<10x192xbf16>
    %c0_68 = arith.constant 0 : index
    %c0_69 = arith.constant 0 : index
    %289 = vector.load %arg13[%c0_68, %c0_69] : memref<192x128xbf16, #tpu.memory_space<vmem>>, vector<192x128xbf16>
    %cst_70 = arith.constant dense<0.000000e+00> : vector<10x128xf32>
    %290 = tpu.matmul %288, %289, %cst_70 {dimension_numbers = #tpu.dot_dimension_numbers<[1], [0], [0], [1], [0, 0, 1, 1], [], []>} : vector<10x192xbf16>, vector<192x128xbf16>, vector<10x128xf32> -> vector<10x128xf32>
    %c0_71 = arith.constant 0 : index
    %c0_72 = arith.constant 0 : index
    %c0_73 = arith.constant 0 : index
    %291 = vector.load %arg12[%c0_71, %c0_72, %c0_73] : memref<1x10x128xf32, #tpu.memory_space<vmem>>, vector<1x10x128xf32>
    %292 = vector.shape_cast %291 : vector<1x10x128xf32> to vector<10x128xf32>
    %293 = vector.shape_cast %290 : vector<10x128xf32> to vector<1x10x128xf32>
    tpu.vector_store %arg12[%c0_71, %c0_72, %c0_73], %293 {strides = array<i32>} : memref<1x10x128xf32, #tpu.memory_space<vmem>>, vector<1x10x128xf32>,
    return
  }
  func.func @transform_0(%arg0: i32) -> (i32, i32, i32) {
    %c0_i32 = arith.constant 0 : i32
    %c0_i32_0 = arith.constant 0 : i32
    %c0_i32_1 = arith.constant 0 : i32
    return %arg0, %c0_i32, %c0_i32_0 : i32, i32, i32
  }
  func.func @transform_1(%arg0: i32) -> (i32, i32) {
    %c0_i32 = arith.constant 0 : i32
    %c0_i32_0 = arith.constant 0 : i32
    %c0_i32_1 = arith.constant 0 : i32
    return %c0_i32, %c0_i32_0 : i32, i32
  }
  func.func @transform_2(%arg0: i32) -> (i32, i32) {
    %c0_i32 = arith.constant 0 : i32
    %c0_i32_0 = arith.constant 0 : i32
    %c0_i32_1 = arith.constant 0 : i32
    return %c0_i32, %c0_i32_0 : i32, i32
  }
  func.func @transform_3(%arg0: i32) -> (i32, i32) {
    %c0_i32 = arith.constant 0 : i32
    %c0_i32_0 = arith.constant 0 : i32
    %c0_i32_1 = arith.constant 0 : i32
    return %c0_i32, %c0_i32_0 : i32, i32
  }
  func.func @transform_4(%arg0: i32) -> (i32, i32) {
    %c0_i32 = arith.constant 0 : i32
    %c0_i32_0 = arith.constant 0 : i32
    %c0_i32_1 = arith.constant 0 : i32
    return %c0_i32, %c0_i32_0 : i32, i32
  }
  func.func @transform_5(%arg0: i32) -> (i32, i32) {
    %c0_i32 = arith.constant 0 : i32
    %c0_i32_0 = arith.constant 0 : i32
    %c0_i32_1 = arith.constant 0 : i32
    return %c0_i32, %c0_i32_0 : i32, i32
  }
  func.func @transform_6(%arg0: i32) -> (i32, i32) {
    %c0_i32 = arith.constant 0 : i32
    %c0_i32_0 = arith.constant 0 : i32
    %c0_i32_1 = arith.constant 0 : i32
    return %c0_i32, %c0_i32_0 : i32, i32
  }
  func.func @transform_7(%arg0: i32) -> (i32, i32) {
    %c0_i32 = arith.constant 0 : i32
    %c0_i32_0 = arith.constant 0 : i32
    %c0_i32_1 = arith.constant 0 : i32
    return %c0_i32, %c0_i32_0 : i32, i32
  }
  func.func @transform_8(%arg0: i32) -> (i32, i32) {
    %c0_i32 = arith.constant 0 : i32
    %c0_i32_0 = arith.constant 0 : i32
    %c0_i32_1 = arith.constant 0 : i32
    return %c0_i32, %c0_i32_0 : i32, i32
  }
  func.func @transform_9(%arg0: i32) -> (i32, i32) {
    %c0_i32 = arith.constant 0 : i32
    %c0_i32_0 = arith.constant 0 : i32
    %c0_i32_1 = arith.constant 0 : i32
    return %c0_i32, %c0_i32_0 : i32, i32
  }
  func.func @transform_10(%arg0: i32) -> (i32, i32) {
    %c0_i32 = arith.constant 0 : i32
    %c0_i32_0 = arith.constant 0 : i32
    %c0_i32_1 = arith.constant 0 : i32
    return %c0_i32, %c0_i32_0 : i32, i32
  }
  func.func @transform_11(%arg0: i32) -> (i32, i32, i32) {
    %c0_i32 = arith.constant 0 : i32
    %c0_i32_0 = arith.constant 0 : i32
    %c0_i32_1 = arith.constant 0 : i32
    return %arg0, %c0_i32, %c0_i32_0 : i32, i32, i32
  }
}

</mosaic_0001>

<llo_original>
// kernel: tile.0
$region0: #{tile.0}
  %s0 = inlined_call_operand.vmem [shape: f32[12,16], index: 0, kind: input, shape index: {}]
  %s1 = inlined_call_operand.vmem [shape: f32[192,1], index: 1, kind: output, shape index: {}]
  %v2 = vld [vmem:[%s0] sm:$0xff]
  %vm3 = vcmask 7168
  %4 = vst.msk [vmem:[%s1] ss:$16 sm:$0x3] %vm3, %v2
  %5 = vst.msk [vmem:[%s1] ss:$16 sm:$0xc] %vm3, %v2
  %6 = vst.msk [vmem:[%s1] ss:$16 sm:$0x30] %vm3, %v2
  %7 = vst.msk [vmem:[%s1] ss:$16 sm:$0xc0] %vm3, %v2
  %s8 = scalar_lea.vmem %s0, 8
  %v9 = vld [vmem:[%s8] sm:$0xf]
  %vm10 = vcmask 7168
  %s11 = scalar_lea.vmem %s1, 128
  %12 = vst.msk [vmem:[%s11] ss:$16 sm:$0x3] %vm10, %v9
  %s13 = scalar_lea.vmem %s1, 128
  %14 = vst.msk [vmem:[%s13] ss:$16 sm:$0xc] %vm10, %v9
  %v15 = vld [vmem:[%s0] sm:$0xff]
  %16 = vrot.lane.b32.xlu0 %v15, 127
  %v17 = vpop.permute.xlu0 %16
  %vm18 = vcmask 7168
  %s19 = scalar_lea.vmem %s1, 1
  %20 = vst.msk [vmem:[%s19] ss:$16 sm:$0x3] %vm18, %v17
  %s21 = scalar_lea.vmem %s1, 1
  %22 = vst.msk [vmem:[%s21] ss:$16 sm:$0xc] %vm18, %v17
  %s23 = scalar_lea.vmem %s1, 1
  %24 = vst.msk [vmem:[%s23] ss:$16 sm:$0x30] %vm18, %v17
  %s25 = scalar_lea.vmem %s1, 1
  %26 = vst.msk [vmem:[%s25] ss:$16 sm:$0xc0] %vm18, %v17
  %s27 = scalar_lea.vmem %s0, 8
  %v28 = vld [vmem:[%s27] sm:$0xf]
  %29 = vrot.lane.b32.xlu0 %v28, 127
  %v30 = vpop.permute.xlu0 %29
  %vm31 = vcmask 7168
  %s32 = scalar_lea.vmem %s1, 129
  %33 = vst.msk [vmem:[%s32] ss:$16 sm:$0x3] %vm31, %v30
  %s34 = scalar_lea.vmem %s1, 129
  %35 = vst.msk [vmem:[%s34] ss:$16 sm:$0xc] %vm31, %v30
  %v36 = vld [vmem:[%s0] sm:$0xff]
  %37 = vrot.lane.b32.xlu0 %v36, 126
  %v38 = vpop.permute.xlu0 %37
  %vm39 = vcmask 7168
  %s40 = scalar_lea.vmem %s1, 2
  %41 = vst.msk [vmem:[%s40] ss:$16 sm:$0x3] %vm39, %v38
  %s42 = scalar_lea.vmem %s1, 2
  %43 = vst.msk [vmem:[%s42] ss:$16 sm:$0xc] %vm39, %v38
  %s44 = scalar_lea.vmem %s1, 2
  %45 = vst.msk [vmem:[%s44] ss:$16 sm:$0x30] %vm39, %v38
  %s46 = scalar_lea.vmem %s1, 2
  %47 = vst.msk [vmem:[%s46] ss:$16 sm:$0xc0] %vm39, %v38
  %s48 = scalar_lea.vmem %s0, 8
  %v49 = vld [vmem:[%s48] sm:$0xf]
  %50 = vrot.lane.b32.xlu0 %v49, 126
  %v51 = vpop.permute.xlu0 %50
  %vm52 = vcmask 7168
  %s53 = scalar_lea.vmem %s1, 130
  %54 = vst.msk [vmem:[%s53] ss:$16 sm:$0x3] %vm52, %v51
  %s55 = scalar_lea.vmem %s1, 130
  %56 = vst.msk [vmem:[%s55] ss:$16 sm:$0xc] %vm52, %v51
  %v57 = vld [vmem:[%s0] sm:$0xff]
  %58 = vrot.lane.b32.xlu0 %v57, 125
  %v59 = vpop.permute.xlu0 %58
  %vm60 = vcmask 7168
  %s61 = scalar_lea.vmem %s1, 3
  %62 = vst.msk [vmem:[%s61] ss:$16 sm:$0x3] %vm60, %v59
  %s63 = scalar_lea.vmem %s1, 3
  %64 = vst.msk [vmem:[%s63] ss:$16 sm:$0xc] %vm60, %v59
  %s65 = scalar_lea.vmem %s1, 3
  %66 = vst.msk [vmem:[%s65] ss:$16 sm:$0x30] %vm60, %v59
  %s67 = scalar_lea.vmem %s1, 3
  %68 = vst.msk [vmem:[%s67] ss:$16 sm:$0xc0] %vm60, %v59
  %s69 = scalar_lea.vmem %s0, 8
  %v70 = vld [vmem:[%s69] sm:$0xf]
  %71 = vrot.lane.b32.xlu0 %v70, 125
  %v72 = vpop.permute.xlu0 %71
  %vm73 = vcmask 7168
  %s74 = scalar_lea.vmem %s1, 131
  %75 = vst.msk [vmem:[%s74] ss:$16 sm:$0x3] %vm73, %v72
  %s76 = scalar_lea.vmem %s1, 131
  %77 = vst.msk [vmem:[%s76] ss:$16 sm:$0xc] %vm73, %v72
  %v78 = vld [vmem:[%s0] sm:$0xff]
  %79 = vrot.lane.b32.xlu0 %v78, 124
  %v80 = vpop.permute.xlu0 %79
  %vm81 = vcmask 7168
  %s82 = scalar_lea.vmem %s1, 4
  %83 = vst.msk [vmem:[%s82] ss:$16 sm:$0x3] %vm81, %v80
  %s84 = scalar_lea.vmem %s1, 4
  %85 = vst.msk [vmem:[%s84] ss:$16 sm:$0xc] %vm81, %v80
  %s86 = scalar_lea.vmem %s1, 4
  %87 = vst.msk [vmem:[%s86] ss:$16 sm:$0x30] %vm81, %v80
  %s88 = scalar_lea.vmem %s1, 4
  %89 = vst.msk [vmem:[%s88] ss:$16 sm:$0xc0] %vm81, %v80
  %s90 = scalar_lea.vmem %s0, 8
  %v91 = vld [vmem:[%s90] sm:$0xf]
  %92 = vrot.lane.b32.xlu0 %v91, 124
  %v93 = vpop.permute.xlu0 %92
  %vm94 = vcmask 7168
  %s95 = scalar_lea.vmem %s1, 132
  %96 = vst.msk [vmem:[%s95] ss:$16 sm:$0x3] %vm94, %v93
  %s97 = scalar_lea.vmem %s1, 132
  %98 = vst.msk [vmem:[%s97] ss:$16 sm:$0xc] %vm94, %v93
  %v99 = vld [vmem:[%s0] sm:$0xff]
  %100 = vrot.lane.b32.xlu0 %v99, 123
  %v101 = vpop.permute.xlu0 %100
  %vm102 = vcmask 7168
  %s103 = scalar_lea.vmem %s1, 5
  %104 = vst.msk [vmem:[%s103] ss:$16 sm:$0x3] %vm102, %v101
  %s105 = scalar_lea.vmem %s1, 5
  %106 = vst.msk [vmem:[%s105] ss:$16 sm:$0xc] %vm102, %v101
  %s107 = scalar_lea.vmem %s1, 5
  %108 = vst.msk [vmem:[%s107] ss:$16 sm:$0x30] %vm102, %v101
  %s109 = scalar_lea.vmem %s1, 5
  %110 = vst.msk [vmem:[%s109] ss:$16 sm:$0xc0] %vm102, %v101
  %s111 = scalar_lea.vmem %s0, 8
  %v112 = vld [vmem:[%s111] sm:$0xf]
  %113 = vrot.lane.b32.xlu0 %v112, 123
  %v114 = vpop.permute.xlu0 %113
  %vm115 = vcmask 7168
  %s116 = scalar_lea.vmem %s1, 133
  %117 = vst.msk [vmem:[%s116] ss:$16 sm:$0x3] %vm115, %v114
  %s118 = scalar_lea.vmem %s1, 133
  %119 = vst.msk [vmem:[%s118] ss:$16 sm:$0xc] %vm115, %v114
  %v120 = vld [vmem:[%s0] sm:$0xff]
  %121 = vrot.lane.b32.xlu0 %v120, 122
  %v122 = vpop.permute.xlu0 %121
  %vm123 = vcmask 7168
  %s124 = scalar_lea.vmem %s1, 6
  %125 = vst.msk [vmem:[%s124] ss:$16 sm:$0x3] %vm123, %v122
  %s126 = scalar_lea.vmem %s1, 6
  %127 = vst.msk [vmem:[%s126] ss:$16 sm:$0xc] %vm123, %v122
  %s128 = scalar_lea.vmem %s1, 6
  %129 = vst.msk [vmem:[%s128] ss:$16 sm:$0x30] %vm123, %v122
  %s130 = scalar_lea.vmem %s1, 6
  %131 = vst.msk [vmem:[%s130] ss:$16 sm:$0xc0] %vm123, %v122
  %s132 = scalar_lea.vmem %s0, 8
  %v133 = vld [vmem:[%s132] sm:$0xf]
  %134 = vrot.lane.b32.xlu0 %v133, 122
  %v135 = vpop.permute.xlu0 %134
  %vm136 = vcmask 7168
  %s137 = scalar_lea.vmem %s1, 134
  %138 = vst.msk [vmem:[%s137] ss:$16 sm:$0x3] %vm136, %v135
  %s139 = scalar_lea.vmem %s1, 134
  %140 = vst.msk [vmem:[%s139] ss:$16 sm:$0xc] %vm136, %v135
  %v141 = vld [vmem:[%s0] sm:$0xff]
  %142 = vrot.lane.b32.xlu0 %v141, 121
  %v143 = vpop.permute.xlu0 %142
  %vm144 = vcmask 7168
  %s145 = scalar_lea.vmem %s1, 7
  %146 = vst.msk [vmem:[%s145] ss:$16 sm:$0x3] %vm144, %v143
  %s147 = scalar_lea.vmem %s1, 7
  %148 = vst.msk [vmem:[%s147] ss:$16 sm:$0xc] %vm144, %v143
  %s149 = scalar_lea.vmem %s1, 7
  %150 = vst.msk [vmem:[%s149] ss:$16 sm:$0x30] %vm144, %v143
  %s151 = scalar_lea.vmem %s1, 7
  %152 = vst.msk [vmem:[%s151] ss:$16 sm:$0xc0] %vm144, %v143
  %s153 = scalar_lea.vmem %s0, 8
  %v154 = vld [vmem:[%s153] sm:$0xf]
  %155 = vrot.lane.b32.xlu0 %v154, 121
  %v156 = vpop.permute.xlu0 %155
  %vm157 = vcmask 7168
  %s158 = scalar_lea.vmem %s1, 135
  %159 = vst.msk [vmem:[%s158] ss:$16 sm:$0x3] %vm157, %v156
  %s160 = scalar_lea.vmem %s1, 135
  %161 = vst.msk [vmem:[%s160] ss:$16 sm:$0xc] %vm157, %v156
  %v162 = vld [vmem:[%s0] sm:$0xff]
  %163 = vrot.lane.b32.xlu0 %v162, 120
  %v164 = vpop.permute.xlu0 %163
  %vm165 = vcmask 7168
  %s166 = scalar_lea.vmem %s1, 8
  %167 = vst.msk [vmem:[%s166] ss:$16 sm:$0x3] %vm165, %v164
  %s168 = scalar_lea.vmem %s1, 8
  %169 = vst.msk [vmem:[%s168] ss:$16 sm:$0xc] %vm165, %v164
  %s170 = scalar_lea.vmem %s1, 8
  %171 = vst.msk [vmem:[%s170] ss:$16 sm:$0x30] %vm165, %v164
  %s172 = scalar_lea.vmem %s1, 8
  %173 = vst.msk [vmem:[%s172] ss:$16 sm:$0xc0] %vm165, %v164
  %s174 = scalar_lea.vmem %s0, 8
  %v175 = vld [vmem:[%s174] sm:$0xf]
  %176 = vrot.lane.b32.xlu0 %v175, 120
  %v177 = vpop.permute.xlu0 %176
  %vm178 = vcmask 7168
  %s179 = scalar_lea.vmem %s1, 136
  %180 = vst.msk [vmem:[%s179] ss:$16 sm:$0x3] %vm178, %v177
  %s181 = scalar_lea.vmem %s1, 136
  %182 = vst.msk [vmem:[%s181] ss:$16 sm:$0xc] %vm178, %v177
  %v183 = vld [vmem:[%s0] sm:$0xff]
  %184 = vrot.lane.b32.xlu0 %v183, 119
  %v185 = vpop.permute.xlu0 %184
  %vm186 = vcmask 7168
  %s187 = scalar_lea.vmem %s1, 9
  %188 = vst.msk [vmem:[%s187] ss:$16 sm:$0x3] %vm186, %v185
  %s189 = scalar_lea.vmem %s1, 9
  %190 = vst.msk [vmem:[%s189] ss:$16 sm:$0xc] %vm186, %v185
  %s191 = scalar_lea.vmem %s1, 9
  %192 = vst.msk [vmem:[%s191] ss:$16 sm:$0x30] %vm186, %v185
  %s193 = scalar_lea.vmem %s1, 9
  %194 = vst.msk [vmem:[%s193] ss:$16 sm:$0xc0] %vm186, %v185
  %s195 = scalar_lea.vmem %s0, 8
  %v196 = vld [vmem:[%s195] sm:$0xf]
  %197 = vrot.lane.b32.xlu0 %v196, 119
  %v198 = vpop.permute.xlu0 %197
  %vm199 = vcmask 7168
  %s200 = scalar_lea.vmem %s1, 137
  %201 = vst.msk [vmem:[%s200] ss:$16 sm:$0x3] %vm199, %v198
  %s202 = scalar_lea.vmem %s1, 137
  %203 = vst.msk [vmem:[%s202] ss:$16 sm:$0xc] %vm199, %v198
  %v204 = vld [vmem:[%s0] sm:$0xff]
  %205 = vrot.lane.b32.xlu0 %v204, 118
  %v206 = vpop.permute.xlu0 %205
  %vm207 = vcmask 7168
  %s208 = scalar_lea.vmem %s1, 10
  %209 = vst.msk [vmem:[%s208] ss:$16 sm:$0x3] %vm207, %v206
  %s210 = scalar_lea.vmem %s1, 10
  %211 = vst.msk [vmem:[%s210] ss:$16 sm:$0xc] %vm207, %v206
  %s212 = scalar_lea.vmem %s1, 10
  %213 = vst.msk [vmem:[%s212] ss:$16 sm:$0x30] %vm207, %v206
  %s214 = scalar_lea.vmem %s1, 10
  %215 = vst.msk [vmem:[%s214] ss:$16 sm:$0xc0] %vm207, %v206
  %s216 = scalar_lea.vmem %s0, 8
  %v217 = vld [vmem:[%s216] sm:$0xf]
  %218 = vrot.lane.b32.xlu0 %v217, 118
  %v219 = vpop.permute.xlu0 %218
  %vm220 = vcmask 7168
  %s221 = scalar_lea.vmem %s1, 138
  %222 = vst.msk [vmem:[%s221] ss:$16 sm:$0x3] %vm220, %v219
  %s223 = scalar_lea.vmem %s1, 138
  %224 = vst.msk [vmem:[%s223] ss:$16 sm:$0xc] %vm220, %v219
  %v225 = vld [vmem:[%s0] sm:$0xff]
  %226 = vrot.lane.b32.xlu0 %v225, 117
  %v227 = vpop.permute.xlu0 %226
  %vm228 = vcmask 7168
  %s229 = scalar_lea.vmem %s1, 11
  %230 = vst.msk [vmem:[%s229] ss:$16 sm:$0x3] %vm228, %v227
  %s231 = scalar_lea.vmem %s1, 11
  %232 = vst.msk [vmem:[%s231] ss:$16 sm:$0xc] %vm228, %v227
  %s233 = scalar_lea.vmem %s1, 11
  %234 = vst.msk [vmem:[%s233] ss:$16 sm:$0x30] %vm228, %v227
  %s235 = scalar_lea.vmem %s1, 11
  %236 = vst.msk [vmem:[%s235] ss:$16 sm:$0xc0] %vm228, %v227
  %s237 = scalar_lea.vmem %s0, 8
  %v238 = vld [vmem:[%s237] sm:$0xf]
  %239 = vrot.lane.b32.xlu0 %v238, 117
  %v240 = vpop.permute.xlu0 %239
  %vm241 = vcmask 7168
  %s242 = scalar_lea.vmem %s1, 139
  %243 = vst.msk [vmem:[%s242] ss:$16 sm:$0x3] %vm241, %v240
  %s244 = scalar_lea.vmem %s1, 139
  %245 = vst.msk [vmem:[%s244] ss:$16 sm:$0xc] %vm241, %v240
  %v246 = vld [vmem:[%s0] sm:$0xff]
  %247 = vrot.lane.b32.xlu0 %v246, 116
  %v248 = vpop.permute.xlu0 %247
  %vm249 = vcmask 7168
  %s250 = scalar_lea.vmem %s1, 12
  %251 = vst.msk [vmem:[%s250] ss:$16 sm:$0x3] %vm249, %v248
  %s252 = scalar_lea.vmem %s1, 12
  %253 = vst.msk [vmem:[%s252] ss:$16 sm:$0xc] %vm249, %v248
  %s254 = scalar_lea.vmem %s1, 12
  %255 = vst.msk [vmem:[%s254] ss:$16 sm:$0x30] %vm249, %v248
  %s256 = scalar_lea.vmem %s1, 12
  %257 = vst.msk [vmem:[%s256] ss:$16 sm:$0xc0] %vm249, %v248
  %s258 = scalar_lea.vmem %s0, 8
  %v259 = vld [vmem:[%s258] sm:$0xf]
  %260 = vrot.lane.b32.xlu0 %v259, 116
  %v261 = vpop.permute.xlu0 %260
  %vm262 = vcmask 7168
  %s263 = scalar_lea.vmem %s1, 140
  %264 = vst.msk [vmem:[%s263] ss:$16 sm:$0x3] %vm262, %v261
  %s265 = scalar_lea.vmem %s1, 140
  %266 = vst.msk [vmem:[%s265] ss:$16 sm:$0xc] %vm262, %v261
  %v267 = vld [vmem:[%s0] sm:$0xff]
  %268 = vrot.lane.b32.xlu0 %v267, 115
  %v269 = vpop.permute.xlu0 %268
  %vm270 = vcmask 7168
  %s271 = scalar_lea.vmem %s1, 13
  %272 = vst.msk [vmem:[%s271] ss:$16 sm:$0x3] %vm270, %v269
  %s273 = scalar_lea.vmem %s1, 13
  %274 = vst.msk [vmem:[%s273] ss:$16 sm:$0xc] %vm270, %v269
  %s275 = scalar_lea.vmem %s1, 13
  %276 = vst.msk [vmem:[%s275] ss:$16 sm:$0x30] %vm270, %v269
  %s277 = scalar_lea.vmem %s1, 13
  %278 = vst.msk [vmem:[%s277] ss:$16 sm:$0xc0] %vm270, %v269
  %s279 = scalar_lea.vmem %s0, 8
  %v280 = vld [vmem:[%s279] sm:$0xf]
  %281 = vrot.lane.b32.xlu0 %v280, 115
  %v282 = vpop.permute.xlu0 %281
  %vm283 = vcmask 7168
  %s284 = scalar_lea.vmem %s1, 141
  %285 = vst.msk [vmem:[%s284] ss:$16 sm:$0x3] %vm283, %v282
  %s286 = scalar_lea.vmem %s1, 141
  %287 = vst.msk [vmem:[%s286] ss:$16 sm:$0xc] %vm283, %v282
  %v288 = vld [vmem:[%s0] sm:$0xff]
  %289 = vrot.lane.b32.xlu0 %v288, 114
  %v290 = vpop.permute.xlu0 %289
  %vm291 = vcmask 7168
  %s292 = scalar_lea.vmem %s1, 14
  %293 = vst.msk [vmem:[%s292] ss:$16 sm:$0x3] %vm291, %v290
  %s294 = scalar_lea.vmem %s1, 14
  %295 = vst.msk [vmem:[%s294] ss:$16 sm:$0xc] %vm291, %v290
  %s296 = scalar_lea.vmem %s1, 14
  %297 = vst.msk [vmem:[%s296] ss:$16 sm:$0x30] %vm291, %v290
  %s298 = scalar_lea.vmem %s1, 14
  %299 = vst.msk [vmem:[%s298] ss:$16 sm:$0xc0] %vm291, %v290
  %s300 = scalar_lea.vmem %s0, 8
  %v301 = vld [vmem:[%s300] sm:$0xf]
  %302 = vrot.lane.b32.xlu0 %v301, 114
  %v303 = vpop.permute.xlu0 %302
  %vm304 = vcmask 7168
  %s305 = scalar_lea.vmem %s1, 142
  %306 = vst.msk [vmem:[%s305] ss:$16 sm:$0x3] %vm304, %v303
  %s307 = scalar_lea.vmem %s1, 142
  %308 = vst.msk [vmem:[%s307] ss:$16 sm:$0xc] %vm304, %v303
  %v309 = vld [vmem:[%s0] sm:$0xff]
  %310 = vrot.lane.b32.xlu0 %v309, 113
  %v311 = vpop.permute.xlu0 %310
  %vm312 = vcmask 7168
  %s313 = scalar_lea.vmem %s1, 15
  %314 = vst.msk [vmem:[%s313] ss:$16 sm:$0x3] %vm312, %v311
  %s315 = scalar_lea.vmem %s1, 15
  %316 = vst.msk [vmem:[%s315] ss:$16 sm:$0xc] %vm312, %v311
  %s317 = scalar_lea.vmem %s1, 15
  %318 = vst.msk [vmem:[%s317] ss:$16 sm:$0x30] %vm312, %v311
  %s319 = scalar_lea.vmem %s1, 15
  %320 = vst.msk [vmem:[%s319] ss:$16 sm:$0xc0] %vm312, %v311
  %s321 = scalar_lea.vmem %s0, 8
  %v322 = vld [vmem:[%s321] sm:$0xf]
  %323 = vrot.lane.b32.xlu0 %v322, 113
  %v324 = vpop.permute.xlu0 %323
  %vm325 = vcmask 7168
  %s326 = scalar_lea.vmem %s1, 143
  %327 = vst.msk [vmem:[%s326] ss:$16 sm:$0x3] %vm325, %v324
  %s328 = scalar_lea.vmem %s1, 143
  %329 = vst.msk [vmem:[%s328] ss:$16 sm:$0xc] %vm325, %v324

// kernel: auwgcn_forward.1
$region0: #{auwgcn_forward.1}
  #allocation0 [shape = 'u32[]', space=smem, size = 0x4, offset = 0x4, fixed_abs, tag = 'smem constant byte address 0x4 - core index']
  #allocation1 [shape = 'u32[144,128]{1,0:T(1,128)}', space=vmem, size = 0x12000, scoped, tag = 'internal scratch']
  #allocation2 [shape = 'bf16[192,128]{1,0:T(16,128)(2,1)}', space=vmem, size = 0xc000, scoped, tag = 'scratch operand']
  %s0 = inlined_call_operand.vmem [shape: f32[1,24,128], index: 0, kind: input, shape index: {}]
  %s1 = inlined_call_operand.vmem [shape: bf16[192,24], index: 1, kind: input, shape index: {}]
  %s2 = inlined_call_operand.vmem [shape: f32[192,1], index: 2, kind: input, shape index: {}]
  %s3 = inlined_call_operand.vmem [shape: bf16[224,192], index: 3, kind: input, shape index: {}]
  %s4 = inlined_call_operand.vmem [shape: bf16[64,192], index: 4, kind: input, shape index: {}]
  %s5 = inlined_call_operand.vmem [shape: f32[64,1], index: 5, kind: input, shape index: {}]
  %s6 = inlined_call_operand.vmem [shape: bf16[64,192], index: 6, kind: input, shape index: {}]
  %s7 = inlined_call_operand.vmem [shape: f32[64,1], index: 7, kind: input, shape index: {}]
  %s8 = inlined_call_operand.vmem [shape: bf16[64,192], index: 8, kind: input, shape index: {}]
  %s9 = inlined_call_operand.vmem [shape: f32[64,1], index: 9, kind: input, shape index: {}]
  %s10 = inlined_call_operand.vmem [shape: bf16[10,192], index: 10, kind: input, shape index: {}]
  %s11 = inlined_call_operand.vmem [shape: f32[1,10,128], index: 11, kind: output, shape index: {}]
  %s12 = sld [smem:[#allocation0]]
  $region54: #{auwgcn_forward.1} parent=0
    _
  %s14 = ssub.s32 1, %s12
  %s15 = scalar_select 0, %s14, %s12
  // Predicated region
  $region2: #{auwgcn_forward.1} parent=0 // pred_check
    _
  $region3: #{auwgcn_forward.1} parent=0 // pred_check_branch
    %17 = sbr.rel (0) target = $region5
  $region4: #{auwgcn_forward.1} parent=0 // pred_region
    _
  $region5: #{auwgcn_forward.1} parent=0 // pred_fallthru
    _
  // Predicated region
  $region6: #{auwgcn_forward.1} parent=0 // pred_check
    _
  $region7: #{auwgcn_forward.1} parent=0 // pred_check_branch
    %19 = sbr.rel (0) target = $region9
  $region8: #{auwgcn_forward.1} parent=0 // pred_region
    _
  $region9: #{auwgcn_forward.1} parent=0 // pred_fallthru
    _
  // Predicated region
  $region10: #{auwgcn_forward.1} parent=0 // pred_check
    _
  $region11: #{auwgcn_forward.1} parent=0 // pred_check_branch
    %21 = sbr.rel (0) target = $region13
  $region12: #{auwgcn_forward.1} parent=0 // pred_region
    _
  $region13: #{auwgcn_forward.1} parent=0 // pred_fallthru
    _
  // Predicated region
  $region14: #{auwgcn_forward.1} parent=0 // pred_check
    _
  $region15: #{auwgcn_forward.1} parent=0 // pred_check_branch
    %23 = sbr.rel (0) target = $region17
  $region16: #{auwgcn_forward.1} parent=0 // pred_region
    _
  $region17: #{auwgcn_forward.1} parent=0 // pred_fallthru
    _
  // Predicated region
  $region18: #{auwgcn_forward.1} parent=0 // pred_check
    _
  $region19: #{auwgcn_forward.1} parent=0 // pred_check_branch
    %25 = sbr.rel (0) target = $region21
  $region20: #{auwgcn_forward.1} parent=0 // pred_region
    _
  $region21: #{auwgcn_forward.1} parent=0 // pred_fallthru
    _
  // Predicated region
  $region22: #{auwgcn_forward.1} parent=0 // pred_check
    _
  $region23: #{auwgcn_forward.1} parent=0 // pred_check_branch
    %27 = sbr.rel (0) target = $region25
  $region24: #{auwgcn_forward.1} parent=0 // pred_region
    _
  $region25: #{auwgcn_forward.1} parent=0 // pred_fallthru
    _
  // Predicated region
  $region26: #{auwgcn_forward.1} parent=0 // pred_check
    _
  $region27: #{auwgcn_forward.1} parent=0 // pred_check_branch
    %29 = sbr.rel (0) target = $region29
  $region28: #{auwgcn_forward.1} parent=0 // pred_region
    _
  $region29: #{auwgcn_forward.1} parent=0 // pred_fallthru
    _
  // Predicated region
  $region30: #{auwgcn_forward.1} parent=0 // pred_check
    _
  $region31: #{auwgcn_forward.1} parent=0 // pred_check_branch
    %31 = sbr.rel (0) target = $region33
  $region32: #{auwgcn_forward.1} parent=0 // pred_region
    _
  $region33: #{auwgcn_forward.1} parent=0 // pred_fallthru
    _
  // Predicated region
  $region34: #{auwgcn_forward.1} parent=0 // pred_check
    _
  $region35: #{auwgcn_forward.1} parent=0 // pred_check_branch
    %33 = sbr.rel (0) target = $region37
  $region36: #{auwgcn_forward.1} parent=0 // pred_region
    _
  $region37: #{auwgcn_forward.1} parent=0 // pred_fallthru
    _
  // Predicated region
  $region38: #{auwgcn_forward.1} parent=0 // pred_check
    _
  $region39: #{auwgcn_forward.1} parent=0 // pred_check_branch
    %35 = sbr.rel (0) target = $region41
  $region40: #{auwgcn_forward.1} parent=0 // pred_region
    _
  $region41: #{auwgcn_forward.1} parent=0 // pred_fallthru
    _
  // Predicated region
  $region42: #{auwgcn_forward.1} parent=0 // pred_check
    _
  $region43: #{auwgcn_forward.1} parent=0 // pred_check_branch
    %37 = sbr.rel (0) target = $region45
  $region44: #{auwgcn_forward.1} parent=0 // pred_region
    _
  $region45: #{auwgcn_forward.1} parent=0 // pred_fallthru
    _
  %v39 = vld [vmem:[%s0] sm:$0xff]
  %v40 = vld [vmem:[%s0 + $0x8] sm:$0xff]
  %v41 = vld [vmem:[%s0 + $0x10] sm:$0xff]
  %v42 = vpack.c.bf16 %v40, %v39
  %v43 = vpack.c.bf16 %v41, %v41
  %v44 = vlaneseq
  %v45 = vand.u32 %v44, 127
  %vm46 = vcmp.lt.s32.totalorder %v45, 0
  %v47 = vsub.s32 0, %v45
  %v48 = vsel %vm46, %v47, %v45
  %v49 = vshrl.u32 %v48, 3
  %v50 = vand.u32 %v48, 7
  %v51 = vsub.s32 0, %v50
  %v52 = vsel %vm46, %v51, %v50
  %vm53 = vcmp.ne.s32.totalorder %v52, 0
  %vm54 = vcmp.lt.s32.totalorder %v52, 0
  %vm55 = vmand %vm54, %vm53
  %v56 = vadd.s32 %v52, 8
  %v57 = vsel %vm55, %v56, %v52
  %vm58 = vcmp.ge.s32.totalorder %v57, 1
  %vm59 = vcmp.ge.s32.totalorder %v57, 2
  %vm60 = vcmp.lt.s32.totalorder %v57, 7
  %vm61 = vcmp.lt.s32.totalorder %v57, 6
  %v62 = vld [vmem:[%s1] sm:$0xf]
  %v63 = vld [vmem:[%s1 + $0x4] sm:$0xf]
  %v64 = vld [vmem:[%s1 + $0x8] sm:$0xf]
  %v65 = vld [vmem:[%s1 + $0xc] sm:$0xf]
  %v66 = vld [vmem:[%s1 + $0x10] sm:$0xf]
  %v67 = vld [vmem:[%s1 + $0x14] sm:$0xf]
  %v68 = vld [vmem:[%s1 + $0x18] sm:$0xf]
  %v69 = vld [vmem:[%s1 + $0x1c] sm:$0xf]
  %v70 = vld [vmem:[%s1 + $0x20] sm:$0xf]
  %v71 = vld [vmem:[%s1 + $0x24] sm:$0xf]
  %v72 = vld [vmem:[%s1 + $0x28] sm:$0xf]
  %v73 = vld [vmem:[%s1 + $0x2c] sm:$0xf]
  %v74 = vld [vmem:[%s1 + $0x30] sm:$0xf]
  %v75 = vld [vmem:[%s1 + $0x34] sm:$0xf]
  %v76 = vld [vmem:[%s1 + $0x38] sm:$0xf]
  %v77 = vld [vmem:[%s1 + $0x3c] sm:$0xf]
  %v78 = vld [vmem:[%s1 + $0x40] sm:$0xf]
  %v79 = vld [vmem:[%s1 + $0x44] sm:$0xf]
  %v80 = vld [vmem:[%s1 + $0x48] sm:$0xf]
  %v81 = vld [vmem:[%s1 + $0x4c] sm:$0xf]
  %v82 = vld [vmem:[%s1 + $0x50] sm:$0xf]
  %v83 = vld [vmem:[%s1 + $0x54] sm:$0xf]
  %v84 = vld [vmem:[%s1 + $0x58] sm:$0xf]
  %v85 = vld [vmem:[%s1 + $0x5c] sm:$0xf]
  %v86 = vld [vmem:[%s2] sm:$0xff]
  %v87 = vld [vmem:[%s2 + $0x8] sm:$0xff]
  %v88 = vld [vmem:[%s2 + $0x10] sm:$0xff]
  %v89 = vld [vmem:[%s2 + $0x18] sm:$0xff]
  %v90 = vld [vmem:[%s2 + $0x20] sm:$0xff]
  %v91 = vld [vmem:[%s2 + $0x28] sm:$0xff]
  %v92 = vld [vmem:[%s2 + $0x30] sm:$0xff]
  %v93 = vld [vmem:[%s2 + $0x38] sm:$0xff]
  %v94 = vld [vmem:[%s2 + $0x40] sm:$0xff]
  %v95 = vld [vmem:[%s2 + $0x48] sm:$0xff]
  %v96 = vld [vmem:[%s2 + $0x50] sm:$0xff]
  %v97 = vld [vmem:[%s2 + $0x58] sm:$0xff]
  %v98 = vld [vmem:[%s2 + $0x60] sm:$0xff]
  %v99 = vld [vmem:[%s2 + $0x68] sm:$0xff]
  %v100 = vld [vmem:[%s2 + $0x70] sm:$0xff]
  %v101 = vld [vmem:[%s2 + $0x78] sm:$0xff]
  %v102 = vld [vmem:[%s2 + $0x80] sm:$0xff]
  %v103 = vld [vmem:[%s2 + $0x88] sm:$0xff]
  %v104 = vld [vmem:[%s2 + $0x90] sm:$0xff]
  %v105 = vld [vmem:[%s2 + $0x98] sm:$0xff]
  %v106 = vld [vmem:[%s2 + $0xa0] sm:$0xff]
  %v107 = vld [vmem:[%s2 + $0xa8] sm:$0xff]
  %v108 = vld [vmem:[%s2 + $0xb0] sm:$0xff]
  %v109 = vld [vmem:[%s2 + $0xb8] sm:$0xff]
  %111 = vset.pattern.permute.xlu0 0
  %112 = vperm.xlu0 %111, %v86
  %v113 = vpop.permute.xlu0 %112
  %116 = vset.pattern.permute.xlu0 0
  %117 = vperm.xlu0 %116, %v87
  %v118 = vpop.permute.xlu0 %117
  %121 = vset.pattern.permute.xlu0 0
  %122 = vperm.xlu0 %121, %v88
  %v123 = vpop.permute.xlu0 %122
  %126 = vset.pattern.permute.xlu0 0
  %127 = vperm.xlu0 %126, %v89
  %v128 = vpop.permute.xlu0 %127
  %131 = vset.pattern.permute.xlu0 0
  %132 = vperm.xlu0 %131, %v90
  %v133 = vpop.permute.xlu0 %132
  %136 = vset.pattern.permute.xlu0 0
  %137 = vperm.xlu0 %136, %v91
  %v138 = vpop.permute.xlu0 %137
  %141 = vset.pattern.permute.xlu0 0
  %142 = vperm.xlu0 %141, %v92
  %v143 = vpop.permute.xlu0 %142
  %146 = vset.pattern.permute.xlu0 0
  %147 = vperm.xlu0 %146, %v93
  %v148 = vpop.permute.xlu0 %147
  %151 = vset.pattern.permute.xlu0 0
  %152 = vperm.xlu0 %151, %v94
  %v153 = vpop.permute.xlu0 %152
  %156 = vset.pattern.permute.xlu0 0
  %157 = vperm.xlu0 %156, %v95
  %v158 = vpop.permute.xlu0 %157
  %161 = vset.pattern.permute.xlu0 0
  %162 = vperm.xlu0 %161, %v96
  %v163 = vpop.permute.xlu0 %162
  %166 = vset.pattern.permute.xlu0 0
  %167 = vperm.xlu0 %166, %v97
  %v168 = vpop.permute.xlu0 %167
  %171 = vset.pattern.permute.xlu0 0
  %172 = vperm.xlu0 %171, %v98
  %v173 = vpop.permute.xlu0 %172
  %176 = vset.pattern.permute.xlu0 0
  %177 = vperm.xlu0 %176, %v99
  %v178 = vpop.permute.xlu0 %177
  %181 = vset.pattern.permute.xlu0 0
  %182 = vperm.xlu0 %181, %v100
  %v183 = vpop.permute.xlu0 %182
  %186 = vset.pattern.permute.xlu0 0
  %187 = vperm.xlu0 %186, %v101
  %v188 = vpop.permute.xlu0 %187
  %191 = vset.pattern.permute.xlu0 0
  %192 = vperm.xlu0 %191, %v102
  %v193 = vpop.permute.xlu0 %192
  %196 = vset.pattern.permute.xlu0 0
  %197 = vperm.xlu0 %196, %v103
  %v198 = vpop.permute.xlu0 %197
  %201 = vset.pattern.permute.xlu0 0
  %202 = vperm.xlu0 %201, %v104
  %v203 = vpop.permute.xlu0 %202
  %206 = vset.pattern.permute.xlu0 0
  %207 = vperm.xlu0 %206, %v105
  %v208 = vpop.permute.xlu0 %207
  %211 = vset.pattern.permute.xlu0 0
  %212 = vperm.xlu0 %211, %v106
  %v213 = vpop.permute.xlu0 %212
  %216 = vset.pattern.permute.xlu0 0
  %217 = vperm.xlu0 %216, %v107
  %v218 = vpop.permute.xlu0 %217
  %221 = vset.pattern.permute.xlu0 0
  %222 = vperm.xlu0 %221, %v108
  %v223 = vpop.permute.xlu0 %222
  %226 = vset.pattern.permute.xlu0 0
  %227 = vperm.xlu0 %226, %v109
  %v228 = vpop.permute.xlu0 %227
  %v254 = vunpack.c.l.b16 %v62
  %v255 = vunpack.c.l.b16 %v63
  %v256 = vunpack.c.l.b16 %v64
  %v257 = vunpack.c.l.b16 %v65
  %v258 = vunpack.c.l.b16 %v66
  %v259 = vunpack.c.l.b16 %v67
  %v260 = vunpack.c.l.b16 %v68
  %v261 = vunpack.c.l.b16 %v69
  %v262 = vunpack.c.l.b16 %v70
  %v263 = vunpack.c.l.b16 %v71
  %v264 = vunpack.c.l.b16 %v72
  %v265 = vunpack.c.l.b16 %v73
  %v266 = vunpack.c.l.b16 %v74
  %v267 = vunpack.c.l.b16 %v75
  %v268 = vunpack.c.l.b16 %v76
  %v269 = vunpack.c.l.b16 %v77
  %v270 = vunpack.c.l.b16 %v78
  %v271 = vunpack.c.l.b16 %v79
  %v272 = vunpack.c.l.b16 %v80
  %v273 = vunpack.c.l.b16 %v81
  %v274 = vunpack.c.l.b16 %v82
  %v275 = vunpack.c.l.b16 %v83
  %v276 = vunpack.c.l.b16 %v84
  %v277 = vunpack.c.l.b16 %v85
  %v278 = vpack.c.b16 %v255, %v254
  %v279 = vpack.c.b16 %v257, %v256
  %v280 = vpack.c.b16 %v259, %v258
  %v281 = vpack.c.b16 %v261, %v260
  %v282 = vpack.c.b16 %v263, %v262
  %v283 = vpack.c.b16 %v265, %v264
  %v284 = vpack.c.b16 %v267, %v266
  %v285 = vpack.c.b16 %v269, %v268
  %v286 = vpack.c.b16 %v271, %v270
  %v287 = vpack.c.b16 %v273, %v272
  %v288 = vpack.c.b16 %v275, %v274
  %v289 = vpack.c.b16 %v277, %v276
  %vm290 = vcmask 195584
  %v292 = vsel %vm290, %v278, 0
  %v295 = vsel %vm290, %v279, 0
  %v298 = vsel %vm290, %v280, 0
  %v301 = vsel %vm290, %v281, 0
  %v304 = vsel %vm290, %v282, 0
  %v307 = vsel %vm290, %v283, 0
  %v310 = vsel %vm290, %v284, 0
  %v313 = vsel %vm290, %v285, 0
  %v316 = vsel %vm290, %v286, 0
  %v319 = vsel %vm290, %v287, 0
  %v322 = vsel %vm290, %v288, 0
  %v325 = vsel %vm290, %v289, 0
  %vm327 = vcmask 1043456
  %v329 = vsel %vm327, %v43, 0
  %331 = vmatprep.subr.bf16.mxu0 0
  %332 = vmatpush1.bf16.msra.mxu0 %v42
  %333 = vmatprep.subr.bf16.mxu0 0
  %334 = vmatpush1.bf16.msra.mxu0 %v329
  %335 = vmatprep.subr.bf16.mxu0 0
  %336 = vmatpush1.bf16.msra.mxu0 0
  %337 = vmatprep.subr.bf16.mxu0 0
  %338 = vmatpush1.bf16.msra.mxu0 0
  %339 = vmatprep.subr.bf16.mxu0 0
  %340 = vmatpush1.bf16.msra.mxu0 0
  %341 = vmatprep.subr.bf16.mxu0 0
  %342 = vmatpush1.bf16.msra.mxu0 0
  %343 = vmatprep.subr.bf16.mxu0 0
  %344 = vmatpush1.bf16.msra.mxu0 0
  %345 = vmatprep.subr.bf16.mxu0 0
  %346 = vmatpush1.bf16.msra.mxu0 0
  %347 = vmatprep.subr.bf16.mxu0 0
  %348 = vmatpush1.bf16.msra.mxu0 0
  %349 = vmatprep.subr.bf16.mxu0 0
  %350 = vmatpush1.bf16.msra.mxu0 0
  %351 = vmatprep.subr.bf16.mxu0 0
  %352 = vmatpush1.bf16.msra.mxu0 0
  %353 = vmatprep.subr.bf16.mxu0 0
  %354 = vmatpush1.bf16.msra.mxu0 0
  %355 = vmatprep.subr.bf16.mxu0 0
  %356 = vmatpush1.bf16.msra.mxu0 0
  %357 = vmatprep.subr.bf16.mxu0 0
  %358 = vmatpush1.bf16.msra.mxu0 0
  %359 = vmatprep.subr.bf16.mxu0 0
  %360 = vmatpush1.bf16.msra.mxu0 0
  %361 = vmatprep.subr.bf16.mxu0 0
  %362 = vmatpush1.bf16.msra.mxu0 0
  %363 = vmatprep.mubr.bf16.mxu0 0
  %364 = vmatmul.mubr.bf16.gmra.mrb[0].mxu0 %v292
  %v365 = vpop.f32.mrb[0].mxu0
  %v366 = vadd.f32 %v113, %v365
  %v367 = vpop.f32.mrb[0].mxu0
  %v368 = vpop.f32.mrb[0].mxu0
  %v369 = vadd.f32 %v118, %v368
  %v370 = vpop.f32.mrb[0].mxu0
  %371 = vmatprep.mubr.bf16.mxu0 0
  %372 = vmatmul.mubr.bf16.gmra.mrb[0].mxu0 %v295
  %v373 = vpop.f32.mrb[0].mxu0
  %v374 = vadd.f32 %v123, %v373
  %v375 = vpop.f32.mrb[0].mxu0
  %v376 = vpop.f32.mrb[0].mxu0
  %v377 = vadd.f32 %v128, %v376
  %v378 = vpop.f32.mrb[0].mxu0
  %379 = vmatprep.mubr.bf16.mxu0 0
  %380 = vmatmul.mubr.bf16.gmra.mrb[0].mxu0 %v298
  %v381 = vpop.f32.mrb[0].mxu0
  %v382 = vadd.f32 %v133, %v381
  %v383 = vpop.f32.mrb[0].mxu0
  %v384 = vpop.f32.mrb[0].mxu0
  %v385 = vadd.f32 %v138, %v384
  %v386 = vpop.f32.mrb[0].mxu0
  %387 = vmatprep.mubr.bf16.mxu0 0
  %388 = vmatmul.mubr.bf16.gmra.mrb[0].mxu0 %v301
  %v389 = vpop.f32.mrb[0].mxu0
  %v390 = vadd.f32 %v143, %v389
  %v391 = vpop.f32.mrb[0].mxu0
  %v392 = vpop.f32.mrb[0].mxu0
  %v393 = vadd.f32 %v148, %v392
  %v394 = vpop.f32.mrb[0].mxu0
  %395 = vmatprep.mubr.bf16.mxu0 0
  %396 = vmatmul.mubr.bf16.gmra.mrb[0].mxu0 %v304
  %v397 = vpop.f32.mrb[0].mxu0
  %v398 = vadd.f32 %v153, %v397
  %v399 = vpop.f32.mrb[0].mxu0
  %v400 = vpop.f32.mrb[0].mxu0
  %v401 = vadd.f32 %v158, %v400
  %v402 = vpop.f32.mrb[0].mxu0
  %403 = vmatprep.mubr.bf16.mxu0 0
  %404 = vmatmul.mubr.bf16.gmra.mrb[0].mxu0 %v307
  %v405 = vpop.f32.mrb[0].mxu0
  %v406 = vadd.f32 %v163, %v405
  %v407 = vpop.f32.mrb[0].mxu0
  %v408 = vpop.f32.mrb[0].mxu0
  %v409 = vadd.f32 %v168, %v408
  %v410 = vpop.f32.mrb[0].mxu0
  %411 = vmatprep.mubr.bf16.mxu0 0
  %412 = vmatmul.mubr.bf16.gmra.mrb[0].mxu0 %v310
  %v413 = vpop.f32.mrb[0].mxu0
  %v414 = vadd.f32 %v173, %v413
  %v415 = vpop.f32.mrb[0].mxu0
  %v416 = vpop.f32.mrb[0].mxu0
  %v417 = vadd.f32 %v178, %v416
  %v418 = vpop.f32.mrb[0].mxu0
  %419 = vmatprep.mubr.bf16.mxu0 0
  %420 = vmatmul.mubr.bf16.gmra.mrb[0].mxu0 %v313
  %v421 = vpop.f32.mrb[0].mxu0
  %v422 = vadd.f32 %v183, %v421
  %v423 = vpop.f32.mrb[0].mxu0
  %v424 = vpop.f32.mrb[0].mxu0
  %v425 = vadd.f32 %v188, %v424
  %v426 = vpop.f32.mrb[0].mxu0
  %427 = vmatprep.mubr.bf16.mxu0 0
  %428 = vmatmul.mubr.bf16.gmra.mrb[0].mxu0 %v316
  %v429 = vpop.f32.mrb[0].mxu0
  %v430 = vadd.f32 %v193, %v429
  %v431 = vpop.f32.mrb[0].mxu0
  %v432 = vpop.f32.mrb[0].mxu0
  %v433 = vadd.f32 %v198, %v432
  %v434 = vpop.f32.mrb[0].mxu0
  %435 = vmatprep.mubr.bf16.mxu0 0
  %436 = vmatmul.mubr.bf16.gmra.mrb[0].mxu0 %v319
  %v437 = vpop.f32.mrb[0].mxu0
  %v438 = vadd.f32 %v203, %v437
  %v439 = vpop.f32.mrb[0].mxu0
  %v440 = vpop.f32.mrb[0].mxu0
  %v441 = vadd.f32 %v208, %v440
  %v442 = vpop.f32.mrb[0].mxu0
  %443 = vmatprep.mubr.bf16.mxu0 0
  %444 = vmatmul.mubr.bf16.gmra.mrb[0].mxu0 %v322
  %v445 = vpop.f32.mrb[0].mxu0
  %v446 = vadd.f32 %v213, %v445
  %v447 = vpop.f32.mrb[0].mxu0
  %v448 = vpop.f32.mrb[0].mxu0
  %v449 = vadd.f32 %v218, %v448
  %v450 = vpop.f32.mrb[0].mxu0
  %451 = vmatprep.mubr.bf16.mxu0 0
  %452 = vmatmul.mubr.bf16.gmra.mrb[0].mxu0 %v325
  %v453 = vpop.f32.mrb[0].mxu0
  %v454 = vadd.f32 %v223, %v453
  %v455 = vpop.f32.mrb[0].mxu0
  %v456 = vpop.f32.mrb[0].mxu0
  %v457 = vadd.f32 %v228, %v456
  %v458 = vpop.f32.mrb[0].mxu0
  %459 = vdwg.mxu0
  %v460 = vmax.f32 %v366, 0.0
  %v461 = vmax.f32 %v369, 0.0
  %v462 = vmax.f32 %v374, 0.0
  %v463 = vmax.f32 %v377, 0.0
  %v464 = vmax.f32 %v382, 0.0
  %v465 = vmax.f32 %v385, 0.0
  %v466 = vmax.f32 %v390, 0.0
  %v467 = vmax.f32 %v393, 0.0
  %v468 = vmax.f32 %v398, 0.0
  %v469 = vmax.f32 %v401, 0.0
  %v470 = vmax.f32 %v406, 0.0
  %v471 = vmax.f32 %v409, 0.0
  %v472 = vmax.f32 %v414, 0.0
  %v473 = vmax.f32 %v417, 0.0
  %v474 = vmax.f32 %v422, 0.0
  %v475 = vmax.f32 %v425, 0.0
  %v476 = vmax.f32 %v430, 0.0
  %v477 = vmax.f32 %v433, 0.0
  %v478 = vmax.f32 %v438, 0.0
  %v479 = vmax.f32 %v441, 0.0
  %v480 = vmax.f32 %v446, 0.0
  %v481 = vmax.f32 %v449, 0.0
  %v482 = vmax.f32 %v454, 0.0
  %v483 = vmax.f32 %v457, 0.0
  %v484 = vld [vmem:[%s3] sm:$0xff]
  %v485 = vld [vmem:[%s3 + $0x8] sm:$0xff]
  %v486 = vld [vmem:[%s3 + $0x10] sm:$0xff]
  %v487 = vld [vmem:[%s3 + $0x18] sm:$0xff]
  %v488 = vld [vmem:[%s3 + $0x20] sm:$0xff]
  %v489 = vld [vmem:[%s3 + $0x28] sm:$0xff]
  %v490 = vld [vmem:[%s3 + $0x30] sm:$0xff]
  %v491 = vld [vmem:[%s3 + $0x38] sm:$0xff]
  %v492 = vld [vmem:[%s3 + $0x40] sm:$0xff]
  %v493 = vld [vmem:[%s3 + $0x48] sm:$0xff]
  %v494 = vld [vmem:[%s3 + $0x50] sm:$0xff]
  %v495 = vld [vmem:[%s3 + $0x58] sm:$0xff]
  %v496 = vld [vmem:[%s3 + $0x60] sm:$0xff]
  %v497 = vld [vmem:[%s3 + $0x68] sm:$0xff]
  %v498 = vld [vmem:[%s3 + $0x70] sm:$0xff]
  %v499 = vld [vmem:[%s3 + $0x78] sm:$0xff]
  %v500 = vld [vmem:[%s3 + $0x80] sm:$0xff]
  %v501 = vld [vmem:[%s3 + $0x88] sm:$0xff]
  %v502 = vld [vmem:[%s3 + $0x90] sm:$0xff]
  %v503 = vld [vmem:[%s3 + $0x98] sm:$0xff]
  %v504 = vld [vmem:[%s3 + $0xa0] sm:$0xff]
  %v505 = vld [vmem:[%s3 + $0xa8] sm:$0xff]
  %v506 = vld [vmem:[%s3 + $0xb0] sm:$0xff]
  %v507 = vld [vmem:[%s3 + $0xb8] sm:$0xff]
  %v508 = vld [vmem:[%s3 + $0xc0] sm:$0xff]
  %v509 = vld [vmem:[%s3 + $0xc8] sm:$0xff]
  %v510 = vld [vmem:[%s3 + $0xd0] sm:$0xff]
  %v511 = vld [vmem:[%s3 + $0xd8] sm:$0xff]
  %v512 = vpack.c.bf16 %v461, %v460
  %v513 = vpack.c.bf16 %v463, %v462
  %v514 = vpack.c.bf16 %v465, %v464
  %v515 = vpack.c.bf16 %v467, %v466
  %v516 = vpack.c.bf16 %v469, %v468
  %v517 = vpack.c.bf16 %v471, %v470
  %v518 = vpack.c.bf16 %v473, %v472
  %v519 = vpack.c.bf16 %v475, %v474
  %v520 = vpack.c.bf16 %v477, %v476
  %v521 = vpack.c.bf16 %v479, %v478
  %v522 = vpack.c.bf16 %v481, %v480
  %v523 = vpack.c.bf16 %v483, %v482
  %v552 = vunpack.c.l.b16 %v484
  %v553 = vunpack.c.h.b16 %v484
  %v554 = vunpack.c.l.b16 %v485
  %v555 = vunpack.c.h.b16 %v485
  %v556 = vunpack.c.l.b16 %v486
  %v557 = vunpack.c.h.b16 %v486
  %v558 = vunpack.c.l.b16 %v487
  %v559 = vunpack.c.h.b16 %v487
  %v560 = vunpack.c.l.b16 %v488
  %v561 = vunpack.c.h.b16 %v488
  %v562 = vunpack.c.l.b16 %v489
  %v563 = vunpack.c.h.b16 %v489
  %v564 = vunpack.c.l.b16 %v490
  %v565 = vunpack.c.h.b16 %v490
  %v566 = vunpack.c.l.b16 %v491
  %v567 = vunpack.c.h.b16 %v491
  %v568 = vunpack.c.l.b16 %v492
  %v569 = vunpack.c.h.b16 %v492
  %v570 = vunpack.c.l.b16 %v493
  %v571 = vunpack.c.h.b16 %v493
  %v572 = vunpack.c.l.b16 %v494
  %v573 = vunpack.c.h.b16 %v494
  %v574 = vunpack.c.l.b16 %v495
  %v575 = vunpack.c.h.b16 %v495
  %v576 = vunpack.c.l.b16 %v496
  %v577 = vunpack.c.h.b16 %v496
  %v578 = vunpack.c.l.b16 %v497
  %v579 = vunpack.c.h.b16 %v497
  %v580 = vunpack.c.l.b16 %v498
  %v581 = vunpack.c.h.b16 %v498
  %v582 = vunpack.c.l.b16 %v499
  %v583 = vunpack.c.h.b16 %v499
  %v584 = vunpack.c.l.b16 %v500
  %v585 = vunpack.c.h.b16 %v500
  %v586 = vunpack.c.l.b16 %v501
  %v587 = vunpack.c.h.b16 %v501
  %v588 = vunpack.c.l.b16 %v502
  %v589 = vunpack.c.h.b16 %v502
  %v590 = vunpack.c.l.b16 %v503
  %v591 = vunpack.c.h.b16 %v503
  %v592 = vunpack.c.l.b16 %v504
  %v593 = vunpack.c.h.b16 %v504
  %v594 = vunpack.c.l.b16 %v505
  %v595 = vunpack.c.h.b16 %v505
  %v596 = vunpack.c.l.b16 %v506
  %v597 = vunpack.c.h.b16 %v506
  %v598 = vunpack.c.l.b16 %v507
  %v599 = vunpack.c.h.b16 %v507
  %v600 = vunpack.c.l.b16 %v508
  %v601 = vunpack.c.h.b16 %v508
  %v602 = vunpack.c.l.b16 %v509
  %v603 = vunpack.c.h.b16 %v509
  %v604 = vunpack.c.l.b16 %v510
  %v605 = vunpack.c.h.b16 %v510
  %v606 = vunpack.c.l.b16 %v511
  %v607 = vunpack.c.h.b16 %v511
  %v608 = vpack.c.b16 %v554, %v552
  %v609 = vpack.c.b16 %v555, %v553
  %v610 = vpack.c.b16 %v558, %v556
  %v611 = vpack.c.b16 %v559, %v557
  %v612 = vpack.c.b16 %v562, %v560
  %v613 = vpack.c.b16 %v563, %v561
  %v614 = vpack.c.b16 %v566, %v564
  %v615 = vpack.c.b16 %v567, %v565
  %v616 = vpack.c.b16 %v570, %v568
  %v617 = vpack.c.b16 %v571, %v569
  %v618 = vpack.c.b16 %v574, %v572
  %v619 = vpack.c.b16 %v575, %v573
  %v620 = vpack.c.b16 %v578, %v576
  %v621 = vpack.c.b16 %v579, %v577
  %v622 = vpack.c.b16 %v582, %v580
  %v623 = vpack.c.b16 %v583, %v581
  %v624 = vpack.c.b16 %v586, %v584
  %v625 = vpack.c.b16 %v587, %v585
  %v626 = vpack.c.b16 %v590, %v588
  %v627 = vpack.c.b16 %v591, %v589
  %v628 = vpack.c.b16 %v594, %v592
  %v629 = vpack.c.b16 %v595, %v593
  %v630 = vpack.c.b16 %v598, %v596
  %v631 = vpack.c.b16 %v599, %v597
  %v632 = vpack.c.b16 %v602, %v600
  %v633 = vpack.c.b16 %v603, %v601
  %v634 = vpack.c.b16 %v606, %v604
  %v635 = vpack.c.b16 %v607, %v605
  %vm650 = vcmask 523264
  %v652 = vsel %vm650, %v609, 0
  %v655 = vsel %vm650, %v611, 0
  %v658 = vsel %vm650, %v613, 0
  %v661 = vsel %vm650, %v615, 0
  %v664 = vsel %vm650, %v617, 0
  %v667 = vsel %vm650, %v619, 0
  %v670 = vsel %vm650, %v621, 0
  %v673 = vsel %vm650, %v623, 0
  %v676 = vsel %vm650, %v625, 0
  %v679 = vsel %vm650, %v627, 0
  %v682 = vsel %vm650, %v629, 0
  %v685 = vsel %vm650, %v631, 0
  %v688 = vsel %vm650, %v633, 0
  %v691 = vsel %vm650, %v635, 0
  %693 = vmatprep.subr.bf16.mxu0 0
  %694 = vmatpush1.bf16.msra.mxu0 %v512
  %695 = vmatprep.subr.bf16.mxu0 0
  %696 = vmatpush1.bf16.msra.mxu0 %v513
  %697 = vmatprep.subr.bf16.mxu0 0
  %698 = vmatpush1.bf16.msra.mxu0 %v514
  %699 = vmatprep.subr.bf16.mxu0 0
  %700 = vmatpush1.bf16.msra.mxu0 %v515
  %701 = vmatprep.subr.bf16.mxu0 0
  %702 = vmatpush1.bf16.msra.mxu0 %v516
  %703 = vmatprep.subr.bf16.mxu0 0
  %704 = vmatpush1.bf16.msra.mxu0 %v517
  %705 = vmatprep.subr.bf16.mxu0 0
  %706 = vmatpush1.bf16.msra.mxu0 %v518
  %707 = vmatprep.subr.bf16.mxu0 0
  %708 = vmatpush1.bf16.msra.mxu0 %v519
  %709 = vmatprep.subr.bf16.mxu0 0
  %710 = vmatpush1.bf16.msra.mxu0 %v520
  %711 = vmatprep.subr.bf16.mxu0 0
  %712 = vmatpush1.bf16.msra.mxu0 %v521
  %713 = vmatprep.subr.bf16.mxu0 0
  %714 = vmatpush1.bf16.msra.mxu0 %v522
  %715 = vmatprep.subr.bf16.mxu0 0
  %716 = vmatpush1.bf16.msra.mxu0 %v523
  %717 = vmatprep.subr.bf16.mxu0 0
  %718 = vmatpush1.bf16.msra.mxu0 0
  %719 = vmatprep.subr.bf16.mxu0 0
  %720 = vmatpush1.bf16.msra.mxu0 0
  %721 = vmatprep.subr.bf16.mxu0 0
  %722 = vmatpush1.bf16.msra.mxu0 0
  %723 = vmatprep.subr.bf16.mxu0 0
  %724 = vmatpush1.bf16.msra.mxu0 0
  %725 = vmatprep.mubr.bf16.mxu0 %v652
  %726 = vmatmul.mubr.bf16.gmra.mrb[0].mxu0 %v608
  %v727 = vpop.f32.mrb[0].mxu0
  %v728 = vadd.f32 0.0, %v727
  %v729 = vpop.f32.mrb[0].mxu0
  %v730 = vpop.f32.mrb[0].mxu0
  %v731 = vadd.f32 0.0, %v730
  %v732 = vpop.f32.mrb[0].mxu0
  %733 = vmatprep.mubr.bf16.mxu0 %v655
  %734 = vmatmul.mubr.bf16.gmra.mrb[0].mxu0 %v610
  %v735 = vpop.f32.mrb[0].mxu0
  %v736 = vadd.f32 0.0, %v735
  %v737 = vpop.f32.mrb[0].mxu0
  %v738 = vpop.f32.mrb[0].mxu0
  %v739 = vadd.f32 0.0, %v738
  %v740 = vpop.f32.mrb[0].mxu0
  %741 = vmatprep.mubr.bf16.mxu0 %v658
  %742 = vmatmul.mubr.bf16.gmra.mrb[0].mxu0 %v612
  %v743 = vpop.f32.mrb[0].mxu0
  %v744 = vadd.f32 0.0, %v743
  %v745 = vpop.f32.mrb[0].mxu0
  %v746 = vpop.f32.mrb[0].mxu0
  %v747 = vadd.f32 0.0, %v746
  %v748 = vpop.f32.mrb[0].mxu0
  %749 = vmatprep.mubr.bf16.mxu0 %v661
  %750 = vmatmul.mubr.bf16.gmra.mrb[0].mxu0 %v614
  %v751 = vpop.f32.mrb[0].mxu0
  %v752 = vadd.f32 0.0, %v751
  %v753 = vpop.f32.mrb[0].mxu0
  %v754 = vpop.f32.mrb[0].mxu0
  %v755 = vadd.f32 0.0, %v754
  %v756 = vpop.f32.mrb[0].mxu0
  %757 = vmatprep.mubr.bf16.mxu0 %v664
  %758 = vmatmul.mubr.bf16.gmra.mrb[0].mxu0 %v616
  %v759 = vpop.f32.mrb[0].mxu0
  %v760 = vadd.f32 0.0, %v759
  %v761 = vpop.f32.mrb[0].mxu0
  %v762 = vpop.f32.mrb[0].mxu0
  %v763 = vadd.f32 0.0, %v762
  %v764 = vpop.f32.mrb[0].mxu0
  %765 = vmatprep.mubr.bf16.mxu0 %v667
  %766 = vmatmul.mubr.bf16.gmra.mrb[0].mxu0 %v618
  %v767 = vpop.f32.mrb[0].mxu0
  %v768 = vadd.f32 0.0, %v767
  %v769 = vpop.f32.mrb[0].mxu0
  %v770 = vpop.f32.mrb[0].mxu0
  %v771 = vadd.f32 0.0, %v770
  %v772 = vpop.f32.mrb[0].mxu0
  %773 = vmatprep.mubr.bf16.mxu0 %v670
  %774 = vmatmul.mubr.bf16.gmra.mrb[0].mxu0 %v620
  %v775 = vpop.f32.mrb[0].mxu0
  %v776 = vadd.f32 0.0, %v775
  %v777 = vpop.f32.mrb[0].mxu0
  %v778 = vpop.f32.mrb[0].mxu0
  %v779 = vadd.f32 0.0, %v778
  %v780 = vpop.f32.mrb[0].mxu0
  %781 = vmatprep.mubr.bf16.mxu0 %v673
  %782 = vmatmul.mubr.bf16.gmra.mrb[0].mxu0 %v622
  %v783 = vpop.f32.mrb[0].mxu0
  %v784 = vadd.f32 0.0, %v783
  %v785 = vpop.f32.mrb[0].mxu0
  %v786 = vpop.f32.mrb[0].mxu0
  %v787 = vadd.f32 0.0, %v786
  %v788 = vpop.f32.mrb[0].mxu0
  %789 = vmatprep.mubr.bf16.mxu0 %v676
  %790 = vmatmul.mubr.bf16.gmra.mrb[0].mxu0 %v624
  %v791 = vpop.f32.mrb[0].mxu0
  %v792 = vadd.f32 0.0, %v791
  %v793 = vpop.f32.mrb[0].mxu0
  %v794 = vpop.f32.mrb[0].mxu0
  %v795 = vadd.f32 0.0, %v794
  %v796 = vpop.f32.mrb[0].mxu0
  %797 = vmatprep.mubr.bf16.mxu0 %v679
  %798 = vmatmul.mubr.bf16.gmra.mrb[0].mxu0 %v626
  %v799 = vpop.f32.mrb[0].mxu0
  %v800 = vadd.f32 0.0, %v799
  %v801 = vpop.f32.mrb[0].mxu0
  %v802 = vpop.f32.mrb[0].mxu0
  %v803 = vadd.f32 0.0, %v802
  %v804 = vpop.f32.mrb[0].mxu0
  %805 = vmatprep.mubr.bf16.mxu0 %v682
  %806 = vmatmul.mubr.bf16.gmra.mrb[0].mxu0 %v628
  %v807 = vpop.f32.mrb[0].mxu0
  %v808 = vadd.f32 0.0, %v807
  %v809 = vpop.f32.mrb[0].mxu0
  %v810 = vpop.f32.mrb[0].mxu0
  %v811 = vadd.f32 0.0, %v810
  %v812 = vpop.f32.mrb[0].mxu0
  %813 = vmatprep.mubr.bf16.mxu0 %v685
  %814 = vmatmul.mubr.bf16.gmra.mrb[0].mxu0 %v630
  %v815 = vpop.f32.mrb[0].mxu0
  %v816 = vadd.f32 0.0, %v815
  %v817 = vpop.f32.mrb[0].mxu0
  %v818 = vpop.f32.mrb[0].mxu0
  %v819 = vadd.f32 0.0, %v818
  %v820 = vpop.f32.mrb[0].mxu0
  %821 = vmatprep.mubr.bf16.mxu0 %v688
  %822 = vmatmul.mubr.bf16.gmra.mrb[0].mxu0 %v632
  %v823 = vpop.f32.mrb[0].mxu0
  %v824 = vadd.f32 0.0, %v823
  %v825 = vpop.f32.mrb[0].mxu0
  %v826 = vpop.f32.mrb[0].mxu0
  %v827 = vadd.f32 0.0, %v826
  %v828 = vpop.f32.mrb[0].mxu0
  %829 = vmatprep.mubr.bf16.mxu0 %v691
  %830 = vmatmul.mubr.bf16.gmra.mrb[0].mxu0 %v634
  %v831 = vpop.f32.mrb[0].mxu0
  %v832 = vadd.f32 0.0, %v831
  %v833 = vpop.f32.mrb[0].mxu0
  %v834 = vpop.f32.mrb[0].mxu0
  %v835 = vadd.f32 0.0, %v834
  %v836 = vpop.f32.mrb[0].mxu0
  %837 = vdwg.mxu0
  %v840 = vcombine.high %v832, %v832
  %v842 = vunpack.c.l.s4 1966171168
  %v843 = vunpack.c.0.s8 %v842
  %v844 = vlaneseq
  %v845 = vshrl.u32 %v844, 7
  %v846 = vsub.s32 %v843, %v845
  %v847 = vrot.slane %v832, %v846
  %v849 = vunpack.c.l.s4 1966171168
  %v850 = vunpack.c.0.s8 %v849
  %v851 = vlaneseq
  %v852 = vshrl.u32 %v851, 7
  %v853 = vsub.s32 %v850, %v852
  %v854 = vrot.slane %v840, %v853
  %v855 = vcombine.high %v847, %v847
  %v856 = vcombine.high %v854, %v854
  %v858 = vunpack.c.l.s4 1966171168
  %v859 = vunpack.c.0.s8 %v858
  %v860 = vlaneseq
  %v861 = vshrl.u32 %v860, 7
  %v862 = vsub.s32 %v859, %v861
  %v863 = vrot.slane %v847, %v862
  %v865 = vunpack.c.l.s4 1966171168
  %v866 = vunpack.c.0.s8 %v865
  %v867 = vlaneseq
  %v868 = vshrl.u32 %v867, 7
  %v869 = vsub.s32 %v866, %v868
  %v870 = vrot.slane %v854, %v869
  %v872 = vunpack.c.l.s4 1966171168
  %v873 = vunpack.c.0.s8 %v872
  %v874 = vlaneseq
  %v875 = vshrl.u32 %v874, 7
  %v876 = vsub.s32 %v873, %v875
  %v877 = vrot.slane %v855, %v876
  %v879 = vunpack.c.l.s4 1966171168
  %v880 = vunpack.c.0.s8 %v879
  %v881 = vlaneseq
  %v882 = vshrl.u32 %v881, 7
  %v883 = vsub.s32 %v880, %v882
  %v884 = vrot.slane %v856, %v883
  %v885 = vcombine.high %v863, %v863
  %v886 = vcombine.high %v870, %v870
  %v887 = vcombine.high %v877, %v877
  %v888 = vcombine.high %v884, %v884
  %v890 = vunpack.c.l.s4 1966171168
  %v891 = vunpack.c.0.s8 %v890
  %v892 = vlaneseq
  %v893 = vshrl.u32 %v892, 7
  %v894 = vsub.s32 %v891, %v893
  %v895 = vrot.slane %v835, %v894
  %v896 = vcombine.high %v895, %v895
  %v898 = vunpack.c.l.s4 1966171168
  %v899 = vunpack.c.0.s8 %v898
  %v900 = vlaneseq
  %v901 = vshrl.u32 %v900, 7
  %v902 = vsub.s32 %v899, %v901
  %v903 = vrot.slane %v895, %v902
  %v905 = vunpack.c.l.s4 1966171168
  %v906 = vunpack.c.0.s8 %v905
  %v907 = vlaneseq
  %v908 = vshrl.u32 %v907, 7
  %v909 = vsub.s32 %v906, %v908
  %v910 = vrot.slane %v896, %v909
  %v911 = vcombine.high %v903, %v903
  %v912 = vcombine.high %v910, %v910
  %v913 = vlaneseq
  %v914 = vshrl.u32 %v913, 7
  %v915 = vsub.s32 0, %v914
  %v916 = vrot.slane %v863, %v915
  %v917 = vlaneseq
  %v918 = vshrl.u32 %v917, 7
  %v919 = vsub.s32 0, %v918
  %v920 = vrot.slane %v877, %v919
  %v921 = vlaneseq
  %v922 = vshrl.u32 %v921, 7
  %v923 = vsub.s32 0, %v922
  %v924 = vrot.slane %v885, %v923
  %v925 = vlaneseq
  %v926 = vshrl.u32 %v925, 7
  %v927 = vsub.s32 0, %v926
  %v928 = vrot.slane %v887, %v927
  %v929 = vlaneseq
  %v930 = vshrl.u32 %v929, 7
  %v931 = vsub.s32 0, %v930
  %v932 = vrot.slane %v870, %v931
  %v933 = vlaneseq
  %v934 = vshrl.u32 %v933, 7
  %v935 = vsub.s32 0, %v934
  %v936 = vrot.slane %v884, %v935
  %v937 = vlaneseq
  %v938 = vshrl.u32 %v937, 7
  %v939 = vsub.s32 0, %v938
  %v940 = vrot.slane %v886, %v939
  %v941 = vlaneseq
  %v942 = vshrl.u32 %v941, 7
  %v943 = vsub.s32 0, %v942
  %v944 = vrot.slane %v888, %v943
  %v945 = vlaneseq
  %v946 = vshrl.u32 %v945, 7
  %v947 = vsub.s32 0, %v946
  %v948 = vrot.slane %v903, %v947
  %v949 = vlaneseq
  %v950 = vshrl.u32 %v949, 7
  %v951 = vsub.s32 0, %v950
  %v952 = vrot.slane %v910, %v951
  %v953 = vlaneseq
  %v954 = vshrl.u32 %v953, 7
  %v955 = vsub.s32 0, %v954
  %v956 = vrot.slane %v911, %v955
  %v957 = vlaneseq
  %v958 = vshrl.u32 %v957, 7
  %v959 = vsub.s32 0, %v958
  %v960 = vrot.slane %v912, %v959
  %v973 = vadd.f32 %v824, %v916
  %v974 = vadd.f32 %v827, %v916
  %v975 = vadd.f32 %v824, %v920
  %v976 = vadd.f32 %v827, %v920
  %v977 = vadd.f32 %v824, %v924
  %v978 = vadd.f32 %v827, %v924
  %v979 = vadd.f32 %v824, %v928
  %v980 = vadd.f32 %v827, %v928
  %v981 = vadd.f32 %v824, %v932
  %v982 = vadd.f32 %v827, %v932
  %v983 = vadd.f32 %v824, %v936
  %v984 = vadd.f32 %v827, %v936
  %v985 = vadd.f32 %v824, %v940
  %v986 = vadd.f32 %v827, %v940
  %v987 = vadd.f32 %v824, %v944
  %v988 = vadd.f32 %v827, %v944
  %v989 = vadd.f32 %v824, %v948
  %v990 = vadd.f32 %v827, %v948
  %v991 = vadd.f32 %v824, %v952
  %v992 = vadd.f32 %v827, %v952
  %v993 = vadd.f32 %v824, %v956
  %v994 = vadd.f32 %v827, %v956
  %v995 = vadd.f32 %v824, %v960
  %v996 = vadd.f32 %v827, %v960
  %vm997 = vcmp.gt.f32.partialorder %v973, 0.0
  %vm998 = vcmp.gt.f32.partialorder %v974, 0.0
  %vm999 = vcmp.gt.f32.partialorder %v975, 0.0
  %vm1000 = vcmp.gt.f32.partialorder %v976, 0.0
  %vm1001 = vcmp.gt.f32.partialorder %v977, 0.0
  %vm1002 = vcmp.gt.f32.partialorder %v978, 0.0
  %vm1003 = vcmp.gt.f32.partialorder %v979, 0.0
  %vm1004 = vcmp.gt.f32.partialorder %v980, 0.0
  %vm1005 = vcmp.gt.f32.partialorder %v981, 0.0
  %vm1006 = vcmp.gt.f32.partialorder %v982, 0.0
  %vm1007 = vcmp.gt.f32.partialorder %v983, 0.0
  %vm1008 = vcmp.gt.f32.partialorder %v984, 0.0
  %vm1009 = vcmp.gt.f32.partialorder %v985, 0.0
  %vm1010 = vcmp.gt.f32.partialorder %v986, 0.0
  %vm1011 = vcmp.gt.f32.partialorder %v987, 0.0
  %vm1012 = vcmp.gt.f32.partialorder %v988, 0.0
  %vm1013 = vcmp.gt.f32.partialorder %v989, 0.0
  %vm1014 = vcmp.gt.f32.partialorder %v990, 0.0
  %vm1015 = vcmp.gt.f32.partialorder %v991, 0.0
  %vm1016 = vcmp.gt.f32.partialorder %v992, 0.0
  %vm1017 = vcmp.gt.f32.partialorder %v993, 0.0
  %vm1018 = vcmp.gt.f32.partialorder %v994, 0.0
  %vm1019 = vcmp.gt.f32.partialorder %v995, 0.0
  %vm1020 = vcmp.gt.f32.partialorder %v996, 0.0
  %v1021 = vmul.f32 %v973, 0.01
  %v1022 = vmul.f32 %v974, 0.01
  %v1023 = vmul.f32 %v975, 0.01
  %v1024 = vmul.f32 %v976, 0.01
  %v1025 = vmul.f32 %v977, 0.01
  %v1026 = vmul.f32 %v978, 0.01
  %v1027 = vmul.f32 %v979, 0.01
  %v1028 = vmul.f32 %v980, 0.01
  %v1029 = vmul.f32 %v981, 0.01
  %v1030 = vmul.f32 %v982, 0.01
  %v1031 = vmul.f32 %v983, 0.01
  %v1032 = vmul.f32 %v984, 0.01
  %v1033 = vmul.f32 %v985, 0.01
  %v1034 = vmul.f32 %v986, 0.01
  %v1035 = vmul.f32 %v987, 0.01
  %v1036 = vmul.f32 %v988, 0.01
  %v1037 = vmul.f32 %v989, 0.01
  %v1038 = vmul.f32 %v990, 0.01
  %v1039 = vmul.f32 %v991, 0.01
  %v1040 = vmul.f32 %v992, 0.01
  %v1041 = vmul.f32 %v993, 0.01
  %v1042 = vmul.f32 %v994, 0.01
  %v1043 = vmul.f32 %v995, 0.01
  %v1044 = vmul.f32 %v996, 0.01
  %v1045 = vsel %vm997, %v973, %v1021
  %v1046 = vsel %vm998, %v974, %v1022
  %v1047 = vsel %vm999, %v975, %v1023
  %v1048 = vsel %vm1000, %v976, %v1024
  %v1049 = vsel %vm1001, %v977, %v1025
  %v1050 = vsel %vm1002, %v978, %v1026
  %v1051 = vsel %vm1003, %v979, %v1027
  %v1052 = vsel %vm1004, %v980, %v1028
  %v1053 = vsel %vm1005, %v981, %v1029
  %v1054 = vsel %vm1006, %v982, %v1030
  %v1055 = vsel %vm1007, %v983, %v1031
  %v1056 = vsel %vm1008, %v984, %v1032
  %v1057 = vsel %vm1009, %v985, %v1033
  %v1058 = vsel %vm1010, %v986, %v1034
  %v1059 = vsel %vm1011, %v987, %v1035
  %v1060 = vsel %vm1012, %v988, %v1036
  %v1061 = vsel %vm1013, %v989, %v1037
  %v1062 = vsel %vm1014, %v990, %v1038
  %v1063 = vsel %vm1015, %v991, %v1039
  %v1064 = vsel %vm1016, %v992, %v1040
  %v1065 = vsel %vm1017, %v993, %v1041
  %v1066 = vsel %vm1018, %v994, %v1042
  %v1067 = vsel %vm1019, %v995, %v1043
  %v1068 = vsel %vm1020, %v996, %v1044
  %v1069 = vsel %vm327, %v1046, -inf
  %v1070 = vmax.f32 %v1045, %v1069
  %v1071 = vrot.slane %v1070, 4
  %v1072 = vmax.f32 %v1070, %v1071
  %v1073 = vrot.slane %v1072, 2
  %v1074 = vmax.f32 %v1072, %v1073
  %v1075 = vrot.slane %v1074, 1
  %v1076 = vmax.f32 %v1074, %v1075
  %v1077 = vsel %vm327, %v1048, -inf
  %v1078 = vmax.f32 %v1047, %v1077
  %v1079 = vrot.slane %v1078, 4
  %v1080 = vmax.f32 %v1078, %v1079
  %v1081 = vrot.slane %v1080, 2
  %v1082 = vmax.f32 %v1080, %v1081
  %v1083 = vrot.slane %v1082, 1
  %v1084 = vmax.f32 %v1082, %v1083
  %v1085 = vsel %vm327, %v1050, -inf
  %v1086 = vmax.f32 %v1049, %v1085
  %v1087 = vrot.slane %v1086, 4
  %v1088 = vmax.f32 %v1086, %v1087
  %v1089 = vrot.slane %v1088, 2
  %v1090 = vmax.f32 %v1088, %v1089
  %v1091 = vrot.slane %v1090, 1
  %v1092 = vmax.f32 %v1090, %v1091
  %v1093 = vsel %vm327, %v1052, -inf
  %v1094 = vmax.f32 %v1051, %v1093
  %v1095 = vrot.slane %v1094, 4
  %v1096 = vmax.f32 %v1094, %v1095
  %v1097 = vrot.slane %v1096, 2
  %v1098 = vmax.f32 %v1096, %v1097
  %v1099 = vrot.slane %v1098, 1
  %v1100 = vmax.f32 %v1098, %v1099
  %v1101 = vsel %vm327, %v1054, -inf
  %v1102 = vmax.f32 %v1053, %v1101
  %v1103 = vrot.slane %v1102, 4
  %v1104 = vmax.f32 %v1102, %v1103
  %v1105 = vrot.slane %v1104, 2
  %v1106 = vmax.f32 %v1104, %v1105
  %v1107 = vrot.slane %v1106, 1
  %v1108 = vmax.f32 %v1106, %v1107
  %v1109 = vsel %vm327, %v1056, -inf
  %v1110 = vmax.f32 %v1055, %v1109
  %v1111 = vrot.slane %v1110, 4
  %v1112 = vmax.f32 %v1110, %v1111
  %v1113 = vrot.slane %v1112, 2
  %v1114 = vmax.f32 %v1112, %v1113
  %v1115 = vrot.slane %v1114, 1
  %v1116 = vmax.f32 %v1114, %v1115
  %v1117 = vsel %vm327, %v1058, -inf
  %v1118 = vmax.f32 %v1057, %v1117
  %v1119 = vrot.slane %v1118, 4
  %v1120 = vmax.f32 %v1118, %v1119
  %v1121 = vrot.slane %v1120, 2
  %v1122 = vmax.f32 %v1120, %v1121
  %v1123 = vrot.slane %v1122, 1
  %v1124 = vmax.f32 %v1122, %v1123
  %v1125 = vsel %vm327, %v1060, -inf
  %v1126 = vmax.f32 %v1059, %v1125
  %v1127 = vrot.slane %v1126, 4
  %v1128 = vmax.f32 %v1126, %v1127
  %v1129 = vrot.slane %v1128, 2
  %v1130 = vmax.f32 %v1128, %v1129
  %v1131 = vrot.slane %v1130, 1
  %v1132 = vmax.f32 %v1130, %v1131
  %v1133 = vsel %vm327, %v1062, -inf
  %v1134 = vmax.f32 %v1061, %v1133
  %v1135 = vrot.slane %v1134, 4
  %v1136 = vmax.f32 %v1134, %v1135
  %v1137 = vrot.slane %v1136, 2
  %v1138 = vmax.f32 %v1136, %v1137
  %v1139 = vrot.slane %v1138, 1
  %v1140 = vmax.f32 %v1138, %v1139
  %v1141 = vsel %vm327, %v1064, -inf
  %v1142 = vmax.f32 %v1063, %v1141
  %v1143 = vrot.slane %v1142, 4
  %v1144 = vmax.f32 %v1142, %v1143
  %v1145 = vrot.slane %v1144, 2
  %v1146 = vmax.f32 %v1144, %v1145
  %v1147 = vrot.slane %v1146, 1
  %v1148 = vmax.f32 %v1146, %v1147
  %v1149 = vsel %vm327, %v1066, -inf
  %v1150 = vmax.f32 %v1065, %v1149
  %v1151 = vrot.slane %v1150, 4
  %v1152 = vmax.f32 %v1150, %v1151
  %v1153 = vrot.slane %v1152, 2
  %v1154 = vmax.f32 %v1152, %v1153
  %v1155 = vrot.slane %v1154, 1
  %v1156 = vmax.f32 %v1154, %v1155
  %v1157 = vsel %vm327, %v1068, -inf
  %v1158 = vmax.f32 %v1067, %v1157
  %v1159 = vrot.slane %v1158, 4
  %v1160 = vmax.f32 %v1158, %v1159
  %v1161 = vrot.slane %v1160, 2
  %v1162 = vmax.f32 %v1160, %v1161
  %v1163 = vrot.slane %v1162, 1
  %v1164 = vmax.f32 %v1162, %v1163
  %v1165 = vsub.f32 %v1045, %v1076
  %v1166 = vsub.f32 %v1046, %v1076
  %v1167 = vsub.f32 %v1047, %v1084
  %v1168 = vsub.f32 %v1048, %v1084
  %v1169 = vsub.f32 %v1049, %v1092
  %v1170 = vsub.f32 %v1050, %v1092
  %v1171 = vsub.f32 %v1051, %v1100
  %v1172 = vsub.f32 %v1052, %v1100
  %v1173 = vsub.f32 %v1053, %v1108
  %v1174 = vsub.f32 %v1054, %v1108
  %v1175 = vsub.f32 %v1055, %v1116
  %v1176 = vsub.f32 %v1056, %v1116
  %v1177 = vsub.f32 %v1057, %v1124
  %v1178 = vsub.f32 %v1058, %v1124
  %v1179 = vsub.f32 %v1059, %v1132
  %v1180 = vsub.f32 %v1060, %v1132
  %v1181 = vsub.f32 %v1061, %v1140
  %v1182 = vsub.f32 %v1062, %v1140
  %v1183 = vsub.f32 %v1063, %v1148
  %v1184 = vsub.f32 %v1064, %v1148
  %v1185 = vsub.f32 %v1065, %v1156
  %v1186 = vsub.f32 %v1066, %v1156
  %v1187 = vsub.f32 %v1067, %v1164
  %v1188 = vsub.f32 %v1068, %v1164
  %v1189 = vmul.f32 %v1165, 1.442695
  %v1190 = vpow.pop %v1189
  %v1191 = vmul.f32 %v1166, 1.442695
  %v1192 = vpow.pop %v1191
  %v1193 = vmul.f32 %v1167, 1.442695
  %v1194 = vpow.pop %v1193
  %v1195 = vmul.f32 %v1168, 1.442695
  %v1196 = vpow.pop %v1195
  %v1197 = vmul.f32 %v1169, 1.442695
  %v1198 = vpow.pop %v1197
  %v1199 = vmul.f32 %v1170, 1.442695
  %v1200 = vpow.pop %v1199
  %v1201 = vmul.f32 %v1171, 1.442695
  %v1202 = vpow.pop %v1201
  %v1203 = vmul.f32 %v1172, 1.442695
  %v1204 = vpow.pop %v1203
  %v1205 = vmul.f32 %v1173, 1.442695
  %v1206 = vpow.pop %v1205
  %v1207 = vmul.f32 %v1174, 1.442695
  %v1208 = vpow.pop %v1207
  %v1209 = vmul.f32 %v1175, 1.442695
  %v1210 = vpow.pop %v1209
  %v1211 = vmul.f32 %v1176, 1.442695
  %v1212 = vpow.pop %v1211
  %v1213 = vmul.f32 %v1177, 1.442695
  %v1214 = vpow.pop %v1213
  %v1215 = vmul.f32 %v1178, 1.442695
  %v1216 = vpow.pop %v1215
  %v1217 = vmul.f32 %v1179, 1.442695
  %v1218 = vpow.pop %v1217
  %v1219 = vmul.f32 %v1180, 1.442695
  %v1220 = vpow.pop %v1219
  %v1221 = vmul.f32 %v1181, 1.442695
  %v1222 = vpow.pop %v1221
  %v1223 = vmul.f32 %v1182, 1.442695
  %v1224 = vpow.pop %v1223
  %v1225 = vmul.f32 %v1183, 1.442695
  %v1226 = vpow.pop %v1225
  %v1227 = vmul.f32 %v1184, 1.442695
  %v1228 = vpow.pop %v1227
  %v1229 = vmul.f32 %v1185, 1.442695
  %v1230 = vpow.pop %v1229
  %v1231 = vmul.f32 %v1186, 1.442695
  %v1232 = vpow.pop %v1231
  %v1233 = vmul.f32 %v1187, 1.442695
  %v1234 = vpow.pop %v1233
  %v1235 = vmul.f32 %v1188, 1.442695
  %v1236 = vpow.pop %v1235
  %v1237 = vsel %vm327, %v1192, 0.0
  %v1238 = vadd.f32 %v1190, %v1237
  %v1239 = vrot.slane %v1238, 4
  %v1240 = vadd.f32 %v1238, %v1239
  %v1241 = vrot.slane %v1240, 2
  %v1242 = vadd.f32 %v1240, %v1241
  %v1243 = vrot.slane %v1242, 1
  %v1244 = vadd.f32 %v1242, %v1243
  %v1245 = vsel %vm327, %v1196, 0.0
  %v1246 = vadd.f32 %v1194, %v1245
  %v1247 = vrot.slane %v1246, 4
  %v1248 = vadd.f32 %v1246, %v1247
  %v1249 = vrot.slane %v1248, 2
  %v1250 = vadd.f32 %v1248, %v1249
  %v1251 = vrot.slane %v1250, 1
  %v1252 = vadd.f32 %v1250, %v1251
  %v1253 = vsel %vm327, %v1200, 0.0
  %v1254 = vadd.f32 %v1198, %v1253
  %v1255 = vrot.slane %v1254, 4
  %v1256 = vadd.f32 %v1254, %v1255
  %v1257 = vrot.slane %v1256, 2
  %v1258 = vadd.f32 %v1256, %v1257
  %v1259 = vrot.slane %v1258, 1
  %v1260 = vadd.f32 %v1258, %v1259
  %v1261 = vsel %vm327, %v1204, 0.0
  %v1262 = vadd.f32 %v1202, %v1261
  %v1263 = vrot.slane %v1262, 4
  %v1264 = vadd.f32 %v1262, %v1263
  %v1265 = vrot.slane %v1264, 2
  %v1266 = vadd.f32 %v1264, %v1265
  %v1267 = vrot.slane %v1266, 1
  %v1268 = vadd.f32 %v1266, %v1267
  %v1269 = vsel %vm327, %v1208, 0.0
  %v1270 = vadd.f32 %v1206, %v1269
  %v1271 = vrot.slane %v1270, 4
  %v1272 = vadd.f32 %v1270, %v1271
  %v1273 = vrot.slane %v1272, 2
  %v1274 = vadd.f32 %v1272, %v1273
  %v1275 = vrot.slane %v1274, 1
  %v1276 = vadd.f32 %v1274, %v1275
  %v1277 = vsel %vm327, %v1212, 0.0
  %v1278 = vadd.f32 %v1210, %v1277
  %v1279 = vrot.slane %v1278, 4
  %v1280 = vadd.f32 %v1278, %v1279
  %v1281 = vrot.slane %v1280, 2
  %v1282 = vadd.f32 %v1280, %v1281
  %v1283 = vrot.slane %v1282, 1
  %v1284 = vadd.f32 %v1282, %v1283
  %v1285 = vsel %vm327, %v1216, 0.0
  %v1286 = vadd.f32 %v1214, %v1285
  %v1287 = vrot.slane %v1286, 4
  %v1288 = vadd.f32 %v1286, %v1287
  %v1289 = vrot.slane %v1288, 2
  %v1290 = vadd.f32 %v1288, %v1289
  %v1291 = vrot.slane %v1290, 1
  %v1292 = vadd.f32 %v1290, %v1291
  %v1293 = vsel %vm327, %v1220, 0.0
  %v1294 = vadd.f32 %v1218, %v1293
  %v1295 = vrot.slane %v1294, 4
  %v1296 = vadd.f32 %v1294, %v1295
  %v1297 = vrot.slane %v1296, 2
  %v1298 = vadd.f32 %v1296, %v1297
  %v1299 = vrot.slane %v1298, 1
  %v1300 = vadd.f32 %v1298, %v1299
  %v1301 = vsel %vm327, %v1224, 0.0
  %v1302 = vadd.f32 %v1222, %v1301
  %v1303 = vrot.slane %v1302, 4
  %v1304 = vadd.f32 %v1302, %v1303
  %v1305 = vrot.slane %v1304, 2
  %v1306 = vadd.f32 %v1304, %v1305
  %v1307 = vrot.slane %v1306, 1
  %v1308 = vadd.f32 %v1306, %v1307
  %v1309 = vsel %vm327, %v1228, 0.0
  %v1310 = vadd.f32 %v1226, %v1309
  %v1311 = vrot.slane %v1310, 4
  %v1312 = vadd.f32 %v1310, %v1311
  %v1313 = vrot.slane %v1312, 2
  %v1314 = vadd.f32 %v1312, %v1313
  %v1315 = vrot.slane %v1314, 1
  %v1316 = vadd.f32 %v1314, %v1315
  %v1317 = vsel %vm327, %v1232, 0.0
  %v1318 = vadd.f32 %v1230, %v1317
  %v1319 = vrot.slane %v1318, 4
  %v1320 = vadd.f32 %v1318, %v1319
  %v1321 = vrot.slane %v1320, 2
  %v1322 = vadd.f32 %v1320, %v1321
  %v1323 = vrot.slane %v1322, 1
  %v1324 = vadd.f32 %v1322, %v1323
  %v1325 = vsel %vm327, %v1236, 0.0
  %v1326 = vadd.f32 %v1234, %v1325
  %v1327 = vrot.slane %v1326, 4
  %v1328 = vadd.f32 %v1326, %v1327
  %v1329 = vrot.slane %v1328, 2
  %v1330 = vadd.f32 %v1328, %v1329
  %v1331 = vrot.slane %v1330, 1
  %v1332 = vadd.f32 %v1330, %v1331
  %v1333 = vrcp.pop %v1244
  %v1334 = vrcp.pop %v1252
  %v1335 = vrcp.pop %v1260
  %v1336 = vrcp.pop %v1268
  %v1337 = vrcp.pop %v1276
  %v1338 = vrcp.pop %v1284
  %v1339 = vrcp.pop %v1292
  %v1340 = vrcp.pop %v1300
  %v1341 = vrcp.pop %v1308
  %v1342 = vrcp.pop %v1316
  %v1343 = vrcp.pop %v1324
  %v1344 = vrcp.pop %v1332
  %v1345 = vmul.f32 %v1190, %v1333
  %v1346 = vmul.f32 %v1192, %v1333
  %v1347 = vmul.f32 %v1194, %v1334
  %v1348 = vmul.f32 %v1196, %v1334
  %v1349 = vmul.f32 %v1198, %v1335
  %v1350 = vmul.f32 %v1200, %v1335
  %v1351 = vmul.f32 %v1202, %v1336
  %v1352 = vmul.f32 %v1204, %v1336
  %v1353 = vmul.f32 %v1206, %v1337
  %v1354 = vmul.f32 %v1208, %v1337
  %v1355 = vmul.f32 %v1210, %v1338
  %v1356 = vmul.f32 %v1212, %v1338
  %v1357 = vmul.f32 %v1214, %v1339
  %v1358 = vmul.f32 %v1216, %v1339
  %v1359 = vmul.f32 %v1218, %v1340
  %v1360 = vmul.f32 %v1220, %v1340
  %v1361 = vmul.f32 %v1222, %v1341
  %v1362 = vmul.f32 %v1224, %v1341
  %v1363 = vmul.f32 %v1226, %v1342
  %v1364 = vmul.f32 %v1228, %v1342
  %v1365 = vmul.f32 %v1230, %v1343
  %v1366 = vmul.f32 %v1232, %v1343
  %v1367 = vmul.f32 %v1234, %v1344
  %v1368 = vmul.f32 %v1236, %v1344
  %v1371 = vcombine.high %v1345, %v1345
  %v1373 = vunpack.c.l.s4 1966171168
  %v1374 = vunpack.c.0.s8 %v1373
  %v1375 = vlaneseq
  %v1376 = vshrl.u32 %v1375, 7
  %v1377 = vsub.s32 %v1374, %v1376
  %v1378 = vrot.slane %v1345, %v1377
  %v1380 = vunpack.c.l.s4 1966171168
  %v1381 = vunpack.c.0.s8 %v1380
  %v1382 = vlaneseq
  %v1383 = vshrl.u32 %v1382, 7
  %v1384 = vsub.s32 %v1381, %v1383
  %v1385 = vrot.slane %v1371, %v1384
  %v1386 = vcombine.high %v1378, %v1378
  %v1387 = vcombine.high %v1385, %v1385
  %v1389 = vunpack.c.l.s4 1966171168
  %v1390 = vunpack.c.0.s8 %v1389
  %v1391 = vlaneseq
  %v1392 = vshrl.u32 %v1391, 7
  %v1393 = vsub.s32 %v1390, %v1392
  %v1394 = vrot.slane %v1378, %v1393
  %v1396 = vunpack.c.l.s4 1966171168
  %v1397 = vunpack.c.0.s8 %v1396
  %v1398 = vlaneseq
  %v1399 = vshrl.u32 %v1398, 7
  %v1400 = vsub.s32 %v1397, %v1399
  %v1401 = vrot.slane %v1385, %v1400
  %v1403 = vunpack.c.l.s4 1966171168
  %v1404 = vunpack.c.0.s8 %v1403
  %v1405 = vlaneseq
  %v1406 = vshrl.u32 %v1405, 7
  %v1407 = vsub.s32 %v1404, %v1406
  %v1408 = vrot.slane %v1386, %v1407
  %v1410 = vunpack.c.l.s4 1966171168
  %v1411 = vunpack.c.0.s8 %v1410
  %v1412 = vlaneseq
  %v1413 = vshrl.u32 %v1412, 7
  %v1414 = vsub.s32 %v1411, %v1413
  %v1415 = vrot.slane %v1387, %v1414
  %v1416 = vcombine.high %v1394, %v1394
  %v1417 = vcombine.high %v1401, %v1401
  %v1418 = vcombine.high %v1408, %v1408
  %v1419 = vcombine.high %v1415, %v1415
  %v1421 = vunpack.c.l.s4 1966171168
  %v1422 = vunpack.c.0.s8 %v1421
  %v1423 = vlaneseq
  %v1424 = vshrl.u32 %v1423, 7
  %v1425 = vsub.s32 %v1422, %v1424
  %v1426 = vrot.slane %v1346, %v1425
  %v1427 = vcombine.high %v1426, %v1426
  %v1429 = vunpack.c.l.s4 1966171168
  %v1430 = vunpack.c.0.s8 %v1429
  %v1431 = vlaneseq
  %v1432 = vshrl.u32 %v1431, 7
  %v1433 = vsub.s32 %v1430, %v1432
  %v1434 = vrot.slane %v1426, %v1433
  %v1436 = vunpack.c.l.s4 1966171168
  %v1437 = vunpack.c.0.s8 %v1436
  %v1438 = vlaneseq
  %v1439 = vshrl.u32 %v1438, 7
  %v1440 = vsub.s32 %v1437, %v1439
  %v1441 = vrot.slane %v1427, %v1440
  %v1442 = vcombine.high %v1434, %v1434
  %v1443 = vcombine.high %v1441, %v1441
  %v1444 = vlaneseq
  %v1445 = vshrl.u32 %v1444, 7
  %v1446 = vsub.s32 0, %v1445
  %v1447 = vrot.slane %v1394, %v1446
  %v1448 = vlaneseq
  %v1449 = vshrl.u32 %v1448, 7
  %v1450 = vsub.s32 0, %v1449
  %v1451 = vrot.slane %v1408, %v1450
  %v1452 = vlaneseq
  %v1453 = vshrl.u32 %v1452, 7
  %v1454 = vsub.s32 0, %v1453
  %v1455 = vrot.slane %v1416, %v1454
  %v1456 = vlaneseq
  %v1457 = vshrl.u32 %v1456, 7
  %v1458 = vsub.s32 0, %v1457
  %v1459 = vrot.slane %v1418, %v1458
  %v1460 = vlaneseq
  %v1461 = vshrl.u32 %v1460, 7
  %v1462 = vsub.s32 0, %v1461
  %v1463 = vrot.slane %v1401, %v1462
  %v1464 = vlaneseq
  %v1465 = vshrl.u32 %v1464, 7
  %v1466 = vsub.s32 0, %v1465
  %v1467 = vrot.slane %v1415, %v1466
  %v1468 = vlaneseq
  %v1469 = vshrl.u32 %v1468, 7
  %v1470 = vsub.s32 0, %v1469
  %v1471 = vrot.slane %v1417, %v1470
  %v1472 = vlaneseq
  %v1473 = vshrl.u32 %v1472, 7
  %v1474 = vsub.s32 0, %v1473
  %v1475 = vrot.slane %v1419, %v1474
  %v1476 = vlaneseq
  %v1477 = vshrl.u32 %v1476, 7
  %v1478 = vsub.s32 0, %v1477
  %v1479 = vrot.slane %v1434, %v1478
  %v1480 = vlaneseq
  %v1481 = vshrl.u32 %v1480, 7
  %v1482 = vsub.s32 0, %v1481
  %v1483 = vrot.slane %v1441, %v1482
  %v1484 = vlaneseq
  %v1485 = vshrl.u32 %v1484, 7
  %v1486 = vsub.s32 0, %v1485
  %v1487 = vrot.slane %v1442, %v1486
  %v1488 = vlaneseq
  %v1489 = vshrl.u32 %v1488, 7
  %v1490 = vsub.s32 0, %v1489
  %v1491 = vrot.slane %v1443, %v1490
  %v1504 = vmul.f32 %v1447, %v728
  %v1505 = vmul.f32 %v1447, %v731
  %v1506 = vmul.f32 %v1451, %v728
  %v1507 = vmul.f32 %v1451, %v731
  %v1508 = vmul.f32 %v1455, %v728
  %v1509 = vmul.f32 %v1455, %v731
  %v1510 = vmul.f32 %v1459, %v728
  %v1511 = vmul.f32 %v1459, %v731
  %v1512 = vmul.f32 %v1463, %v728
  %v1513 = vmul.f32 %v1463, %v731
  %v1514 = vmul.f32 %v1467, %v728
  %v1515 = vmul.f32 %v1467, %v731
  %v1516 = vmul.f32 %v1471, %v728
  %v1517 = vmul.f32 %v1471, %v731
  %v1518 = vmul.f32 %v1475, %v728
  %v1519 = vmul.f32 %v1475, %v731
  %v1520 = vmul.f32 %v1479, %v728
  %v1521 = vmul.f32 %v1479, %v731
  %v1522 = vmul.f32 %v1483, %v728
  %v1523 = vmul.f32 %v1483, %v731
  %v1524 = vmul.f32 %v1487, %v728
  %v1525 = vmul.f32 %v1487, %v731
  %v1526 = vmul.f32 %v1491, %v728
  %v1527 = vmul.f32 %v1491, %v731
  %v1530 = vcombine.high %v1347, %v1347
  %v1532 = vunpack.c.l.s4 1966171168
  %v1533 = vunpack.c.0.s8 %v1532
  %v1534 = vlaneseq
  %v1535 = vshrl.u32 %v1534, 7
  %v1536 = vsub.s32 %v1533, %v1535
  %v1537 = vrot.slane %v1347, %v1536
  %v1539 = vunpack.c.l.s4 1966171168
  %v1540 = vunpack.c.0.s8 %v1539
  %v1541 = vlaneseq
  %v1542 = vshrl.u32 %v1541, 7
  %v1543 = vsub.s32 %v1540, %v1542
  %v1544 = vrot.slane %v1530, %v1543
  %v1545 = vcombine.high %v1537, %v1537
  %v1546 = vcombine.high %v1544, %v1544
  %v1548 = vunpack.c.l.s4 1966171168
  %v1549 = vunpack.c.0.s8 %v1548
  %v1550 = vlaneseq
  %v1551 = vshrl.u32 %v1550, 7
  %v1552 = vsub.s32 %v1549, %v1551
  %v1553 = vrot.slane %v1537, %v1552
  %v1555 = vunpack.c.l.s4 1966171168
  %v1556 = vunpack.c.0.s8 %v1555
  %v1557 = vlaneseq
  %v1558 = vshrl.u32 %v1557, 7
  %v1559 = vsub.s32 %v1556, %v1558
  %v1560 = vrot.slane %v1544, %v1559
  %v1562 = vunpack.c.l.s4 1966171168
  %v1563 = vunpack.c.0.s8 %v1562
  %v1564 = vlaneseq
  %v1565 = vshrl.u32 %v1564, 7
  %v1566 = vsub.s32 %v1563, %v1565
  %v1567 = vrot.slane %v1545, %v1566
  %v1569 = vunpack.c.l.s4 1966171168
  %v1570 = vunpack.c.0.s8 %v1569
  %v1571 = vlaneseq
  %v1572 = vshrl.u32 %v1571, 7
  %v1573 = vsub.s32 %v1570, %v1572
  %v1574 = vrot.slane %v1546, %v1573
  %v1575 = vcombine.high %v1553, %v1553
  %v1576 = vcombine.high %v1560, %v1560
  %v1577 = vcombine.high %v1567, %v1567
  %v1578 = vcombine.high %v1574, %v1574
  %v1580 = vunpack.c.l.s4 1966171168
  %v1581 = vunpack.c.0.s8 %v1580
  %v1582 = vlaneseq
  %v1583 = vshrl.u32 %v1582, 7
  %v1584 = vsub.s32 %v1581, %v1583
  %v1585 = vrot.slane %v1348, %v1584
  %v1586 = vcombine.high %v1585, %v1585
  %v1588 = vunpack.c.l.s4 1966171168
  %v1589 = vunpack.c.0.s8 %v1588
  %v1590 = vlaneseq
  %v1591 = vshrl.u32 %v1590, 7
  %v1592 = vsub.s32 %v1589, %v1591
  %v1593 = vrot.slane %v1585, %v1592
  %v1595 = vunpack.c.l.s4 1966171168
  %v1596 = vunpack.c.0.s8 %v1595
  %v1597 = vlaneseq
  %v1598 = vshrl.u32 %v1597, 7
  %v1599 = vsub.s32 %v1596, %v1598
  %v1600 = vrot.slane %v1586, %v1599
  %v1601 = vcombine.high %v1593, %v1593
  %v1602 = vcombine.high %v1600, %v1600
  %v1603 = vlaneseq
  %v1604 = vshrl.u32 %v1603, 7
  %v1605 = vsub.s32 0, %v1604
  %v1606 = vrot.slane %v1553, %v1605
  %v1607 = vlaneseq
  %v1608 = vshrl.u32 %v1607, 7
  %v1609 = vsub.s32 0, %v1608
  %v1610 = vrot.slane %v1567, %v1609
  %v1611 = vlaneseq
  %v1612 = vshrl.u32 %v1611, 7
  %v1613 = vsub.s32 0, %v1612
  %v1614 = vrot.slane %v1575, %v1613
  %v1615 = vlaneseq
  %v1616 = vshrl.u32 %v1615, 7
  %v1617 = vsub.s32 0, %v1616
  %v1618 = vrot.slane %v1577, %v1617
  %v1619 = vlaneseq
  %v1620 = vshrl.u32 %v1619, 7
  %v1621 = vsub.s32 0, %v1620
  %v1622 = vrot.slane %v1560, %v1621
  %v1623 = vlaneseq
  %v1624 = vshrl.u32 %v1623, 7
  %v1625 = vsub.s32 0, %v1624
  %v1626 = vrot.slane %v1574, %v1625
  %v1627 = vlaneseq
  %v1628 = vshrl.u32 %v1627, 7
  %v1629 = vsub.s32 0, %v1628
  %v1630 = vrot.slane %v1576, %v1629
  %v1631 = vlaneseq
  %v1632 = vshrl.u32 %v1631, 7
  %v1633 = vsub.s32 0, %v1632
  %v1634 = vrot.slane %v1578, %v1633
  %v1635 = vlaneseq
  %v1636 = vshrl.u32 %v1635, 7
  %v1637 = vsub.s32 0, %v1636
  %v1638 = vrot.slane %v1593, %v1637
  %v1639 = vlaneseq
  %v1640 = vshrl.u32 %v1639, 7
  %v1641 = vsub.s32 0, %v1640
  %v1642 = vrot.slane %v1600, %v1641
  %v1643 = vlaneseq
  %v1644 = vshrl.u32 %v1643, 7
  %v1645 = vsub.s32 0, %v1644
  %v1646 = vrot.slane %v1601, %v1645
  %v1647 = vlaneseq
  %v1648 = vshrl.u32 %v1647, 7
  %v1649 = vsub.s32 0, %v1648
  %v1650 = vrot.slane %v1602, %v1649
  %v1663 = vmul.f32 %v1606, %v736
  %v1664 = vmul.f32 %v1606, %v739
  %v1665 = vmul.f32 %v1610, %v736
  %v1666 = vmul.f32 %v1610, %v739
  %v1667 = vmul.f32 %v1614, %v736
  %v1668 = vmul.f32 %v1614, %v739
  %v1669 = vmul.f32 %v1618, %v736
  %v1670 = vmul.f32 %v1618, %v739
  %v1671 = vmul.f32 %v1622, %v736
  %v1672 = vmul.f32 %v1622, %v739
  %v1673 = vmul.f32 %v1626, %v736
  %v1674 = vmul.f32 %v1626, %v739
  %v1675 = vmul.f32 %v1630, %v736
  %v1676 = vmul.f32 %v1630, %v739
  %v1677 = vmul.f32 %v1634, %v736
  %v1678 = vmul.f32 %v1634, %v739
  %v1679 = vmul.f32 %v1638, %v736
  %v1680 = vmul.f32 %v1638, %v739
  %v1681 = vmul.f32 %v1642, %v736
  %v1682 = vmul.f32 %v1642, %v739
  %v1683 = vmul.f32 %v1646, %v736
  %v1684 = vmul.f32 %v1646, %v739
  %v1685 = vmul.f32 %v1650, %v736
  %v1686 = vmul.f32 %v1650, %v739
  %v1687 = vadd.f32 %v1504, %v1663
  %v1688 = vadd.f32 %v1505, %v1664
  %v1689 = vadd.f32 %v1506, %v1665
  %v1690 = vadd.f32 %v1507, %v1666
  %v1691 = vadd.f32 %v1508, %v1667
  %v1692 = vadd.f32 %v1509, %v1668
  %v1693 = vadd.f32 %v1510, %v1669
  %v1694 = vadd.f32 %v1511, %v1670
  %v1695 = vadd.f32 %v1512, %v1671
  %v1696 = vadd.f32 %v1513, %v1672
  %v1697 = vadd.f32 %v1514, %v1673
  %v1698 = vadd.f32 %v1515, %v1674
  %v1699 = vadd.f32 %v1516, %v1675
  %v1700 = vadd.f32 %v1517, %v1676
  %v1701 = vadd.f32 %v1518, %v1677
  %v1702 = vadd.f32 %v1519, %v1678
  %v1703 = vadd.f32 %v1520, %v1679
  %v1704 = vadd.f32 %v1521, %v1680
  %v1705 = vadd.f32 %v1522, %v1681
  %v1706 = vadd.f32 %v1523, %v1682
  %v1707 = vadd.f32 %v1524, %v1683
  %v1708 = vadd.f32 %v1525, %v1684
  %v1709 = vadd.f32 %v1526, %v1685
  %v1710 = vadd.f32 %v1527, %v1686
  %v1713 = vcombine.high %v1349, %v1349
  %v1715 = vunpack.c.l.s4 1966171168
  %v1716 = vunpack.c.0.s8 %v1715
  %v1717 = vlaneseq
  %v1718 = vshrl.u32 %v1717, 7
  %v1719 = vsub.s32 %v1716, %v1718
  %v1720 = vrot.slane %v1349, %v1719
  %v1722 = vunpack.c.l.s4 1966171168
  %v1723 = vunpack.c.0.s8 %v1722
  %v1724 = vlaneseq
  %v1725 = vshrl.u32 %v1724, 7
  %v1726 = vsub.s32 %v1723, %v1725
  %v1727 = vrot.slane %v1713, %v1726
  %v1728 = vcombine.high %v1720, %v1720
  %v1729 = vcombine.high %v1727, %v1727
  %v1731 = vunpack.c.l.s4 1966171168
  %v1732 = vunpack.c.0.s8 %v1731
  %v1733 = vlaneseq
  %v1734 = vshrl.u32 %v1733, 7
  %v1735 = vsub.s32 %v1732, %v1734
  %v1736 = vrot.slane %v1720, %v1735
  %v1738 = vunpack.c.l.s4 1966171168
  %v1739 = vunpack.c.0.s8 %v1738
  %v1740 = vlaneseq
  %v1741 = vshrl.u32 %v1740, 7
  %v1742 = vsub.s32 %v1739, %v1741
  %v1743 = vrot.slane %v1727, %v1742
  %v1745 = vunpack.c.l.s4 1966171168
  %v1746 = vunpack.c.0.s8 %v1745
  %v1747 = vlaneseq
  %v1748 = vshrl.u32 %v1747, 7
  %v1749 = vsub.s32 %v1746, %v1748
  %v1750 = vrot.slane %v1728, %v1749
  %v1752 = vunpack.c.l.s4 1966171168
  %v1753 = vunpack.c.0.s8 %v1752
  %v1754 = vlaneseq
  %v1755 = vshrl.u32 %v1754, 7
  %v1756 = vsub.s32 %v1753, %v1755
  %v1757 = vrot.slane %v1729, %v1756
  %v1758 = vcombine.high %v1736, %v1736
  %v1759 = vcombine.high %v1743, %v1743
  %v1760 = vcombine.high %v1750, %v1750
  %v1761 = vcombine.high %v1757, %v1757
  %v1763 = vunpack.c.l.s4 1966171168
  %v1764 = vunpack.c.0.s8 %v1763
  %v1765 = vlaneseq
  %v1766 = vshrl.u32 %v1765, 7
  %v1767 = vsub.s32 %v1764, %v1766
  %v1768 = vrot.slane %v1350, %v1767
  %v1769 = vcombine.high %v1768, %v1768
  %v1771 = vunpack.c.l.s4 1966171168
  %v1772 = vunpack.c.0.s8 %v1771
  %v1773 = vlaneseq
  %v1774 = vshrl.u32 %v1773, 7
  %v1775 = vsub.s32 %v1772, %v1774
  %v1776 = vrot.slane %v1768, %v1775
  %v1778 = vunpack.c.l.s4 1966171168
  %v1779 = vunpack.c.0.s8 %v1778
  %v1780 = vlaneseq
  %v1781 = vshrl.u32 %v1780, 7
  %v1782 = vsub.s32 %v1779, %v1781
  %v1783 = vrot.slane %v1769, %v1782
  %v1784 = vcombine.high %v1776, %v1776
  %v1785 = vcombine.high %v1783, %v1783
  %v1786 = vlaneseq
  %v1787 = vshrl.u32 %v1786, 7
  %v1788 = vsub.s32 0, %v1787
  %v1789 = vrot.slane %v1736, %v1788
  %v1790 = vlaneseq
  %v1791 = vshrl.u32 %v1790, 7
  %v1792 = vsub.s32 0, %v1791
  %v1793 = vrot.slane %v1750, %v1792
  %v1794 = vlaneseq
  %v1795 = vshrl.u32 %v1794, 7
  %v1796 = vsub.s32 0, %v1795
  %v1797 = vrot.slane %v1758, %v1796
  %v1798 = vlaneseq
  %v1799 = vshrl.u32 %v1798, 7
  %v1800 = vsub.s32 0, %v1799
  %v1801 = vrot.slane %v1760, %v1800
  %v1802 = vlaneseq
  %v1803 = vshrl.u32 %v1802, 7
  %v1804 = vsub.s32 0, %v1803
  %v1805 = vrot.slane %v1743, %v1804
  %v1806 = vlaneseq
  %v1807 = vshrl.u32 %v1806, 7
  %v1808 = vsub.s32 0, %v1807
  %v1809 = vrot.slane %v1757, %v1808
  %v1810 = vlaneseq
  %v1811 = vshrl.u32 %v1810, 7
  %v1812 = vsub.s32 0, %v1811
  %v1813 = vrot.slane %v1759, %v1812
  %v1814 = vlaneseq
  %v1815 = vshrl.u32 %v1814, 7
  %v1816 = vsub.s32 0, %v1815
  %v1817 = vrot.slane %v1761, %v1816
  %v1818 = vlaneseq
  %v1819 = vshrl.u32 %v1818, 7
  %v1820 = vsub.s32 0, %v1819
  %v1821 = vrot.slane %v1776, %v1820
  %v1822 = vlaneseq
  %v1823 = vshrl.u32 %v1822, 7
  %v1824 = vsub.s32 0, %v1823
  %v1825 = vrot.slane %v1783, %v1824
  %v1826 = vlaneseq
  %v1827 = vshrl.u32 %v1826, 7
  %v1828 = vsub.s32 0, %v1827
  %v1829 = vrot.slane %v1784, %v1828
  %v1830 = vlaneseq
  %v1831 = vshrl.u32 %v1830, 7
  %v1832 = vsub.s32 0, %v1831
  %v1833 = vrot.slane %v1785, %v1832
  %v1846 = vmul.f32 %v1789, %v744
  %v1847 = vmul.f32 %v1789, %v747
  %v1848 = vmul.f32 %v1793, %v744
  %v1849 = vmul.f32 %v1793, %v747
  %v1850 = vmul.f32 %v1797, %v744
  %v1851 = vmul.f32 %v1797, %v747
  %v1852 = vmul.f32 %v1801, %v744
  %v1853 = vmul.f32 %v1801, %v747
  %v1854 = vmul.f32 %v1805, %v744
  %v1855 = vmul.f32 %v1805, %v747
  %v1856 = vmul.f32 %v1809, %v744
  %v1857 = vmul.f32 %v1809, %v747
  %v1858 = vmul.f32 %v1813, %v744
  %v1859 = vmul.f32 %v1813, %v747
  %v1860 = vmul.f32 %v1817, %v744
  %v1861 = vmul.f32 %v1817, %v747
  %v1862 = vmul.f32 %v1821, %v744
  %v1863 = vmul.f32 %v1821, %v747
  %v1864 = vmul.f32 %v1825, %v744
  %v1865 = vmul.f32 %v1825, %v747
  %v1866 = vmul.f32 %v1829, %v744
  %v1867 = vmul.f32 %v1829, %v747
  %v1868 = vmul.f32 %v1833, %v744
  %v1869 = vmul.f32 %v1833, %v747
  %v1870 = vadd.f32 %v1687, %v1846
  %v1871 = vadd.f32 %v1688, %v1847
  %v1872 = vadd.f32 %v1689, %v1848
  %v1873 = vadd.f32 %v1690, %v1849
  %v1874 = vadd.f32 %v1691, %v1850
  %v1875 = vadd.f32 %v1692, %v1851
  %v1876 = vadd.f32 %v1693, %v1852
  %v1877 = vadd.f32 %v1694, %v1853
  %v1878 = vadd.f32 %v1695, %v1854
  %v1879 = vadd.f32 %v1696, %v1855
  %v1880 = vadd.f32 %v1697, %v1856
  %v1881 = vadd.f32 %v1698, %v1857
  %v1882 = vadd.f32 %v1699, %v1858
  %v1883 = vadd.f32 %v1700, %v1859
  %v1884 = vadd.f32 %v1701, %v1860
  %v1885 = vadd.f32 %v1702, %v1861
  %v1886 = vadd.f32 %v1703, %v1862
  %v1887 = vadd.f32 %v1704, %v1863
  %v1888 = vadd.f32 %v1705, %v1864
  %v1889 = vadd.f32 %v1706, %v1865
  %v1890 = vadd.f32 %v1707, %v1866
  %v1891 = vadd.f32 %v1708, %v1867
  %v1892 = vadd.f32 %v1709, %v1868
  %v1893 = vadd.f32 %v1710, %v1869
  %v1896 = vcombine.high %v1351, %v1351
  %v1898 = vunpack.c.l.s4 1966171168
  %v1899 = vunpack.c.0.s8 %v1898
  %v1900 = vlaneseq
  %v1901 = vshrl.u32 %v1900, 7
  %v1902 = vsub.s32 %v1899, %v1901
  %v1903 = vrot.slane %v1351, %v1902
  %v1905 = vunpack.c.l.s4 1966171168
  %v1906 = vunpack.c.0.s8 %v1905
  %v1907 = vlaneseq
  %v1908 = vshrl.u32 %v1907, 7
  %v1909 = vsub.s32 %v1906, %v1908
  %v1910 = vrot.slane %v1896, %v1909
  %v1911 = vcombine.high %v1903, %v1903
  %v1912 = vcombine.high %v1910, %v1910
  %v1914 = vunpack.c.l.s4 1966171168
  %v1915 = vunpack.c.0.s8 %v1914
  %v1916 = vlaneseq
  %v1917 = vshrl.u32 %v1916, 7
  %v1918 = vsub.s32 %v1915, %v1917
  %v1919 = vrot.slane %v1903, %v1918
  %v1921 = vunpack.c.l.s4 1966171168
  %v1922 = vunpack.c.0.s8 %v1921
  %v1923 = vlaneseq
  %v1924 = vshrl.u32 %v1923, 7
  %v1925 = vsub.s32 %v1922, %v1924
  %v1926 = vrot.slane %v1910, %v1925
  %v1928 = vunpack.c.l.s4 1966171168
  %v1929 = vunpack.c.0.s8 %v1928
  %v1930 = vlaneseq
  %v1931 = vshrl.u32 %v1930, 7
  %v1932 = vsub.s32 %v1929, %v1931
  %v1933 = vrot.slane %v1911, %v1932
  %v1935 = vunpack.c.l.s4 1966171168
  %v1936 = vunpack.c.0.s8 %v1935
  %v1937 = vlaneseq
  %v1938 = vshrl.u32 %v1937, 7
  %v1939 = vsub.s32 %v1936, %v1938
  %v1940 = vrot.slane %v1912, %v1939
  %v1941 = vcombine.high %v1919, %v1919
  %v1942 = vcombine.high %v1926, %v1926
  %v1943 = vcombine.high %v1933, %v1933
  %v1944 = vcombine.high %v1940, %v1940
  %v1946 = vunpack.c.l.s4 1966171168
  %v1947 = vunpack.c.0.s8 %v1946
  %v1948 = vlaneseq
  %v1949 = vshrl.u32 %v1948, 7
  %v1950 = vsub.s32 %v1947, %v1949
  %v1951 = vrot.slane %v1352, %v1950
  %v1952 = vcombine.high %v1951, %v1951
  %v1954 = vunpack.c.l.s4 1966171168
  %v1955 = vunpack.c.0.s8 %v1954
  %v1956 = vlaneseq
  %v1957 = vshrl.u32 %v1956, 7
  %v1958 = vsub.s32 %v1955, %v1957
  %v1959 = vrot.slane %v1951, %v1958
  %v1961 = vunpack.c.l.s4 1966171168
  %v1962 = vunpack.c.0.s8 %v1961
  %v1963 = vlaneseq
  %v1964 = vshrl.u32 %v1963, 7
  %v1965 = vsub.s32 %v1962, %v1964
  %v1966 = vrot.slane %v1952, %v1965
  %v1967 = vcombine.high %v1959, %v1959
  %v1968 = vcombine.high %v1966, %v1966
  %v1969 = vlaneseq
  %v1970 = vshrl.u32 %v1969, 7
  %v1971 = vsub.s32 0, %v1970
  %v1972 = vrot.slane %v1919, %v1971
  %v1973 = vlaneseq
  %v1974 = vshrl.u32 %v1973, 7
  %v1975 = vsub.s32 0, %v1974
  %v1976 = vrot.slane %v1933, %v1975
  %v1977 = vlaneseq
  %v1978 = vshrl.u32 %v1977, 7
  %v1979 = vsub.s32 0, %v1978
  %v1980 = vrot.slane %v1941, %v1979
  %v1981 = vlaneseq
  %v1982 = vshrl.u32 %v1981, 7
  %v1983 = vsub.s32 0, %v1982
  %v1984 = vrot.slane %v1943, %v1983
  %v1985 = vlaneseq
  %v1986 = vshrl.u32 %v1985, 7
  %v1987 = vsub.s32 0, %v1986
  %v1988 = vrot.slane %v1926, %v1987
  %v1989 = vlaneseq
  %v1990 = vshrl.u32 %v1989, 7
  %v1991 = vsub.s32 0, %v1990
  %v1992 = vrot.slane %v1940, %v1991
  %v1993 = vlaneseq
  %v1994 = vshrl.u32 %v1993, 7
  %v1995 = vsub.s32 0, %v1994
  %v1996 = vrot.slane %v1942, %v1995
  %v1997 = vlaneseq
  %v1998 = vshrl.u32 %v1997, 7
  %v1999 = vsub.s32 0, %v1998
  %v2000 = vrot.slane %v1944, %v1999
  %v2001 = vlaneseq
  %v2002 = vshrl.u32 %v2001, 7
  %v2003 = vsub.s32 0, %v2002
  %v2004 = vrot.slane %v1959, %v2003
  %v2005 = vlaneseq
  %v2006 = vshrl.u32 %v2005, 7
  %v2007 = vsub.s32 0, %v2006
  %v2008 = vrot.slane %v1966, %v2007
  %v2009 = vlaneseq
  %v2010 = vshrl.u32 %v2009, 7
  %v2011 = vsub.s32 0, %v2010
  %v2012 = vrot.slane %v1967, %v2011
  %v2013 = vlaneseq
  %v2014 = vshrl.u32 %v2013, 7
  %v2015 = vsub.s32 0, %v2014
  %v2016 = vrot.slane %v1968, %v2015
  %v2029 = vmul.f32 %v1972, %v752
  %v2030 = vmul.f32 %v1972, %v755
  %v2031 = vmul.f32 %v1976, %v752
  %v2032 = vmul.f32 %v1976, %v755
  %v2033 = vmul.f32 %v1980, %v752
  %v2034 = vmul.f32 %v1980, %v755
  %v2035 = vmul.f32 %v1984, %v752
  %v2036 = vmul.f32 %v1984, %v755
  %v2037 = vmul.f32 %v1988, %v752
  %v2038 = vmul.f32 %v1988, %v755
  %v2039 = vmul.f32 %v1992, %v752
  %v2040 = vmul.f32 %v1992, %v755
  %v2041 = vmul.f32 %v1996, %v752
  %v2042 = vmul.f32 %v1996, %v755
  %v2043 = vmul.f32 %v2000, %v752
  %v2044 = vmul.f32 %v2000, %v755
  %v2045 = vmul.f32 %v2004, %v752
  %v2046 = vmul.f32 %v2004, %v755
  %v2047 = vmul.f32 %v2008, %v752
  %v2048 = vmul.f32 %v2008, %v755
  %v2049 = vmul.f32 %v2012, %v752
  %v2050 = vmul.f32 %v2012, %v755
  %v2051 = vmul.f32 %v2016, %v752
  %v2052 = vmul.f32 %v2016, %v755
  %v2053 = vadd.f32 %v1870, %v2029
  %v2054 = vadd.f32 %v1871, %v2030
  %v2055 = vadd.f32 %v1872, %v2031
  %v2056 = vadd.f32 %v1873, %v2032
  %v2057 = vadd.f32 %v1874, %v2033
  %v2058 = vadd.f32 %v1875, %v2034
  %v2059 = vadd.f32 %v1876, %v2035
  %v2060 = vadd.f32 %v1877, %v2036
  %v2061 = vadd.f32 %v1878, %v2037
  %v2062 = vadd.f32 %v1879, %v2038
  %v2063 = vadd.f32 %v1880, %v2039
  %v2064 = vadd.f32 %v1881, %v2040
  %v2065 = vadd.f32 %v1882, %v2041
  %v2066 = vadd.f32 %v1883, %v2042
  %v2067 = vadd.f32 %v1884, %v2043
  %v2068 = vadd.f32 %v1885, %v2044
  %v2069 = vadd.f32 %v1886, %v2045
  %v2070 = vadd.f32 %v1887, %v2046
  %v2071 = vadd.f32 %v1888, %v2047
  %v2072 = vadd.f32 %v1889, %v2048
  %v2073 = vadd.f32 %v1890, %v2049
  %v2074 = vadd.f32 %v1891, %v2050
  %v2075 = vadd.f32 %v1892, %v2051
  %v2076 = vadd.f32 %v1893, %v2052
  %v2079 = vcombine.high %v1353, %v1353
  %v2081 = vunpack.c.l.s4 1966171168
  %v2082 = vunpack.c.0.s8 %v2081
  %v2083 = vlaneseq
  %v2084 = vshrl.u32 %v2083, 7
  %v2085 = vsub.s32 %v2082, %v2084
  %v2086 = vrot.slane %v1353, %v2085
  %v2088 = vunpack.c.l.s4 1966171168
  %v2089 = vunpack.c.0.s8 %v2088
  %v2090 = vlaneseq
  %v2091 = vshrl.u32 %v2090, 7
  %v2092 = vsub.s32 %v2089, %v2091
  %v2093 = vrot.slane %v2079, %v2092
  %v2094 = vcombine.high %v2086, %v2086
  %v2095 = vcombine.high %v2093, %v2093
  %v2097 = vunpack.c.l.s4 1966171168
  %v2098 = vunpack.c.0.s8 %v2097
  %v2099 = vlaneseq
  %v2100 = vshrl.u32 %v2099, 7
  %v2101 = vsub.s32 %v2098, %v2100
  %v2102 = vrot.slane %v2086, %v2101
  %v2104 = vunpack.c.l.s4 1966171168
  %v2105 = vunpack.c.0.s8 %v2104
  %v2106 = vlaneseq
  %v2107 = vshrl.u32 %v2106, 7
  %v2108 = vsub.s32 %v2105, %v2107
  %v2109 = vrot.slane %v2093, %v2108
  %v2111 = vunpack.c.l.s4 1966171168
  %v2112 = vunpack.c.0.s8 %v2111
  %v2113 = vlaneseq
  %v2114 = vshrl.u32 %v2113, 7
  %v2115 = vsub.s32 %v2112, %v2114
  %v2116 = vrot.slane %v2094, %v2115
  %v2118 = vunpack.c.l.s4 1966171168
  %v2119 = vunpack.c.0.s8 %v2118
  %v2120 = vlaneseq
  %v2121 = vshrl.u32 %v2120, 7
  %v2122 = vsub.s32 %v2119, %v2121
  %v2123 = vrot.slane %v2095, %v2122
  %v2124 = vcombine.high %v2102, %v2102
  %v2125 = vcombine.high %v2109, %v2109
  %v2126 = vcombine.high %v2116, %v2116
  %v2127 = vcombine.high %v2123, %v2123
  %v2129 = vunpack.c.l.s4 1966171168
  %v2130 = vunpack.c.0.s8 %v2129
  %v2131 = vlaneseq
  %v2132 = vshrl.u32 %v2131, 7
  %v2133 = vsub.s32 %v2130, %v2132
  %v2134 = vrot.slane %v1354, %v2133
  %v2135 = vcombine.high %v2134, %v2134
  %v2137 = vunpack.c.l.s4 1966171168
  %v2138 = vunpack.c.0.s8 %v2137
  %v2139 = vlaneseq
  %v2140 = vshrl.u32 %v2139, 7
  %v2141 = vsub.s32 %v2138, %v2140
  %v2142 = vrot.slane %v2134, %v2141
  %v2144 = vunpack.c.l.s4 1966171168
  %v2145 = vunpack.c.0.s8 %v2144
  %v2146 = vlaneseq
  %v2147 = vshrl.u32 %v2146, 7
  %v2148 = vsub.s32 %v2145, %v2147
  %v2149 = vrot.slane %v2135, %v2148
  %v2150 = vcombine.high %v2142, %v2142
  %v2151 = vcombine.high %v2149, %v2149
  %v2152 = vlaneseq
  %v2153 = vshrl.u32 %v2152, 7
  %v2154 = vsub.s32 0, %v2153
  %v2155 = vrot.slane %v2102, %v2154
  %v2156 = vlaneseq
  %v2157 = vshrl.u32 %v2156, 7
  %v2158 = vsub.s32 0, %v2157
  %v2159 = vrot.slane %v2116, %v2158
  %v2160 = vlaneseq
  %v2161 = vshrl.u32 %v2160, 7
  %v2162 = vsub.s32 0, %v2161
  %v2163 = vrot.slane %v2124, %v2162
  %v2164 = vlaneseq
  %v2165 = vshrl.u32 %v2164, 7
  %v2166 = vsub.s32 0, %v2165
  %v2167 = vrot.slane %v2126, %v2166
  %v2168 = vlaneseq
  %v2169 = vshrl.u32 %v2168, 7
  %v2170 = vsub.s32 0, %v2169
  %v2171 = vrot.slane %v2109, %v2170
  %v2172 = vlaneseq
  %v2173 = vshrl.u32 %v2172, 7
  %v2174 = vsub.s32 0, %v2173
  %v2175 = vrot.slane %v2123, %v2174
  %v2176 = vlaneseq
  %v2177 = vshrl.u32 %v2176, 7
  %v2178 = vsub.s32 0, %v2177
  %v2179 = vrot.slane %v2125, %v2178
  %v2180 = vlaneseq
  %v2181 = vshrl.u32 %v2180, 7
  %v2182 = vsub.s32 0, %v2181
  %v2183 = vrot.slane %v2127, %v2182
  %v2184 = vlaneseq
  %v2185 = vshrl.u32 %v2184, 7
  %v2186 = vsub.s32 0, %v2185
  %v2187 = vrot.slane %v2142, %v2186
  %v2188 = vlaneseq
  %v2189 = vshrl.u32 %v2188, 7
  %v2190 = vsub.s32 0, %v2189
  %v2191 = vrot.slane %v2149, %v2190
  %v2192 = vlaneseq
  %v2193 = vshrl.u32 %v2192, 7
  %v2194 = vsub.s32 0, %v2193
  %v2195 = vrot.slane %v2150, %v2194
  %v2196 = vlaneseq
  %v2197 = vshrl.u32 %v2196, 7
  %v2198 = vsub.s32 0, %v2197
  %v2199 = vrot.slane %v2151, %v2198
  %v2212 = vmul.f32 %v2155, %v760
  %v2213 = vmul.f32 %v2155, %v763
  %v2214 = vmul.f32 %v2159, %v760
  %v2215 = vmul.f32 %v2159, %v763
  %v2216 = vmul.f32 %v2163, %v760
  %v2217 = vmul.f32 %v2163, %v763
  %v2218 = vmul.f32 %v2167, %v760
  %v2219 = vmul.f32 %v2167, %v763
  %v2220 = vmul.f32 %v2171, %v760
  %v2221 = vmul.f32 %v2171, %v763
  %v2222 = vmul.f32 %v2175, %v760
  %v2223 = vmul.f32 %v2175, %v763
  %v2224 = vmul.f32 %v2179, %v760
  %v2225 = vmul.f32 %v2179, %v763
  %v2226 = vmul.f32 %v2183, %v760
  %v2227 = vmul.f32 %v2183, %v763
  %v2228 = vmul.f32 %v2187, %v760
  %v2229 = vmul.f32 %v2187, %v763
  %v2230 = vmul.f32 %v2191, %v760
  %v2231 = vmul.f32 %v2191, %v763
  %v2232 = vmul.f32 %v2195, %v760
  %v2233 = vmul.f32 %v2195, %v763
  %v2234 = vmul.f32 %v2199, %v760
  %v2235 = vmul.f32 %v2199, %v763
  %v2236 = vadd.f32 %v2053, %v2212
  %v2237 = vadd.f32 %v2054, %v2213
  %v2238 = vadd.f32 %v2055, %v2214
  %v2239 = vadd.f32 %v2056, %v2215
  %v2240 = vadd.f32 %v2057, %v2216
  %v2241 = vadd.f32 %v2058, %v2217
  %v2242 = vadd.f32 %v2059, %v2218
  %v2243 = vadd.f32 %v2060, %v2219
  %v2244 = vadd.f32 %v2061, %v2220
  %v2245 = vadd.f32 %v2062, %v2221
  %v2246 = vadd.f32 %v2063, %v2222
  %v2247 = vadd.f32 %v2064, %v2223
  %v2248 = vadd.f32 %v2065, %v2224
  %v2249 = vadd.f32 %v2066, %v2225
  %v2250 = vadd.f32 %v2067, %v2226
  %v2251 = vadd.f32 %v2068, %v2227
  %v2252 = vadd.f32 %v2069, %v2228
  %v2253 = vadd.f32 %v2070, %v2229
  %v2254 = vadd.f32 %v2071, %v2230
  %v2255 = vadd.f32 %v2072, %v2231
  %v2256 = vadd.f32 %v2073, %v2232
  %v2257 = vadd.f32 %v2074, %v2233
  %v2258 = vadd.f32 %v2075, %v2234
  %v2259 = vadd.f32 %v2076, %v2235
  %v2262 = vcombine.high %v1355, %v1355
  %v2264 = vunpack.c.l.s4 1966171168
  %v2265 = vunpack.c.0.s8 %v2264
  %v2266 = vlaneseq
  %v2267 = vshrl.u32 %v2266, 7
  %v2268 = vsub.s32 %v2265, %v2267
  %v2269 = vrot.slane %v1355, %v2268
  %v2271 = vunpack.c.l.s4 1966171168
  %v2272 = vunpack.c.0.s8 %v2271
  %v2273 = vlaneseq
  %v2274 = vshrl.u32 %v2273, 7
  %v2275 = vsub.s32 %v2272, %v2274
  %v2276 = vrot.slane %v2262, %v2275
  %v2277 = vcombine.high %v2269, %v2269
  %v2278 = vcombine.high %v2276, %v2276
  %v2280 = vunpack.c.l.s4 1966171168
  %v2281 = vunpack.c.0.s8 %v2280
  %v2282 = vlaneseq
  %v2283 = vshrl.u32 %v2282, 7
  %v2284 = vsub.s32 %v2281, %v2283
  %v2285 = vrot.slane %v2269, %v2284
  %v2287 = vunpack.c.l.s4 1966171168
  %v2288 = vunpack.c.0.s8 %v2287
  %v2289 = vlaneseq
  %v2290 = vshrl.u32 %v2289, 7
  %v2291 = vsub.s32 %v2288, %v2290
  %v2292 = vrot.slane %v2276, %v2291
  %v2294 = vunpack.c.l.s4 1966171168
  %v2295 = vunpack.c.0.s8 %v2294
  %v2296 = vlaneseq
  %v2297 = vshrl.u32 %v2296, 7
  %v2298 = vsub.s32 %v2295, %v2297
  %v2299 = vrot.slane %v2277, %v2298
  %v2301 = vunpack.c.l.s4 1966171168
  %v2302 = vunpack.c.0.s8 %v2301
  %v2303 = vlaneseq
  %v2304 = vshrl.u32 %v2303, 7
  %v2305 = vsub.s32 %v2302, %v2304
  %v2306 = vrot.slane %v2278, %v2305
  %v2307 = vcombine.high %v2285, %v2285
  %v2308 = vcombine.high %v2292, %v2292
  %v2309 = vcombine.high %v2299, %v2299
  %v2310 = vcombine.high %v2306, %v2306
  %v2312 = vunpack.c.l.s4 1966171168
  %v2313 = vunpack.c.0.s8 %v2312
  %v2314 = vlaneseq
  %v2315 = vshrl.u32 %v2314, 7
  %v2316 = vsub.s32 %v2313, %v2315
  %v2317 = vrot.slane %v1356, %v2316
  %v2318 = vcombine.high %v2317, %v2317
  %v2320 = vunpack.c.l.s4 1966171168
  %v2321 = vunpack.c.0.s8 %v2320
  %v2322 = vlaneseq
  %v2323 = vshrl.u32 %v2322, 7
  %v2324 = vsub.s32 %v2321, %v2323
  %v2325 = vrot.slane %v2317, %v2324
  %v2327 = vunpack.c.l.s4 1966171168
  %v2328 = vunpack.c.0.s8 %v2327
  %v2329 = vlaneseq
  %v2330 = vshrl.u32 %v2329, 7
  %v2331 = vsub.s32 %v2328, %v2330
  %v2332 = vrot.slane %v2318, %v2331
  %v2333 = vcombine.high %v2325, %v2325
  %v2334 = vcombine.high %v2332, %v2332
  %v2335 = vlaneseq
  %v2336 = vshrl.u32 %v2335, 7
  %v2337 = vsub.s32 0, %v2336
  %v2338 = vrot.slane %v2285, %v2337
  %v2339 = vlaneseq
  %v2340 = vshrl.u32 %v2339, 7
  %v2341 = vsub.s32 0, %v2340
  %v2342 = vrot.slane %v2299, %v2341
  %v2343 = vlaneseq
  %v2344 = vshrl.u32 %v2343, 7
  %v2345 = vsub.s32 0, %v2344
  %v2346 = vrot.slane %v2307, %v2345
  %v2347 = vlaneseq
  %v2348 = vshrl.u32 %v2347, 7
  %v2349 = vsub.s32 0, %v2348
  %v2350 = vrot.slane %v2309, %v2349
  %v2351 = vlaneseq
  %v2352 = vshrl.u32 %v2351, 7
  %v2353 = vsub.s32 0, %v2352
  %v2354 = vrot.slane %v2292, %v2353
  %v2355 = vlaneseq
  %v2356 = vshrl.u32 %v2355, 7
  %v2357 = vsub.s32 0, %v2356
  %v2358 = vrot.slane %v2306, %v2357
  %v2359 = vlaneseq
  %v2360 = vshrl.u32 %v2359, 7
  %v2361 = vsub.s32 0, %v2360
  %v2362 = vrot.slane %v2308, %v2361
  %v2363 = vlaneseq
  %v2364 = vshrl.u32 %v2363, 7
  %v2365 = vsub.s32 0, %v2364
  %v2366 = vrot.slane %v2310, %v2365
  %v2367 = vlaneseq
  %v2368 = vshrl.u32 %v2367, 7
  %v2369 = vsub.s32 0, %v2368
  %v2370 = vrot.slane %v2325, %v2369
  %v2371 = vlaneseq
  %v2372 = vshrl.u32 %v2371, 7
  %v2373 = vsub.s32 0, %v2372
  %v2374 = vrot.slane %v2332, %v2373
  %v2375 = vlaneseq
  %v2376 = vshrl.u32 %v2375, 7
  %v2377 = vsub.s32 0, %v2376
  %v2378 = vrot.slane %v2333, %v2377
  %v2379 = vlaneseq
  %v2380 = vshrl.u32 %v2379, 7
  %v2381 = vsub.s32 0, %v2380
  %v2382 = vrot.slane %v2334, %v2381
  %v2395 = vmul.f32 %v2338, %v768
  %v2396 = vmul.f32 %v2338, %v771
  %v2397 = vmul.f32 %v2342, %v768
  %v2398 = vmul.f32 %v2342, %v771
  %v2399 = vmul.f32 %v2346, %v768
  %v2400 = vmul.f32 %v2346, %v771
  %v2401 = vmul.f32 %v2350, %v768
  %v2402 = vmul.f32 %v2350, %v771
  %v2403 = vmul.f32 %v2354, %v768
  %v2404 = vmul.f32 %v2354, %v771
  %v2405 = vmul.f32 %v2358, %v768
  %v2406 = vmul.f32 %v2358, %v771
  %v2407 = vmul.f32 %v2362, %v768
  %v2408 = vmul.f32 %v2362, %v771
  %v2409 = vmul.f32 %v2366, %v768
  %v2410 = vmul.f32 %v2366, %v771
  %v2411 = vmul.f32 %v2370, %v768
  %v2412 = vmul.f32 %v2370, %v771
  %v2413 = vmul.f32 %v2374, %v768
  %v2414 = vmul.f32 %v2374, %v771
  %v2415 = vmul.f32 %v2378, %v768
  %v2416 = vmul.f32 %v2378, %v771
  %v2417 = vmul.f32 %v2382, %v768
  %v2418 = vmul.f32 %v2382, %v771
  %v2419 = vadd.f32 %v2236, %v2395
  %v2420 = vadd.f32 %v2237, %v2396
  %v2421 = vadd.f32 %v2238, %v2397
  %v2422 = vadd.f32 %v2239, %v2398
  %v2423 = vadd.f32 %v2240, %v2399
  %v2424 = vadd.f32 %v2241, %v2400
  %v2425 = vadd.f32 %v2242, %v2401
  %v2426 = vadd.f32 %v2243, %v2402
  %v2427 = vadd.f32 %v2244, %v2403
  %v2428 = vadd.f32 %v2245, %v2404
  %v2429 = vadd.f32 %v2246, %v2405
  %v2430 = vadd.f32 %v2247, %v2406
  %v2431 = vadd.f32 %v2248, %v2407
  %v2432 = vadd.f32 %v2249, %v2408
  %v2433 = vadd.f32 %v2250, %v2409
  %v2434 = vadd.f32 %v2251, %v2410
  %v2435 = vadd.f32 %v2252, %v2411
  %v2436 = vadd.f32 %v2253, %v2412
  %v2437 = vadd.f32 %v2254, %v2413
  %v2438 = vadd.f32 %v2255, %v2414
  %v2439 = vadd.f32 %v2256, %v2415
  %v2440 = vadd.f32 %v2257, %v2416
  %v2441 = vadd.f32 %v2258, %v2417
  %v2442 = vadd.f32 %v2259, %v2418
  %v2445 = vcombine.high %v1357, %v1357
  %v2447 = vunpack.c.l.s4 1966171168
  %v2448 = vunpack.c.0.s8 %v2447
  %v2449 = vlaneseq
  %v2450 = vshrl.u32 %v2449, 7
  %v2451 = vsub.s32 %v2448, %v2450
  %v2452 = vrot.slane %v1357, %v2451
  %v2454 = vunpack.c.l.s4 1966171168
  %v2455 = vunpack.c.0.s8 %v2454
  %v2456 = vlaneseq
  %v2457 = vshrl.u32 %v2456, 7
  %v2458 = vsub.s32 %v2455, %v2457
  %v2459 = vrot.slane %v2445, %v2458
  %v2460 = vcombine.high %v2452, %v2452
  %v2461 = vcombine.high %v2459, %v2459
  %v2463 = vunpack.c.l.s4 1966171168
  %v2464 = vunpack.c.0.s8 %v2463
  %v2465 = vlaneseq
  %v2466 = vshrl.u32 %v2465, 7
  %v2467 = vsub.s32 %v2464, %v2466
  %v2468 = vrot.slane %v2452, %v2467
  %v2470 = vunpack.c.l.s4 1966171168
  %v2471 = vunpack.c.0.s8 %v2470
  %v2472 = vlaneseq
  %v2473 = vshrl.u32 %v2472, 7
  %v2474 = vsub.s32 %v2471, %v2473
  %v2475 = vrot.slane %v2459, %v2474
  %v2477 = vunpack.c.l.s4 1966171168
  %v2478 = vunpack.c.0.s8 %v2477
  %v2479 = vlaneseq
  %v2480 = vshrl.u32 %v2479, 7
  %v2481 = vsub.s32 %v2478, %v2480
  %v2482 = vrot.slane %v2460, %v2481
  %v2484 = vunpack.c.l.s4 1966171168
  %v2485 = vunpack.c.0.s8 %v2484
  %v2486 = vlaneseq
  %v2487 = vshrl.u32 %v2486, 7
  %v2488 = vsub.s32 %v2485, %v2487
  %v2489 = vrot.slane %v2461, %v2488
  %v2490 = vcombine.high %v2468, %v2468
  %v2491 = vcombine.high %v2475, %v2475
  %v2492 = vcombine.high %v2482, %v2482
  %v2493 = vcombine.high %v2489, %v2489
  %v2495 = vunpack.c.l.s4 1966171168
  %v2496 = vunpack.c.0.s8 %v2495
  %v2497 = vlaneseq
  %v2498 = vshrl.u32 %v2497, 7
  %v2499 = vsub.s32 %v2496, %v2498
  %v2500 = vrot.slane %v1358, %v2499
  %v2501 = vcombine.high %v2500, %v2500
  %v2503 = vunpack.c.l.s4 1966171168
  %v2504 = vunpack.c.0.s8 %v2503
  %v2505 = vlaneseq
  %v2506 = vshrl.u32 %v2505, 7
  %v2507 = vsub.s32 %v2504, %v2506
  %v2508 = vrot.slane %v2500, %v2507
  %v2510 = vunpack.c.l.s4 1966171168
  %v2511 = vunpack.c.0.s8 %v2510
  %v2512 = vlaneseq
  %v2513 = vshrl.u32 %v2512, 7
  %v2514 = vsub.s32 %v2511, %v2513
  %v2515 = vrot.slane %v2501, %v2514
  %v2516 = vcombine.high %v2508, %v2508
  %v2517 = vcombine.high %v2515, %v2515
  %v2518 = vlaneseq
  %v2519 = vshrl.u32 %v2518, 7
  %v2520 = vsub.s32 0, %v2519
  %v2521 = vrot.slane %v2468, %v2520
  %v2522 = vlaneseq
  %v2523 = vshrl.u32 %v2522, 7
  %v2524 = vsub.s32 0, %v2523
  %v2525 = vrot.slane %v2482, %v2524
  %v2526 = vlaneseq
  %v2527 = vshrl.u32 %v2526, 7
  %v2528 = vsub.s32 0, %v2527
  %v2529 = vrot.slane %v2490, %v2528
  %v2530 = vlaneseq
  %v2531 = vshrl.u32 %v2530, 7
  %v2532 = vsub.s32 0, %v2531
  %v2533 = vrot.slane %v2492, %v2532
  %v2534 = vlaneseq
  %v2535 = vshrl.u32 %v2534, 7
  %v2536 = vsub.s32 0, %v2535
  %v2537 = vrot.slane %v2475, %v2536
  %v2538 = vlaneseq
  %v2539 = vshrl.u32 %v2538, 7
  %v2540 = vsub.s32 0, %v2539
  %v2541 = vrot.slane %v2489, %v2540
  %v2542 = vlaneseq
  %v2543 = vshrl.u32 %v2542, 7
  %v2544 = vsub.s32 0, %v2543
  %v2545 = vrot.slane %v2491, %v2544
  %v2546 = vlaneseq
  %v2547 = vshrl.u32 %v2546, 7
  %v2548 = vsub.s32 0, %v2547
  %v2549 = vrot.slane %v2493, %v2548
  %v2550 = vlaneseq
  %v2551 = vshrl.u32 %v2550, 7
  %v2552 = vsub.s32 0, %v2551
  %v2553 = vrot.slane %v2508, %v2552
  %v2554 = vlaneseq
  %v2555 = vshrl.u32 %v2554, 7
  %v2556 = vsub.s32 0, %v2555
  %v2557 = vrot.slane %v2515, %v2556
  %v2558 = vlaneseq
  %v2559 = vshrl.u32 %v2558, 7
  %v2560 = vsub.s32 0, %v2559
  %v2561 = vrot.slane %v2516, %v2560
  %v2562 = vlaneseq
  %v2563 = vshrl.u32 %v2562, 7
  %v2564 = vsub.s32 0, %v2563
  %v2565 = vrot.slane %v2517, %v2564
  %v2578 = vmul.f32 %v2521, %v776
  %v2579 = vmul.f32 %v2521, %v779
  %v2580 = vmul.f32 %v2525, %v776
  %v2581 = vmul.f32 %v2525, %v779
  %v2582 = vmul.f32 %v2529, %v776
  %v2583 = vmul.f32 %v2529, %v779
  %v2584 = vmul.f32 %v2533, %v776
  %v2585 = vmul.f32 %v2533, %v779
  %v2586 = vmul.f32 %v2537, %v776
  %v2587 = vmul.f32 %v2537, %v779
  %v2588 = vmul.f32 %v2541, %v776
  %v2589 = vmul.f32 %v2541, %v779
  %v2590 = vmul.f32 %v2545, %v776
  %v2591 = vmul.f32 %v2545, %v779
  %v2592 = vmul.f32 %v2549, %v776
  %v2593 = vmul.f32 %v2549, %v779
  %v2594 = vmul.f32 %v2553, %v776
  %v2595 = vmul.f32 %v2553, %v779
  %v2596 = vmul.f32 %v2557, %v776
  %v2597 = vmul.f32 %v2557, %v779
  %v2598 = vmul.f32 %v2561, %v776
  %v2599 = vmul.f32 %v2561, %v779
  %v2600 = vmul.f32 %v2565, %v776
  %v2601 = vmul.f32 %v2565, %v779
  %v2602 = vadd.f32 %v2419, %v2578
  %v2603 = vadd.f32 %v2420, %v2579
  %v2604 = vadd.f32 %v2421, %v2580
  %v2605 = vadd.f32 %v2422, %v2581
  %v2606 = vadd.f32 %v2423, %v2582
  %v2607 = vadd.f32 %v2424, %v2583
  %v2608 = vadd.f32 %v2425, %v2584
  %v2609 = vadd.f32 %v2426, %v2585
  %v2610 = vadd.f32 %v2427, %v2586
  %v2611 = vadd.f32 %v2428, %v2587
  %v2612 = vadd.f32 %v2429, %v2588
  %v2613 = vadd.f32 %v2430, %v2589
  %v2614 = vadd.f32 %v2431, %v2590
  %v2615 = vadd.f32 %v2432, %v2591
  %v2616 = vadd.f32 %v2433, %v2592
  %v2617 = vadd.f32 %v2434, %v2593
  %v2618 = vadd.f32 %v2435, %v2594
  %v2619 = vadd.f32 %v2436, %v2595
  %v2620 = vadd.f32 %v2437, %v2596
  %v2621 = vadd.f32 %v2438, %v2597
  %v2622 = vadd.f32 %v2439, %v2598
  %v2623 = vadd.f32 %v2440, %v2599
  %v2624 = vadd.f32 %v2441, %v2600
  %v2625 = vadd.f32 %v2442, %v2601
  %v2628 = vcombine.high %v1359, %v1359
  %v2630 = vunpack.c.l.s4 1966171168
  %v2631 = vunpack.c.0.s8 %v2630
  %v2632 = vlaneseq
  %v2633 = vshrl.u32 %v2632, 7
  %v2634 = vsub.s32 %v2631, %v2633
  %v2635 = vrot.slane %v1359, %v2634
  %v2637 = vunpack.c.l.s4 1966171168
  %v2638 = vunpack.c.0.s8 %v2637
  %v2639 = vlaneseq
  %v2640 = vshrl.u32 %v2639, 7
  %v2641 = vsub.s32 %v2638, %v2640
  %v2642 = vrot.slane %v2628, %v2641
  %v2643 = vcombine.high %v2635, %v2635
  %v2644 = vcombine.high %v2642, %v2642
  %v2646 = vunpack.c.l.s4 1966171168
  %v2647 = vunpack.c.0.s8 %v2646
  %v2648 = vlaneseq
  %v2649 = vshrl.u32 %v2648, 7
  %v2650 = vsub.s32 %v2647, %v2649
  %v2651 = vrot.slane %v2635, %v2650
  %v2653 = vunpack.c.l.s4 1966171168
  %v2654 = vunpack.c.0.s8 %v2653
  %v2655 = vlaneseq
  %v2656 = vshrl.u32 %v2655, 7
  %v2657 = vsub.s32 %v2654, %v2656
  %v2658 = vrot.slane %v2642, %v2657
  %v2660 = vunpack.c.l.s4 1966171168
  %v2661 = vunpack.c.0.s8 %v2660
  %v2662 = vlaneseq
  %v2663 = vshrl.u32 %v2662, 7
  %v2664 = vsub.s32 %v2661, %v2663
  %v2665 = vrot.slane %v2643, %v2664
  %v2667 = vunpack.c.l.s4 1966171168
  %v2668 = vunpack.c.0.s8 %v2667
  %v2669 = vlaneseq
  %v2670 = vshrl.u32 %v2669, 7
  %v2671 = vsub.s32 %v2668, %v2670
  %v2672 = vrot.slane %v2644, %v2671
  %v2673 = vcombine.high %v2651, %v2651
  %v2674 = vcombine.high %v2658, %v2658
  %v2675 = vcombine.high %v2665, %v2665
  %v2676 = vcombine.high %v2672, %v2672
  %v2678 = vunpack.c.l.s4 1966171168
  %v2679 = vunpack.c.0.s8 %v2678
  %v2680 = vlaneseq
  %v2681 = vshrl.u32 %v2680, 7
  %v2682 = vsub.s32 %v2679, %v2681
  %v2683 = vrot.slane %v1360, %v2682
  %v2684 = vcombine.high %v2683, %v2683
  %v2686 = vunpack.c.l.s4 1966171168
  %v2687 = vunpack.c.0.s8 %v2686
  %v2688 = vlaneseq
  %v2689 = vshrl.u32 %v2688, 7
  %v2690 = vsub.s32 %v2687, %v2689
  %v2691 = vrot.slane %v2683, %v2690
  %v2693 = vunpack.c.l.s4 1966171168
  %v2694 = vunpack.c.0.s8 %v2693
  %v2695 = vlaneseq
  %v2696 = vshrl.u32 %v2695, 7
  %v2697 = vsub.s32 %v2694, %v2696
  %v2698 = vrot.slane %v2684, %v2697
  %v2699 = vcombine.high %v2691, %v2691
  %v2700 = vcombine.high %v2698, %v2698
  %v2701 = vlaneseq
  %v2702 = vshrl.u32 %v2701, 7
  %v2703 = vsub.s32 0, %v2702
  %v2704 = vrot.slane %v2651, %v2703
  %v2705 = vlaneseq
  %v2706 = vshrl.u32 %v2705, 7
  %v2707 = vsub.s32 0, %v2706
  %v2708 = vrot.slane %v2665, %v2707
  %v2709 = vlaneseq
  %v2710 = vshrl.u32 %v2709, 7
  %v2711 = vsub.s32 0, %v2710
  %v2712 = vrot.slane %v2673, %v2711
  %v2713 = vlaneseq
  %v2714 = vshrl.u32 %v2713, 7
  %v2715 = vsub.s32 0, %v2714
  %v2716 = vrot.slane %v2675, %v2715
  %v2717 = vlaneseq
  %v2718 = vshrl.u32 %v2717, 7
  %v2719 = vsub.s32 0, %v2718
  %v2720 = vrot.slane %v2658, %v2719
  %v2721 = vlaneseq
  %v2722 = vshrl.u32 %v2721, 7
  %v2723 = vsub.s32 0, %v2722
  %v2724 = vrot.slane %v2672, %v2723
  %v2725 = vlaneseq
  %v2726 = vshrl.u32 %v2725, 7
  %v2727 = vsub.s32 0, %v2726
  %v2728 = vrot.slane %v2674, %v2727
  %v2729 = vlaneseq
  %v2730 = vshrl.u32 %v2729, 7
  %v2731 = vsub.s32 0, %v2730
  %v2732 = vrot.slane %v2676, %v2731
  %v2733 = vlaneseq
  %v2734 = vshrl.u32 %v2733, 7
  %v2735 = vsub.s32 0, %v2734
  %v2736 = vrot.slane %v2691, %v2735
  %v2737 = vlaneseq
  %v2738 = vshrl.u32 %v2737, 7
  %v2739 = vsub.s32 0, %v2738
  %v2740 = vrot.slane %v2698, %v2739
  %v2741 = vlaneseq
  %v2742 = vshrl.u32 %v2741, 7
  %v2743 = vsub.s32 0, %v2742
  %v2744 = vrot.slane %v2699, %v2743
  %v2745 = vlaneseq
  %v2746 = vshrl.u32 %v2745, 7
  %v2747 = vsub.s32 0, %v2746
  %v2748 = vrot.slane %v2700, %v2747
  %v2761 = vmul.f32 %v2704, %v784
  %v2762 = vmul.f32 %v2704, %v787
  %v2763 = vmul.f32 %v2708, %v784
  %v2764 = vmul.f32 %v2708, %v787
  %v2765 = vmul.f32 %v2712, %v784
  %v2766 = vmul.f32 %v2712, %v787
  %v2767 = vmul.f32 %v2716, %v784
  %v2768 = vmul.f32 %v2716, %v787
  %v2769 = vmul.f32 %v2720, %v784
  %v2770 = vmul.f32 %v2720, %v787
  %v2771 = vmul.f32 %v2724, %v784
  %v2772 = vmul.f32 %v2724, %v787
  %v2773 = vmul.f32 %v2728, %v784
  %v2774 = vmul.f32 %v2728, %v787
  %v2775 = vmul.f32 %v2732, %v784
  %v2776 = vmul.f32 %v2732, %v787
  %v2777 = vmul.f32 %v2736, %v784
  %v2778 = vmul.f32 %v2736, %v787
  %v2779 = vmul.f32 %v2740, %v784
  %v2780 = vmul.f32 %v2740, %v787
  %v2781 = vmul.f32 %v2744, %v784
  %v2782 = vmul.f32 %v2744, %v787
  %v2783 = vmul.f32 %v2748, %v784
  %v2784 = vmul.f32 %v2748, %v787
  %v2785 = vadd.f32 %v2602, %v2761
  %v2786 = vadd.f32 %v2603, %v2762
  %v2787 = vadd.f32 %v2604, %v2763
  %v2788 = vadd.f32 %v2605, %v2764
  %v2789 = vadd.f32 %v2606, %v2765
  %v2790 = vadd.f32 %v2607, %v2766
  %v2791 = vadd.f32 %v2608, %v2767
  %v2792 = vadd.f32 %v2609, %v2768
  %v2793 = vadd.f32 %v2610, %v2769
  %v2794 = vadd.f32 %v2611, %v2770
  %v2795 = vadd.f32 %v2612, %v2771
  %v2796 = vadd.f32 %v2613, %v2772
  %v2797 = vadd.f32 %v2614, %v2773
  %v2798 = vadd.f32 %v2615, %v2774
  %v2799 = vadd.f32 %v2616, %v2775
  %v2800 = vadd.f32 %v2617, %v2776
  %v2801 = vadd.f32 %v2618, %v2777
  %v2802 = vadd.f32 %v2619, %v2778
  %v2803 = vadd.f32 %v2620, %v2779
  %v2804 = vadd.f32 %v2621, %v2780
  %v2805 = vadd.f32 %v2622, %v2781
  %v2806 = vadd.f32 %v2623, %v2782
  %v2807 = vadd.f32 %v2624, %v2783
  %v2808 = vadd.f32 %v2625, %v2784
  %v2811 = vcombine.high %v1361, %v1361
  %v2813 = vunpack.c.l.s4 1966171168
  %v2814 = vunpack.c.0.s8 %v2813
  %v2815 = vlaneseq
  %v2816 = vshrl.u32 %v2815, 7
  %v2817 = vsub.s32 %v2814, %v2816
  %v2818 = vrot.slane %v1361, %v2817
  %v2820 = vunpack.c.l.s4 1966171168
  %v2821 = vunpack.c.0.s8 %v2820
  %v2822 = vlaneseq
  %v2823 = vshrl.u32 %v2822, 7
  %v2824 = vsub.s32 %v2821, %v2823
  %v2825 = vrot.slane %v2811, %v2824
  %v2826 = vcombine.high %v2818, %v2818
  %v2827 = vcombine.high %v2825, %v2825
  %v2829 = vunpack.c.l.s4 1966171168
  %v2830 = vunpack.c.0.s8 %v2829
  %v2831 = vlaneseq
  %v2832 = vshrl.u32 %v2831, 7
  %v2833 = vsub.s32 %v2830, %v2832
  %v2834 = vrot.slane %v2818, %v2833
  %v2836 = vunpack.c.l.s4 1966171168
  %v2837 = vunpack.c.0.s8 %v2836
  %v2838 = vlaneseq
  %v2839 = vshrl.u32 %v2838, 7
  %v2840 = vsub.s32 %v2837, %v2839
  %v2841 = vrot.slane %v2825, %v2840
  %v2843 = vunpack.c.l.s4 1966171168
  %v2844 = vunpack.c.0.s8 %v2843
  %v2845 = vlaneseq
  %v2846 = vshrl.u32 %v2845, 7
  %v2847 = vsub.s32 %v2844, %v2846
  %v2848 = vrot.slane %v2826, %v2847
  %v2850 = vunpack.c.l.s4 1966171168
  %v2851 = vunpack.c.0.s8 %v2850
  %v2852 = vlaneseq
  %v2853 = vshrl.u32 %v2852, 7
  %v2854 = vsub.s32 %v2851, %v2853
  %v2855 = vrot.slane %v2827, %v2854
  %v2856 = vcombine.high %v2834, %v2834
  %v2857 = vcombine.high %v2841, %v2841
  %v2858 = vcombine.high %v2848, %v2848
  %v2859 = vcombine.high %v2855, %v2855
  %v2861 = vunpack.c.l.s4 1966171168
  %v2862 = vunpack.c.0.s8 %v2861
  %v2863 = vlaneseq
  %v2864 = vshrl.u32 %v2863, 7
  %v2865 = vsub.s32 %v2862, %v2864
  %v2866 = vrot.slane %v1362, %v2865
  %v2867 = vcombine.high %v2866, %v2866
  %v2869 = vunpack.c.l.s4 1966171168
  %v2870 = vunpack.c.0.s8 %v2869
  %v2871 = vlaneseq
  %v2872 = vshrl.u32 %v2871, 7
  %v2873 = vsub.s32 %v2870, %v2872
  %v2874 = vrot.slane %v2866, %v2873
  %v2876 = vunpack.c.l.s4 1966171168
  %v2877 = vunpack.c.0.s8 %v2876
  %v2878 = vlaneseq
  %v2879 = vshrl.u32 %v2878, 7
  %v2880 = vsub.s32 %v2877, %v2879
  %v2881 = vrot.slane %v2867, %v2880
  %v2882 = vcombine.high %v2874, %v2874
  %v2883 = vcombine.high %v2881, %v2881
  %v2884 = vlaneseq
  %v2885 = vshrl.u32 %v2884, 7
  %v2886 = vsub.s32 0, %v2885
  %v2887 = vrot.slane %v2834, %v2886
  %v2888 = vlaneseq
  %v2889 = vshrl.u32 %v2888, 7
  %v2890 = vsub.s32 0, %v2889
  %v2891 = vrot.slane %v2848, %v2890
  %v2892 = vlaneseq
  %v2893 = vshrl.u32 %v2892, 7
  %v2894 = vsub.s32 0, %v2893
  %v2895 = vrot.slane %v2856, %v2894
  %v2896 = vlaneseq
  %v2897 = vshrl.u32 %v2896, 7
  %v2898 = vsub.s32 0, %v2897
  %v2899 = vrot.slane %v2858, %v2898
  %v2900 = vlaneseq
  %v2901 = vshrl.u32 %v2900, 7
  %v2902 = vsub.s32 0, %v2901
  %v2903 = vrot.slane %v2841, %v2902
  %v2904 = vlaneseq
  %v2905 = vshrl.u32 %v2904, 7
  %v2906 = vsub.s32 0, %v2905
  %v2907 = vrot.slane %v2855, %v2906
  %v2908 = vlaneseq
  %v2909 = vshrl.u32 %v2908, 7
  %v2910 = vsub.s32 0, %v2909
  %v2911 = vrot.slane %v2857, %v2910
  %v2912 = vlaneseq
  %v2913 = vshrl.u32 %v2912, 7
  %v2914 = vsub.s32 0, %v2913
  %v2915 = vrot.slane %v2859, %v2914
  %v2916 = vlaneseq
  %v2917 = vshrl.u32 %v2916, 7
  %v2918 = vsub.s32 0, %v2917
  %v2919 = vrot.slane %v2874, %v2918
  %v2920 = vlaneseq
  %v2921 = vshrl.u32 %v2920, 7
  %v2922 = vsub.s32 0, %v2921
  %v2923 = vrot.slane %v2881, %v2922
  %v2924 = vlaneseq
  %v2925 = vshrl.u32 %v2924, 7
  %v2926 = vsub.s32 0, %v2925
  %v2927 = vrot.slane %v2882, %v2926
  %v2928 = vlaneseq
  %v2929 = vshrl.u32 %v2928, 7
  %v2930 = vsub.s32 0, %v2929
  %v2931 = vrot.slane %v2883, %v2930
  %v2944 = vmul.f32 %v2887, %v792
  %v2945 = vmul.f32 %v2887, %v795
  %v2946 = vmul.f32 %v2891, %v792
  %v2947 = vmul.f32 %v2891, %v795
  %v2948 = vmul.f32 %v2895, %v792
  %v2949 = vmul.f32 %v2895, %v795
  %v2950 = vmul.f32 %v2899, %v792
  %v2951 = vmul.f32 %v2899, %v795
  %v2952 = vmul.f32 %v2903, %v792
  %v2953 = vmul.f32 %v2903, %v795
  %v2954 = vmul.f32 %v2907, %v792
  %v2955 = vmul.f32 %v2907, %v795
  %v2956 = vmul.f32 %v2911, %v792
  %v2957 = vmul.f32 %v2911, %v795
  %v2958 = vmul.f32 %v2915, %v792
  %v2959 = vmul.f32 %v2915, %v795
  %v2960 = vmul.f32 %v2919, %v792
  %v2961 = vmul.f32 %v2919, %v795
  %v2962 = vmul.f32 %v2923, %v792
  %v2963 = vmul.f32 %v2923, %v795
  %v2964 = vmul.f32 %v2927, %v792
  %v2965 = vmul.f32 %v2927, %v795
  %v2966 = vmul.f32 %v2931, %v792
  %v2967 = vmul.f32 %v2931, %v795
  %v2968 = vadd.f32 %v2785, %v2944
  %v2969 = vadd.f32 %v2786, %v2945
  %v2970 = vadd.f32 %v2787, %v2946
  %v2971 = vadd.f32 %v2788, %v2947
  %v2972 = vadd.f32 %v2789, %v2948
  %v2973 = vadd.f32 %v2790, %v2949
  %v2974 = vadd.f32 %v2791, %v2950
  %v2975 = vadd.f32 %v2792, %v2951
  %v2976 = vadd.f32 %v2793, %v2952
  %v2977 = vadd.f32 %v2794, %v2953
  %v2978 = vadd.f32 %v2795, %v2954
  %v2979 = vadd.f32 %v2796, %v2955
  %v2980 = vadd.f32 %v2797, %v2956
  %v2981 = vadd.f32 %v2798, %v2957
  %v2982 = vadd.f32 %v2799, %v2958
  %v2983 = vadd.f32 %v2800, %v2959
  %v2984 = vadd.f32 %v2801, %v2960
  %v2985 = vadd.f32 %v2802, %v2961
  %v2986 = vadd.f32 %v2803, %v2962
  %v2987 = vadd.f32 %v2804, %v2963
  %v2988 = vadd.f32 %v2805, %v2964
  %v2989 = vadd.f32 %v2806, %v2965
  %v2990 = vadd.f32 %v2807, %v2966
  %v2991 = vadd.f32 %v2808, %v2967
  %v2994 = vcombine.high %v1363, %v1363
  %v2996 = vunpack.c.l.s4 1966171168
  %v2997 = vunpack.c.0.s8 %v2996
  %v2998 = vlaneseq
  %v2999 = vshrl.u32 %v2998, 7
  %v3000 = vsub.s32 %v2997, %v2999
  %v3001 = vrot.slane %v1363, %v3000
  %v3003 = vunpack.c.l.s4 1966171168
  %v3004 = vunpack.c.0.s8 %v3003
  %v3005 = vlaneseq
  %v3006 = vshrl.u32 %v3005, 7
  %v3007 = vsub.s32 %v3004, %v3006
  %v3008 = vrot.slane %v2994, %v3007
  %v3009 = vcombine.high %v3001, %v3001
  %v3010 = vcombine.high %v3008, %v3008
  %v3012 = vunpack.c.l.s4 1966171168
  %v3013 = vunpack.c.0.s8 %v3012
  %v3014 = vlaneseq
  %v3015 = vshrl.u32 %v3014, 7
  %v3016 = vsub.s32 %v3013, %v3015
  %v3017 = vrot.slane %v3001, %v3016
  %v3019 = vunpack.c.l.s4 1966171168
  %v3020 = vunpack.c.0.s8 %v3019
  %v3021 = vlaneseq
  %v3022 = vshrl.u32 %v3021, 7
  %v3023 = vsub.s32 %v3020, %v3022
  %v3024 = vrot.slane %v3008, %v3023
  %v3026 = vunpack.c.l.s4 1966171168
  %v3027 = vunpack.c.0.s8 %v3026
  %v3028 = vlaneseq
  %v3029 = vshrl.u32 %v3028, 7
  %v3030 = vsub.s32 %v3027, %v3029
  %v3031 = vrot.slane %v3009, %v3030
  %v3033 = vunpack.c.l.s4 1966171168
  %v3034 = vunpack.c.0.s8 %v3033
  %v3035 = vlaneseq
  %v3036 = vshrl.u32 %v3035, 7
  %v3037 = vsub.s32 %v3034, %v3036
  %v3038 = vrot.slane %v3010, %v3037
  %v3039 = vcombine.high %v3017, %v3017
  %v3040 = vcombine.high %v3024, %v3024
  %v3041 = vcombine.high %v3031, %v3031
  %v3042 = vcombine.high %v3038, %v3038
  %v3044 = vunpack.c.l.s4 1966171168
  %v3045 = vunpack.c.0.s8 %v3044
  %v3046 = vlaneseq
  %v3047 = vshrl.u32 %v3046, 7
  %v3048 = vsub.s32 %v3045, %v3047
  %v3049 = vrot.slane %v1364, %v3048
  %v3050 = vcombine.high %v3049, %v3049
  %v3052 = vunpack.c.l.s4 1966171168
  %v3053 = vunpack.c.0.s8 %v3052
  %v3054 = vlaneseq
  %v3055 = vshrl.u32 %v3054, 7
  %v3056 = vsub.s32 %v3053, %v3055
  %v3057 = vrot.slane %v3049, %v3056
  %v3059 = vunpack.c.l.s4 1966171168
  %v3060 = vunpack.c.0.s8 %v3059
  %v3061 = vlaneseq
  %v3062 = vshrl.u32 %v3061, 7
  %v3063 = vsub.s32 %v3060, %v3062
  %v3064 = vrot.slane %v3050, %v3063
  %v3065 = vcombine.high %v3057, %v3057
  %v3066 = vcombine.high %v3064, %v3064
  %v3067 = vlaneseq
  %v3068 = vshrl.u32 %v3067, 7
  %v3069 = vsub.s32 0, %v3068
  %v3070 = vrot.slane %v3017, %v3069
  %v3071 = vlaneseq
  %v3072 = vshrl.u32 %v3071, 7
  %v3073 = vsub.s32 0, %v3072
  %v3074 = vrot.slane %v3031, %v3073
  %v3075 = vlaneseq
  %v3076 = vshrl.u32 %v3075, 7
  %v3077 = vsub.s32 0, %v3076
  %v3078 = vrot.slane %v3039, %v3077
  %v3079 = vlaneseq
  %v3080 = vshrl.u32 %v3079, 7
  %v3081 = vsub.s32 0, %v3080
  %v3082 = vrot.slane %v3041, %v3081
  %v3083 = vlaneseq
  %v3084 = vshrl.u32 %v3083, 7
  %v3085 = vsub.s32 0, %v3084
  %v3086 = vrot.slane %v3024, %v3085
  %v3087 = vlaneseq
  %v3088 = vshrl.u32 %v3087, 7
  %v3089 = vsub.s32 0, %v3088
  %v3090 = vrot.slane %v3038, %v3089
  %v3091 = vlaneseq
  %v3092 = vshrl.u32 %v3091, 7
  %v3093 = vsub.s32 0, %v3092
  %v3094 = vrot.slane %v3040, %v3093
  %v3095 = vlaneseq
  %v3096 = vshrl.u32 %v3095, 7
  %v3097 = vsub.s32 0, %v3096
  %v3098 = vrot.slane %v3042, %v3097
  %v3099 = vlaneseq
  %v3100 = vshrl.u32 %v3099, 7
  %v3101 = vsub.s32 0, %v3100
  %v3102 = vrot.slane %v3057, %v3101
  %v3103 = vlaneseq
  %v3104 = vshrl.u32 %v3103, 7
  %v3105 = vsub.s32 0, %v3104
  %v3106 = vrot.slane %v3064, %v3105
  %v3107 = vlaneseq
  %v3108 = vshrl.u32 %v3107, 7
  %v3109 = vsub.s32 0, %v3108
  %v3110 = vrot.slane %v3065, %v3109
  %v3111 = vlaneseq
  %v3112 = vshrl.u32 %v3111, 7
  %v3113 = vsub.s32 0, %v3112
  %v3114 = vrot.slane %v3066, %v3113
  %v3127 = vmul.f32 %v3070, %v800
  %v3128 = vmul.f32 %v3070, %v803
  %v3129 = vmul.f32 %v3074, %v800
  %v3130 = vmul.f32 %v3074, %v803
  %v3131 = vmul.f32 %v3078, %v800
  %v3132 = vmul.f32 %v3078, %v803
  %v3133 = vmul.f32 %v3082, %v800
  %v3134 = vmul.f32 %v3082, %v803
  %v3135 = vmul.f32 %v3086, %v800
  %v3136 = vmul.f32 %v3086, %v803
  %v3137 = vmul.f32 %v3090, %v800
  %v3138 = vmul.f32 %v3090, %v803
  %v3139 = vmul.f32 %v3094, %v800
  %v3140 = vmul.f32 %v3094, %v803
  %v3141 = vmul.f32 %v3098, %v800
  %v3142 = vmul.f32 %v3098, %v803
  %v3143 = vmul.f32 %v3102, %v800
  %v3144 = vmul.f32 %v3102, %v803
  %v3145 = vmul.f32 %v3106, %v800
  %v3146 = vmul.f32 %v3106, %v803
  %v3147 = vmul.f32 %v3110, %v800
  %v3148 = vmul.f32 %v3110, %v803
  %v3149 = vmul.f32 %v3114, %v800
  %v3150 = vmul.f32 %v3114, %v803
  %v3151 = vadd.f32 %v2968, %v3127
  %v3152 = vadd.f32 %v2969, %v3128
  %v3153 = vadd.f32 %v2970, %v3129
  %v3154 = vadd.f32 %v2971, %v3130
  %v3155 = vadd.f32 %v2972, %v3131
  %v3156 = vadd.f32 %v2973, %v3132
  %v3157 = vadd.f32 %v2974, %v3133
  %v3158 = vadd.f32 %v2975, %v3134
  %v3159 = vadd.f32 %v2976, %v3135
  %v3160 = vadd.f32 %v2977, %v3136
  %v3161 = vadd.f32 %v2978, %v3137
  %v3162 = vadd.f32 %v2979, %v3138
  %v3163 = vadd.f32 %v2980, %v3139
  %v3164 = vadd.f32 %v2981, %v3140
  %v3165 = vadd.f32 %v2982, %v3141
  %v3166 = vadd.f32 %v2983, %v3142
  %v3167 = vadd.f32 %v2984, %v3143
  %v3168 = vadd.f32 %v2985, %v3144
  %v3169 = vadd.f32 %v2986, %v3145
  %v3170 = vadd.f32 %v2987, %v3146
  %v3171 = vadd.f32 %v2988, %v3147
  %v3172 = vadd.f32 %v2989, %v3148
  %v3173 = vadd.f32 %v2990, %v3149
  %v3174 = vadd.f32 %v2991, %v3150
  %v3177 = vcombine.high %v1365, %v1365
  %v3179 = vunpack.c.l.s4 1966171168
  %v3180 = vunpack.c.0.s8 %v3179
  %v3181 = vlaneseq
  %v3182 = vshrl.u32 %v3181, 7
  %v3183 = vsub.s32 %v3180, %v3182
  %v3184 = vrot.slane %v1365, %v3183
  %v3186 = vunpack.c.l.s4 1966171168
  %v3187 = vunpack.c.0.s8 %v3186
  %v3188 = vlaneseq
  %v3189 = vshrl.u32 %v3188, 7
  %v3190 = vsub.s32 %v3187, %v3189
  %v3191 = vrot.slane %v3177, %v3190
  %v3192 = vcombine.high %v3184, %v3184
  %v3193 = vcombine.high %v3191, %v3191
  %v3195 = vunpack.c.l.s4 1966171168
  %v3196 = vunpack.c.0.s8 %v3195
  %v3197 = vlaneseq
  %v3198 = vshrl.u32 %v3197, 7
  %v3199 = vsub.s32 %v3196, %v3198
  %v3200 = vrot.slane %v3184, %v3199
  %v3202 = vunpack.c.l.s4 1966171168
  %v3203 = vunpack.c.0.s8 %v3202
  %v3204 = vlaneseq
  %v3205 = vshrl.u32 %v3204, 7
  %v3206 = vsub.s32 %v3203, %v3205
  %v3207 = vrot.slane %v3191, %v3206
  %v3209 = vunpack.c.l.s4 1966171168
  %v3210 = vunpack.c.0.s8 %v3209
  %v3211 = vlaneseq
  %v3212 = vshrl.u32 %v3211, 7
  %v3213 = vsub.s32 %v3210, %v3212
  %v3214 = vrot.slane %v3192, %v3213
  %v3216 = vunpack.c.l.s4 1966171168
  %v3217 = vunpack.c.0.s8 %v3216
  %v3218 = vlaneseq
  %v3219 = vshrl.u32 %v3218, 7
  %v3220 = vsub.s32 %v3217, %v3219
  %v3221 = vrot.slane %v3193, %v3220
  %v3222 = vcombine.high %v3200, %v3200
  %v3223 = vcombine.high %v3207, %v3207
  %v3224 = vcombine.high %v3214, %v3214
  %v3225 = vcombine.high %v3221, %v3221
  %v3227 = vunpack.c.l.s4 1966171168
  %v3228 = vunpack.c.0.s8 %v3227
  %v3229 = vlaneseq
  %v3230 = vshrl.u32 %v3229, 7
  %v3231 = vsub.s32 %v3228, %v3230
  %v3232 = vrot.slane %v1366, %v3231
  %v3233 = vcombine.high %v3232, %v3232
  %v3235 = vunpack.c.l.s4 1966171168
  %v3236 = vunpack.c.0.s8 %v3235
  %v3237 = vlaneseq
  %v3238 = vshrl.u32 %v3237, 7
  %v3239 = vsub.s32 %v3236, %v3238
  %v3240 = vrot.slane %v3232, %v3239
  %v3242 = vunpack.c.l.s4 1966171168
  %v3243 = vunpack.c.0.s8 %v3242
  %v3244 = vlaneseq
  %v3245 = vshrl.u32 %v3244, 7
  %v3246 = vsub.s32 %v3243, %v3245
  %v3247 = vrot.slane %v3233, %v3246
  %v3248 = vcombine.high %v3240, %v3240
  %v3249 = vcombine.high %v3247, %v3247
  %v3250 = vlaneseq
  %v3251 = vshrl.u32 %v3250, 7
  %v3252 = vsub.s32 0, %v3251
  %v3253 = vrot.slane %v3200, %v3252
  %v3254 = vlaneseq
  %v3255 = vshrl.u32 %v3254, 7
  %v3256 = vsub.s32 0, %v3255
  %v3257 = vrot.slane %v3214, %v3256
  %v3258 = vlaneseq
  %v3259 = vshrl.u32 %v3258, 7
  %v3260 = vsub.s32 0, %v3259
  %v3261 = vrot.slane %v3222, %v3260
  %v3262 = vlaneseq
  %v3263 = vshrl.u32 %v3262, 7
  %v3264 = vsub.s32 0, %v3263
  %v3265 = vrot.slane %v3224, %v3264
  %v3266 = vlaneseq
  %v3267 = vshrl.u32 %v3266, 7
  %v3268 = vsub.s32 0, %v3267
  %v3269 = vrot.slane %v3207, %v3268
  %v3270 = vlaneseq
  %v3271 = vshrl.u32 %v3270, 7
  %v3272 = vsub.s32 0, %v3271
  %v3273 = vrot.slane %v3221, %v3272
  %v3274 = vlaneseq
  %v3275 = vshrl.u32 %v3274, 7
  %v3276 = vsub.s32 0, %v3275
  %v3277 = vrot.slane %v3223, %v3276
  %v3278 = vlaneseq
  %v3279 = vshrl.u32 %v3278, 7
  %v3280 = vsub.s32 0, %v3279
  %v3281 = vrot.slane %v3225, %v3280
  %v3282 = vlaneseq
  %v3283 = vshrl.u32 %v3282, 7
  %v3284 = vsub.s32 0, %v3283
  %v3285 = vrot.slane %v3240, %v3284
  %v3286 = vlaneseq
  %v3287 = vshrl.u32 %v3286, 7
  %v3288 = vsub.s32 0, %v3287
  %v3289 = vrot.slane %v3247, %v3288
  %v3290 = vlaneseq
  %v3291 = vshrl.u32 %v3290, 7
  %v3292 = vsub.s32 0, %v3291
  %v3293 = vrot.slane %v3248, %v3292
  %v3294 = vlaneseq
  %v3295 = vshrl.u32 %v3294, 7
  %v3296 = vsub.s32 0, %v3295
  %v3297 = vrot.slane %v3249, %v3296
  %v3310 = vmul.f32 %v3253, %v808
  %v3311 = vmul.f32 %v3253, %v811
  %v3312 = vmul.f32 %v3257, %v808
  %v3313 = vmul.f32 %v3257, %v811
  %v3314 = vmul.f32 %v3261, %v808
  %v3315 = vmul.f32 %v3261, %v811
  %v3316 = vmul.f32 %v3265, %v808
  %v3317 = vmul.f32 %v3265, %v811
  %v3318 = vmul.f32 %v3269, %v808
  %v3319 = vmul.f32 %v3269, %v811
  %v3320 = vmul.f32 %v3273, %v808
  %v3321 = vmul.f32 %v3273, %v811
  %v3322 = vmul.f32 %v3277, %v808
  %v3323 = vmul.f32 %v3277, %v811
  %v3324 = vmul.f32 %v3281, %v808
  %v3325 = vmul.f32 %v3281, %v811
  %v3326 = vmul.f32 %v3285, %v808
  %v3327 = vmul.f32 %v3285, %v811
  %v3328 = vmul.f32 %v3289, %v808
  %v3329 = vmul.f32 %v3289, %v811
  %v3330 = vmul.f32 %v3293, %v808
  %v3331 = vmul.f32 %v3293, %v811
  %v3332 = vmul.f32 %v3297, %v808
  %v3333 = vmul.f32 %v3297, %v811
  %v3334 = vadd.f32 %v3151, %v3310
  %v3335 = vadd.f32 %v3152, %v3311
  %v3336 = vadd.f32 %v3153, %v3312
  %v3337 = vadd.f32 %v3154, %v3313
  %v3338 = vadd.f32 %v3155, %v3314
  %v3339 = vadd.f32 %v3156, %v3315
  %v3340 = vadd.f32 %v3157, %v3316
  %v3341 = vadd.f32 %v3158, %v3317
  %v3342 = vadd.f32 %v3159, %v3318
  %v3343 = vadd.f32 %v3160, %v3319
  %v3344 = vadd.f32 %v3161, %v3320
  %v3345 = vadd.f32 %v3162, %v3321
  %v3346 = vadd.f32 %v3163, %v3322
  %v3347 = vadd.f32 %v3164, %v3323
  %v3348 = vadd.f32 %v3165, %v3324
  %v3349 = vadd.f32 %v3166, %v3325
  %v3350 = vadd.f32 %v3167, %v3326
  %v3351 = vadd.f32 %v3168, %v3327
  %v3352 = vadd.f32 %v3169, %v3328
  %v3353 = vadd.f32 %v3170, %v3329
  %v3354 = vadd.f32 %v3171, %v3330
  %v3355 = vadd.f32 %v3172, %v3331
  %v3356 = vadd.f32 %v3173, %v3332
  %v3357 = vadd.f32 %v3174, %v3333
  %v3360 = vcombine.high %v1367, %v1367
  %v3362 = vunpack.c.l.s4 1966171168
  %v3363 = vunpack.c.0.s8 %v3362
  %v3364 = vlaneseq
  %v3365 = vshrl.u32 %v3364, 7
  %v3366 = vsub.s32 %v3363, %v3365
  %v3367 = vrot.slane %v1367, %v3366
  %v3369 = vunpack.c.l.s4 1966171168
  %v3370 = vunpack.c.0.s8 %v3369
  %v3371 = vlaneseq
  %v3372 = vshrl.u32 %v3371, 7
  %v3373 = vsub.s32 %v3370, %v3372
  %v3374 = vrot.slane %v3360, %v3373
  %v3375 = vcombine.high %v3367, %v3367
  %v3376 = vcombine.high %v3374, %v3374
  %v3378 = vunpack.c.l.s4 1966171168
  %v3379 = vunpack.c.0.s8 %v3378
  %v3380 = vlaneseq
  %v3381 = vshrl.u32 %v3380, 7
  %v3382 = vsub.s32 %v3379, %v3381
  %v3383 = vrot.slane %v3367, %v3382
  %v3385 = vunpack.c.l.s4 1966171168
  %v3386 = vunpack.c.0.s8 %v3385
  %v3387 = vlaneseq
  %v3388 = vshrl.u32 %v3387, 7
  %v3389 = vsub.s32 %v3386, %v3388
  %v3390 = vrot.slane %v3374, %v3389
  %v3392 = vunpack.c.l.s4 1966171168
  %v3393 = vunpack.c.0.s8 %v3392
  %v3394 = vlaneseq
  %v3395 = vshrl.u32 %v3394, 7
  %v3396 = vsub.s32 %v3393, %v3395
  %v3397 = vrot.slane %v3375, %v3396
  %v3399 = vunpack.c.l.s4 1966171168
  %v3400 = vunpack.c.0.s8 %v3399
  %v3401 = vlaneseq
  %v3402 = vshrl.u32 %v3401, 7
  %v3403 = vsub.s32 %v3400, %v3402
  %v3404 = vrot.slane %v3376, %v3403
  %v3405 = vcombine.high %v3383, %v3383
  %v3406 = vcombine.high %v3390, %v3390
  %v3407 = vcombine.high %v3397, %v3397
  %v3408 = vcombine.high %v3404, %v3404
  %v3410 = vunpack.c.l.s4 1966171168
  %v3411 = vunpack.c.0.s8 %v3410
  %v3412 = vlaneseq
  %v3413 = vshrl.u32 %v3412, 7
  %v3414 = vsub.s32 %v3411, %v3413
  %v3415 = vrot.slane %v1368, %v3414
  %v3416 = vcombine.high %v3415, %v3415
  %v3418 = vunpack.c.l.s4 1966171168
  %v3419 = vunpack.c.0.s8 %v3418
  %v3420 = vlaneseq
  %v3421 = vshrl.u32 %v3420, 7
  %v3422 = vsub.s32 %v3419, %v3421
  %v3423 = vrot.slane %v3415, %v3422
  %v3425 = vunpack.c.l.s4 1966171168
  %v3426 = vunpack.c.0.s8 %v3425
  %v3427 = vlaneseq
  %v3428 = vshrl.u32 %v3427, 7
  %v3429 = vsub.s32 %v3426, %v3428
  %v3430 = vrot.slane %v3416, %v3429
  %v3431 = vcombine.high %v3423, %v3423
  %v3432 = vcombine.high %v3430, %v3430
  %v3433 = vlaneseq
  %v3434 = vshrl.u32 %v3433, 7
  %v3435 = vsub.s32 0, %v3434
  %v3436 = vrot.slane %v3383, %v3435
  %v3437 = vlaneseq
  %v3438 = vshrl.u32 %v3437, 7
  %v3439 = vsub.s32 0, %v3438
  %v3440 = vrot.slane %v3397, %v3439
  %v3441 = vlaneseq
  %v3442 = vshrl.u32 %v3441, 7
  %v3443 = vsub.s32 0, %v3442
  %v3444 = vrot.slane %v3405, %v3443
  %v3445 = vlaneseq
  %v3446 = vshrl.u32 %v3445, 7
  %v3447 = vsub.s32 0, %v3446
  %v3448 = vrot.slane %v3407, %v3447
  %v3449 = vlaneseq
  %v3450 = vshrl.u32 %v3449, 7
  %v3451 = vsub.s32 0, %v3450
  %v3452 = vrot.slane %v3390, %v3451
  %v3453 = vlaneseq
  %v3454 = vshrl.u32 %v3453, 7
  %v3455 = vsub.s32 0, %v3454
  %v3456 = vrot.slane %v3404, %v3455
  %v3457 = vlaneseq
  %v3458 = vshrl.u32 %v3457, 7
  %v3459 = vsub.s32 0, %v3458
  %v3460 = vrot.slane %v3406, %v3459
  %v3461 = vlaneseq
  %v3462 = vshrl.u32 %v3461, 7
  %v3463 = vsub.s32 0, %v3462
  %v3464 = vrot.slane %v3408, %v3463
  %v3465 = vlaneseq
  %v3466 = vshrl.u32 %v3465, 7
  %v3467 = vsub.s32 0, %v3466
  %v3468 = vrot.slane %v3423, %v3467
  %v3469 = vlaneseq
  %v3470 = vshrl.u32 %v3469, 7
  %v3471 = vsub.s32 0, %v3470
  %v3472 = vrot.slane %v3430, %v3471
  %v3473 = vlaneseq
  %v3474 = vshrl.u32 %v3473, 7
  %v3475 = vsub.s32 0, %v3474
  %v3476 = vrot.slane %v3431, %v3475
  %v3477 = vlaneseq
  %v3478 = vshrl.u32 %v3477, 7
  %v3479 = vsub.s32 0, %v3478
  %v3480 = vrot.slane %v3432, %v3479
  %v3493 = vmul.f32 %v3436, %v816
  %v3494 = vmul.f32 %v3436, %v819
  %v3495 = vmul.f32 %v3440, %v816
  %v3496 = vmul.f32 %v3440, %v819
  %v3497 = vmul.f32 %v3444, %v816
  %v3498 = vmul.f32 %v3444, %v819
  %v3499 = vmul.f32 %v3448, %v816
  %v3500 = vmul.f32 %v3448, %v819
  %v3501 = vmul.f32 %v3452, %v816
  %v3502 = vmul.f32 %v3452, %v819
  %v3503 = vmul.f32 %v3456, %v816
  %v3504 = vmul.f32 %v3456, %v819
  %v3505 = vmul.f32 %v3460, %v816
  %v3506 = vmul.f32 %v3460, %v819
  %v3507 = vmul.f32 %v3464, %v816
  %v3508 = vmul.f32 %v3464, %v819
  %v3509 = vmul.f32 %v3468, %v816
  %v3510 = vmul.f32 %v3468, %v819
  %v3511 = vmul.f32 %v3472, %v816
  %v3512 = vmul.f32 %v3472, %v819
  %v3513 = vmul.f32 %v3476, %v816
  %v3514 = vmul.f32 %v3476, %v819
  %v3515 = vmul.f32 %v3480, %v816
  %v3516 = vmul.f32 %v3480, %v819
  %v3517 = vadd.f32 %v3334, %v3493
  %v3518 = vadd.f32 %v3335, %v3494
  %v3519 = vadd.f32 %v3336, %v3495
  %v3520 = vadd.f32 %v3337, %v3496
  %v3521 = vadd.f32 %v3338, %v3497
  %v3522 = vadd.f32 %v3339, %v3498
  %v3523 = vadd.f32 %v3340, %v3499
  %v3524 = vadd.f32 %v3341, %v3500
  %v3525 = vadd.f32 %v3342, %v3501
  %v3526 = vadd.f32 %v3343, %v3502
  %v3527 = vadd.f32 %v3344, %v3503
  %v3528 = vadd.f32 %v3345, %v3504
  %v3529 = vadd.f32 %v3346, %v3505
  %v3530 = vadd.f32 %v3347, %v3506
  %v3531 = vadd.f32 %v3348, %v3507
  %v3532 = vadd.f32 %v3349, %v3508
  %v3533 = vadd.f32 %v3350, %v3509
  %v3534 = vadd.f32 %v3351, %v3510
  %v3535 = vadd.f32 %v3352, %v3511
  %v3536 = vadd.f32 %v3353, %v3512
  %v3537 = vadd.f32 %v3354, %v3513
  %v3538 = vadd.f32 %v3355, %v3514
  %v3539 = vadd.f32 %v3356, %v3515
  %v3540 = vadd.f32 %v3357, %v3516
  %v3541 = vld [vmem:[%s4] sm:$0xff]
  %v3542 = vld [vmem:[%s4 + $0x8] sm:$0xff]
  %v3543 = vld [vmem:[%s4 + $0x10] sm:$0xff]
  %v3544 = vld [vmem:[%s4 + $0x18] sm:$0xff]
  %v3545 = vld [vmem:[%s4 + $0x20] sm:$0xff]
  %v3546 = vld [vmem:[%s4 + $0x28] sm:$0xff]
  %v3547 = vld [vmem:[%s4 + $0x30] sm:$0xff]
  %v3548 = vld [vmem:[%s4 + $0x38] sm:$0xff]
  %v3549 = vpack.c.bf16 %v3518, %v3517
  %v3550 = vpack.c.bf16 %v3520, %v3519
  %v3551 = vpack.c.bf16 %v3522, %v3521
  %v3552 = vpack.c.bf16 %v3524, %v3523
  %v3553 = vpack.c.bf16 %v3526, %v3525
  %v3554 = vpack.c.bf16 %v3528, %v3527
  %v3555 = vpack.c.bf16 %v3530, %v3529
  %v3556 = vpack.c.bf16 %v3532, %v3531
  %v3557 = vpack.c.bf16 %v3534, %v3533
  %v3558 = vpack.c.bf16 %v3536, %v3535
  %v3559 = vpack.c.bf16 %v3538, %v3537
  %v3560 = vpack.c.bf16 %v3540, %v3539
  %v3561 = vld [vmem:[%s5] sm:$0xff]
  %v3562 = vld [vmem:[%s5 + $0x8] sm:$0xff]
  %v3563 = vld [vmem:[%s5 + $0x10] sm:$0xff]
  %v3564 = vld [vmem:[%s5 + $0x18] sm:$0xff]
  %v3565 = vld [vmem:[%s5 + $0x20] sm:$0xff]
  %v3566 = vld [vmem:[%s5 + $0x28] sm:$0xff]
  %v3567 = vld [vmem:[%s5 + $0x30] sm:$0xff]
  %v3568 = vld [vmem:[%s5 + $0x38] sm:$0xff]
  %3570 = vset.pattern.permute.xlu0 0
  %3571 = vperm.xlu0 %3570, %v3561
  %v3572 = vpop.permute.xlu0 %3571
  %3575 = vset.pattern.permute.xlu0 0
  %3576 = vperm.xlu0 %3575, %v3562
  %v3577 = vpop.permute.xlu0 %3576
  %3580 = vset.pattern.permute.xlu0 0
  %3581 = vperm.xlu0 %3580, %v3563
  %v3582 = vpop.permute.xlu0 %3581
  %3585 = vset.pattern.permute.xlu0 0
  %3586 = vperm.xlu0 %3585, %v3564
  %v3587 = vpop.permute.xlu0 %3586
  %3590 = vset.pattern.permute.xlu0 0
  %3591 = vperm.xlu0 %3590, %v3565
  %v3592 = vpop.permute.xlu0 %3591
  %3595 = vset.pattern.permute.xlu0 0
  %3596 = vperm.xlu0 %3595, %v3566
  %v3597 = vpop.permute.xlu0 %3596
  %3600 = vset.pattern.permute.xlu0 0
  %3601 = vperm.xlu0 %3600, %v3567
  %v3602 = vpop.permute.xlu0 %3601
  %3605 = vset.pattern.permute.xlu0 0
  %3606 = vperm.xlu0 %3605, %v3568
  %v3607 = vpop.permute.xlu0 %3606
  %v3617 = vunpack.c.l.b16 %v3541
  %v3618 = vunpack.c.h.b16 %v3541
  %v3619 = vunpack.c.l.b16 %v3542
  %v3620 = vunpack.c.h.b16 %v3542
  %v3621 = vunpack.c.l.b16 %v3543
  %v3622 = vunpack.c.h.b16 %v3543
  %v3623 = vunpack.c.l.b16 %v3544
  %v3624 = vunpack.c.h.b16 %v3544
  %v3625 = vunpack.c.l.b16 %v3545
  %v3626 = vunpack.c.h.b16 %v3545
  %v3627 = vunpack.c.l.b16 %v3546
  %v3628 = vunpack.c.h.b16 %v3546
  %v3629 = vunpack.c.l.b16 %v3547
  %v3630 = vunpack.c.h.b16 %v3547
  %v3631 = vunpack.c.l.b16 %v3548
  %v3632 = vunpack.c.h.b16 %v3548
  %v3633 = vpack.c.b16 %v3619, %v3617
  %v3634 = vpack.c.b16 %v3620, %v3618
  %v3635 = vpack.c.b16 %v3623, %v3621
  %v3636 = vpack.c.b16 %v3624, %v3622
  %v3637 = vpack.c.b16 %v3627, %v3625
  %v3638 = vpack.c.b16 %v3628, %v3626
  %v3639 = vpack.c.b16 %v3631, %v3629
  %v3640 = vpack.c.b16 %v3632, %v3630
  %v3646 = vsel %vm650, %v3634, 0
  %v3649 = vsel %vm650, %v3636, 0
  %v3652 = vsel %vm650, %v3638, 0
  %v3655 = vsel %vm650, %v3640, 0
  %3657 = vmatprep.subr.bf16.mxu0 0
  %3658 = vmatpush1.bf16.msra.mxu0 %v3549
  %3659 = vmatprep.subr.bf16.mxu0 0
  %3660 = vmatpush1.bf16.msra.mxu0 %v3550
  %3661 = vmatprep.subr.bf16.mxu0 0
  %3662 = vmatpush1.bf16.msra.mxu0 %v3551
  %3663 = vmatprep.subr.bf16.mxu0 0
  %3664 = vmatpush1.bf16.msra.mxu0 %v3552
  %3665 = vmatprep.subr.bf16.mxu0 0
  %3666 = vmatpush1.bf16.msra.mxu0 %v3553
  %3667 = vmatprep.subr.bf16.mxu0 0
  %3668 = vmatpush1.bf16.msra.mxu0 %v3554
  %3669 = vmatprep.subr.bf16.mxu0 0
  %3670 = vmatpush1.bf16.msra.mxu0 %v3555
  %3671 = vmatprep.subr.bf16.mxu0 0
  %3672 = vmatpush1.bf16.msra.mxu0 %v3556
  %3673 = vmatprep.subr.bf16.mxu0 0
  %3674 = vmatpush1.bf16.msra.mxu0 %v3557
  %3675 = vmatprep.subr.bf16.mxu0 0
  %3676 = vmatpush1.bf16.msra.mxu0 %v3558
  %3677 = vmatprep.subr.bf16.mxu0 0
  %3678 = vmatpush1.bf16.msra.mxu0 %v3559
  %3679 = vmatprep.subr.bf16.mxu0 0
  %3680 = vmatpush1.bf16.msra.mxu0 %v3560
  %3681 = vmatprep.subr.bf16.mxu0 0
  %3682 = vmatpush1.bf16.msra.mxu0 0
  %3683 = vmatprep.subr.bf16.mxu0 0
  %3684 = vmatpush1.bf16.msra.mxu0 0
  %3685 = vmatprep.subr.bf16.mxu0 0
  %3686 = vmatpush1.bf16.msra.mxu0 0
  %3687 = vmatprep.subr.bf16.mxu0 0
  %3688 = vmatpush1.bf16.msra.mxu0 0
  %3689 = vmatprep.mubr.bf16.mxu0 %v3646
  %3690 = vmatmul.mubr.bf16.gmra.mrb[0].mxu0 %v3633
  %v3691 = vpop.f32.mrb[0].mxu0
  %v3692 = vadd.f32 %v3572, %v3691
  %v3693 = vpop.f32.mrb[0].mxu0
  %v3694 = vpop.f32.mrb[0].mxu0
  %v3695 = vadd.f32 %v3577, %v3694
  %v3696 = vpop.f32.mrb[0].mxu0
  %3697 = vmatprep.mubr.bf16.mxu0 %v3649
  %3698 = vmatmul.mubr.bf16.gmra.mrb[0].mxu0 %v3635
  %v3699 = vpop.f32.mrb[0].mxu0
  %v3700 = vadd.f32 %v3582, %v3699
  %v3701 = vpop.f32.mrb[0].mxu0
  %v3702 = vpop.f32.mrb[0].mxu0
  %v3703 = vadd.f32 %v3587, %v3702
  %v3704 = vpop.f32.mrb[0].mxu0
  %3705 = vmatprep.mubr.bf16.mxu0 %v3652
  %3706 = vmatmul.mubr.bf16.gmra.mrb[0].mxu0 %v3637
  %v3707 = vpop.f32.mrb[0].mxu0
  %v3708 = vadd.f32 %v3592, %v3707
  %v3709 = vpop.f32.mrb[0].mxu0
  %v3710 = vpop.f32.mrb[0].mxu0
  %v3711 = vadd.f32 %v3597, %v3710
  %v3712 = vpop.f32.mrb[0].mxu0
  %3713 = vmatprep.mubr.bf16.mxu0 %v3655
  %3714 = vmatmul.mubr.bf16.gmra.mrb[0].mxu0 %v3639
  %v3715 = vpop.f32.mrb[0].mxu0
  %v3716 = vadd.f32 %v3602, %v3715
  %v3717 = vpop.f32.mrb[0].mxu0
  %v3718 = vpop.f32.mrb[0].mxu0
  %v3719 = vadd.f32 %v3607, %v3718
  %v3720 = vpop.f32.mrb[0].mxu0
  %3721 = vdwg.mxu0
  %v3722 = vmax.f32 %v3692, 0.0
  %v3723 = vmax.f32 %v3695, 0.0
  %v3724 = vmax.f32 %v3700, 0.0
  %v3725 = vmax.f32 %v3703, 0.0
  %v3726 = vmax.f32 %v3708, 0.0
  %v3727 = vmax.f32 %v3711, 0.0
  %v3728 = vmax.f32 %v3716, 0.0
  %v3729 = vmax.f32 %v3719, 0.0
  %3730 = vrot.lane.b32.xlu0 %v3722, 1
  %v3731 = vpop.permute.xlu0 %3730
  %3732 = vrot.lane.b32.xlu0 %v3723, 1
  %v3733 = vpop.permute.xlu0 %3732
  %3734 = vrot.lane.b32.xlu0 %v3724, 1
  %v3735 = vpop.permute.xlu0 %3734
  %3736 = vrot.lane.b32.xlu0 %v3725, 1
  %v3737 = vpop.permute.xlu0 %3736
  %3738 = vrot.lane.b32.xlu0 %v3726, 1
  %v3739 = vpop.permute.xlu0 %3738
  %3740 = vrot.lane.b32.xlu0 %v3727, 1
  %v3741 = vpop.permute.xlu0 %3740
  %3742 = vrot.lane.b32.xlu0 %v3728, 1
  %v3743 = vpop.permute.xlu0 %3742
  %3744 = vrot.lane.b32.xlu0 %v3729, 1
  %v3745 = vpop.permute.xlu0 %3744
  %v3746 = vsel %vm58, 1, 0
  %vm3747 = vcmp.eq.s32.totalorder %v3746, 1
  %v3748 = vsel %vm3747, %v3731, 0.0
  %v3749 = vsel %vm3747, %v3733, 0.0
  %v3750 = vsel %vm3747, %v3735, 0.0
  %v3751 = vsel %vm3747, %v3737, 0.0
  %v3752 = vsel %vm3747, %v3739, 0.0
  %v3753 = vsel %vm3747, %v3741, 0.0
  %v3754 = vsel %vm3747, %v3743, 0.0
  %v3755 = vsel %vm3747, %v3745, 0.0
  %3756 = vrot.lane.b32.xlu0 %v3722, 127
  %v3757 = vpop.permute.xlu0 %3756
  %3758 = vrot.lane.b32.xlu0 %v3723, 127
  %v3759 = vpop.permute.xlu0 %3758
  %3760 = vrot.lane.b32.xlu0 %v3724, 127
  %v3761 = vpop.permute.xlu0 %3760
  %3762 = vrot.lane.b32.xlu0 %v3725, 127
  %v3763 = vpop.permute.xlu0 %3762
  %3764 = vrot.lane.b32.xlu0 %v3726, 127
  %v3765 = vpop.permute.xlu0 %3764
  %3766 = vrot.lane.b32.xlu0 %v3727, 127
  %v3767 = vpop.permute.xlu0 %3766
  %3768 = vrot.lane.b32.xlu0 %v3728, 127
  %v3769 = vpop.permute.xlu0 %3768
  %3770 = vrot.lane.b32.xlu0 %v3729, 127
  %v3771 = vpop.permute.xlu0 %3770
  %v3772 = vsel %vm60, 1, 0
  %vm3773 = vcmp.eq.s32.totalorder %v3772, 1
  %v3774 = vsel %vm3773, %v3757, 0.0
  %v3775 = vsel %vm3773, %v3759, 0.0
  %v3776 = vsel %vm3773, %v3761, 0.0
  %v3777 = vsel %vm3773, %v3763, 0.0
  %v3778 = vsel %vm3773, %v3765, 0.0
  %v3779 = vsel %vm3773, %v3767, 0.0
  %v3780 = vsel %vm3773, %v3769, 0.0
  %v3781 = vsel %vm3773, %v3771, 0.0
  %v3782 = vpack.c.bf16 %v3749, %v3748
  %v3783 = vpack.c.bf16 %v3751, %v3750
  %v3784 = vpack.c.bf16 %v3753, %v3752
  %v3785 = vpack.c.bf16 %v3755, %v3754
  %3786 = vst [vmem:[#allocation2] sm:$0xff] %v3782
  %3787 = vst [vmem:[#allocation2 + $0x8] sm:$0xff] %v3783
  %3788 = vst [vmem:[#allocation2 + $0x10] sm:$0xff] %v3784
  %3789 = vst [vmem:[#allocation2 + $0x18] sm:$0xff] %v3785
  %v3790 = vpack.c.bf16 %v3723, %v3722
  %v3791 = vpack.c.bf16 %v3725, %v3724
  %v3792 = vpack.c.bf16 %v3727, %v3726
  %v3793 = vpack.c.bf16 %v3729, %v3728
  %3794 = vst [vmem:[#allocation2 + $0x20] sm:$0xff] %v3790
  %3795 = vst [vmem:[#allocation2 + $0x28] sm:$0xff] %v3791
  %3796 = vst [vmem:[#allocation2 + $0x30] sm:$0xff] %v3792
  %3797 = vst [vmem:[#allocation2 + $0x38] sm:$0xff] %v3793
  %v3798 = vpack.c.bf16 %v3775, %v3774
  %v3799 = vpack.c.bf16 %v3777, %v3776
  %v3800 = vpack.c.bf16 %v3779, %v3778
  %v3801 = vpack.c.bf16 %v3781, %v3780
  %3802 = vst [vmem:[#allocation2 + $0x40] sm:$0xff] %v3798
  %3803 = vst [vmem:[#allocation2 + $0x48] sm:$0xff] %v3799
  %3804 = vst [vmem:[#allocation2 + $0x50] sm:$0xff] %v3800
  %3805 = vst [vmem:[#allocation2 + $0x58] sm:$0xff] %v3801
  %v3806 = vld [vmem:[%s6] sm:$0xff]
  %v3807 = vld [vmem:[%s6 + $0x8] sm:$0xff]
  %v3808 = vld [vmem:[%s6 + $0x10] sm:$0xff]
  %v3809 = vld [vmem:[%s6 + $0x18] sm:$0xff]
  %v3810 = vld [vmem:[%s6 + $0x20] sm:$0xff]
  %v3811 = vld [vmem:[%s6 + $0x28] sm:$0xff]
  %v3812 = vld [vmem:[%s6 + $0x30] sm:$0xff]
  %v3813 = vld [vmem:[%s6 + $0x38] sm:$0xff]
  %v3814 = vld [vmem:[#allocation2] sm:$0xff]
  %v3815 = vld [vmem:[#allocation2 + $0x8] sm:$0xff]
  %v3816 = vld [vmem:[#allocation2 + $0x10] sm:$0xff]
  %v3817 = vld [vmem:[#allocation2 + $0x18] sm:$0xff]
  %v3818 = vld [vmem:[#allocation2 + $0x20] sm:$0xff]
  %v3819 = vld [vmem:[#allocation2 + $0x28] sm:$0xff]
  %v3820 = vld [vmem:[#allocation2 + $0x30] sm:$0xff]
  %v3821 = vld [vmem:[#allocation2 + $0x38] sm:$0xff]
  %v3822 = vld [vmem:[#allocation2 + $0x40] sm:$0xff]
  %v3823 = vld [vmem:[#allocation2 + $0x48] sm:$0xff]
  %v3824 = vld [vmem:[#allocation2 + $0x50] sm:$0xff]
  %v3825 = vld [vmem:[#allocation2 + $0x58] sm:$0xff]
  %v3826 = vld [vmem:[%s7] sm:$0xff]
  %v3827 = vld [vmem:[%s7 + $0x8] sm:$0xff]
  %v3828 = vld [vmem:[%s7 + $0x10] sm:$0xff]
  %v3829 = vld [vmem:[%s7 + $0x18] sm:$0xff]
  %v3830 = vld [vmem:[%s7 + $0x20] sm:$0xff]
  %v3831 = vld [vmem:[%s7 + $0x28] sm:$0xff]
  %v3832 = vld [vmem:[%s7 + $0x30] sm:$0xff]
  %v3833 = vld [vmem:[%s7 + $0x38] sm:$0xff]
  %3835 = vset.pattern.permute.xlu0 0
  %3836 = vperm.xlu0 %3835, %v3826
  %v3837 = vpop.permute.xlu0 %3836
  %3840 = vset.pattern.permute.xlu0 0
  %3841 = vperm.xlu0 %3840, %v3827
  %v3842 = vpop.permute.xlu0 %3841
  %3845 = vset.pattern.permute.xlu0 0
  %3846 = vperm.xlu0 %3845, %v3828
  %v3847 = vpop.permute.xlu0 %3846
  %3850 = vset.pattern.permute.xlu0 0
  %3851 = vperm.xlu0 %3850, %v3829
  %v3852 = vpop.permute.xlu0 %3851
  %3855 = vset.pattern.permute.xlu0 0
  %3856 = vperm.xlu0 %3855, %v3830
  %v3857 = vpop.permute.xlu0 %3856
  %3860 = vset.pattern.permute.xlu0 0
  %3861 = vperm.xlu0 %3860, %v3831
  %v3862 = vpop.permute.xlu0 %3861
  %3865 = vset.pattern.permute.xlu0 0
  %3866 = vperm.xlu0 %3865, %v3832
  %v3867 = vpop.permute.xlu0 %3866
  %3870 = vset.pattern.permute.xlu0 0
  %3871 = vperm.xlu0 %3870, %v3833
  %v3872 = vpop.permute.xlu0 %3871
  %v3882 = vunpack.c.l.b16 %v3806
  %v3883 = vunpack.c.h.b16 %v3806
  %v3884 = vunpack.c.l.b16 %v3807
  %v3885 = vunpack.c.h.b16 %v3807
  %v3886 = vunpack.c.l.b16 %v3808
  %v3887 = vunpack.c.h.b16 %v3808
  %v3888 = vunpack.c.l.b16 %v3809
  %v3889 = vunpack.c.h.b16 %v3809
  %v3890 = vunpack.c.l.b16 %v3810
  %v3891 = vunpack.c.h.b16 %v3810
  %v3892 = vunpack.c.l.b16 %v3811
  %v3893 = vunpack.c.h.b16 %v3811
  %v3894 = vunpack.c.l.b16 %v3812
  %v3895 = vunpack.c.h.b16 %v3812
  %v3896 = vunpack.c.l.b16 %v3813
  %v3897 = vunpack.c.h.b16 %v3813
  %v3898 = vpack.c.b16 %v3884, %v3882
  %v3899 = vpack.c.b16 %v3885, %v3883
  %v3900 = vpack.c.b16 %v3888, %v3886
  %v3901 = vpack.c.b16 %v3889, %v3887
  %v3902 = vpack.c.b16 %v3892, %v3890
  %v3903 = vpack.c.b16 %v3893, %v3891
  %v3904 = vpack.c.b16 %v3896, %v3894
  %v3905 = vpack.c.b16 %v3897, %v3895
  %v3911 = vsel %vm650, %v3899, 0
  %v3914 = vsel %vm650, %v3901, 0
  %v3917 = vsel %vm650, %v3903, 0
  %v3920 = vsel %vm650, %v3905, 0
  %3922 = vmatprep.subr.bf16.mxu0 0
  %3923 = vmatpush1.bf16.msra.mxu0 %v3814
  %3924 = vmatprep.subr.bf16.mxu0 0
  %3925 = vmatpush1.bf16.msra.mxu0 %v3815
  %3926 = vmatprep.subr.bf16.mxu0 0
  %3927 = vmatpush1.bf16.msra.mxu0 %v3816
  %3928 = vmatprep.subr.bf16.mxu0 0
  %3929 = vmatpush1.bf16.msra.mxu0 %v3817
  %3930 = vmatprep.subr.bf16.mxu0 0
  %3931 = vmatpush1.bf16.msra.mxu0 %v3818
  %3932 = vmatprep.subr.bf16.mxu0 0
  %3933 = vmatpush1.bf16.msra.mxu0 %v3819
  %3934 = vmatprep.subr.bf16.mxu0 0
  %3935 = vmatpush1.bf16.msra.mxu0 %v3820
  %3936 = vmatprep.subr.bf16.mxu0 0
  %3937 = vmatpush1.bf16.msra.mxu0 %v3821
  %3938 = vmatprep.subr.bf16.mxu0 0
  %3939 = vmatpush1.bf16.msra.mxu0 %v3822
  %3940 = vmatprep.subr.bf16.mxu0 0
  %3941 = vmatpush1.bf16.msra.mxu0 %v3823
  %3942 = vmatprep.subr.bf16.mxu0 0
  %3943 = vmatpush1.bf16.msra.mxu0 %v3824
  %3944 = vmatprep.subr.bf16.mxu0 0
  %3945 = vmatpush1.bf16.msra.mxu0 %v3825
  %3946 = vmatprep.subr.bf16.mxu0 0
  %3947 = vmatpush1.bf16.msra.mxu0 0
  %3948 = vmatprep.subr.bf16.mxu0 0
  %3949 = vmatpush1.bf16.msra.mxu0 0
  %3950 = vmatprep.subr.bf16.mxu0 0
  %3951 = vmatpush1.bf16.msra.mxu0 0
  %3952 = vmatprep.subr.bf16.mxu0 0
  %3953 = vmatpush1.bf16.msra.mxu0 0
  %3954 = vmatprep.mubr.bf16.mxu0 %v3911
  %3955 = vmatmul.mubr.bf16.gmra.mrb[0].mxu0 %v3898
  %v3956 = vpop.f32.mrb[0].mxu0
  %v3957 = vadd.f32 %v3837, %v3956
  %v3958 = vpop.f32.mrb[0].mxu0
  %v3959 = vpop.f32.mrb[0].mxu0
  %v3960 = vadd.f32 %v3842, %v3959
  %v3961 = vpop.f32.mrb[0].mxu0
  %3962 = vmatprep.mubr.bf16.mxu0 %v3914
  %3963 = vmatmul.mubr.bf16.gmra.mrb[0].mxu0 %v3900
  %v3964 = vpop.f32.mrb[0].mxu0
  %v3965 = vadd.f32 %v3847, %v3964
  %v3966 = vpop.f32.mrb[0].mxu0
  %v3967 = vpop.f32.mrb[0].mxu0
  %v3968 = vadd.f32 %v3852, %v3967
  %v3969 = vpop.f32.mrb[0].mxu0
  %3970 = vmatprep.mubr.bf16.mxu0 %v3917
  %3971 = vmatmul.mubr.bf16.gmra.mrb[0].mxu0 %v3902
  %v3972 = vpop.f32.mrb[0].mxu0
  %v3973 = vadd.f32 %v3857, %v3972
  %v3974 = vpop.f32.mrb[0].mxu0
  %v3975 = vpop.f32.mrb[0].mxu0
  %v3976 = vadd.f32 %v3862, %v3975
  %v3977 = vpop.f32.mrb[0].mxu0
  %3978 = vmatprep.mubr.bf16.mxu0 %v3920
  %3979 = vmatmul.mubr.bf16.gmra.mrb[0].mxu0 %v3904
  %v3980 = vpop.f32.mrb[0].mxu0
  %v3981 = vadd.f32 %v3867, %v3980
  %v3982 = vpop.f32.mrb[0].mxu0
  %v3983 = vpop.f32.mrb[0].mxu0
  %v3984 = vadd.f32 %v3872, %v3983
  %v3985 = vpop.f32.mrb[0].mxu0
  %3986 = vdwg.mxu0
  %v3987 = vmax.f32 %v3957, 0.0
  %v3988 = vmax.f32 %v3960, 0.0
  %v3989 = vmax.f32 %v3965, 0.0
  %v3990 = vmax.f32 %v3968, 0.0
  %v3991 = vmax.f32 %v3973, 0.0
  %v3992 = vmax.f32 %v3976, 0.0
  %v3993 = vmax.f32 %v3981, 0.0
  %v3994 = vmax.f32 %v3984, 0.0
  %3995 = vrot.lane.b32.xlu0 %v3987, 2
  %v3996 = vpop.permute.xlu0 %3995
  %3997 = vrot.lane.b32.xlu0 %v3988, 2
  %v3998 = vpop.permute.xlu0 %3997
  %3999 = vrot.lane.b32.xlu0 %v3989, 2
  %v4000 = vpop.permute.xlu0 %3999
  %4001 = vrot.lane.b32.xlu0 %v3990, 2
  %v4002 = vpop.permute.xlu0 %4001
  %4003 = vrot.lane.b32.xlu0 %v3991, 2
  %v4004 = vpop.permute.xlu0 %4003
  %4005 = vrot.lane.b32.xlu0 %v3992, 2
  %v4006 = vpop.permute.xlu0 %4005
  %4007 = vrot.lane.b32.xlu0 %v3993, 2
  %v4008 = vpop.permute.xlu0 %4007
  %4009 = vrot.lane.b32.xlu0 %v3994, 2
  %v4010 = vpop.permute.xlu0 %4009
  %v4011 = vsel %vm59, 1, 0
  %vm4012 = vcmp.eq.s32.totalorder %v4011, 1
  %v4013 = vsel %vm4012, %v3996, 0.0
  %v4014 = vsel %vm4012, %v3998, 0.0
  %v4015 = vsel %vm4012, %v4000, 0.0
  %v4016 = vsel %vm4012, %v4002, 0.0
  %v4017 = vsel %vm4012, %v4004, 0.0
  %v4018 = vsel %vm4012, %v4006, 0.0
  %v4019 = vsel %vm4012, %v4008, 0.0
  %v4020 = vsel %vm4012, %v4010, 0.0
  %4021 = vrot.lane.b32.xlu0 %v3987, 126
  %v4022 = vpop.permute.xlu0 %4021
  %4023 = vrot.lane.b32.xlu0 %v3988, 126
  %v4024 = vpop.permute.xlu0 %4023
  %4025 = vrot.lane.b32.xlu0 %v3989, 126
  %v4026 = vpop.permute.xlu0 %4025
  %4027 = vrot.lane.b32.xlu0 %v3990, 126
  %v4028 = vpop.permute.xlu0 %4027
  %4029 = vrot.lane.b32.xlu0 %v3991, 126
  %v4030 = vpop.permute.xlu0 %4029
  %4031 = vrot.lane.b32.xlu0 %v3992, 126
  %v4032 = vpop.permute.xlu0 %4031
  %4033 = vrot.lane.b32.xlu0 %v3993, 126
  %v4034 = vpop.permute.xlu0 %4033
  %4035 = vrot.lane.b32.xlu0 %v3994, 126
  %v4036 = vpop.permute.xlu0 %4035
  %v4037 = vsel %vm61, 1, 0
  %vm4038 = vcmp.eq.s32.totalorder %v4037, 1
  %v4039 = vsel %vm4038, %v4022, 0.0
  %v4040 = vsel %vm4038, %v4024, 0.0
  %v4041 = vsel %vm4038, %v4026, 0.0
  %v4042 = vsel %vm4038, %v4028, 0.0
  %v4043 = vsel %vm4038, %v4030, 0.0
  %v4044 = vsel %vm4038, %v4032, 0.0
  %v4045 = vsel %vm4038, %v4034, 0.0
  %v4046 = vsel %vm4038, %v4036, 0.0
  %v4047 = vpack.c.bf16 %v4014, %v4013
  %v4048 = vpack.c.bf16 %v4016, %v4015
  %v4049 = vpack.c.bf16 %v4018, %v4017
  %v4050 = vpack.c.bf16 %v4020, %v4019
  %4051 = vst [vmem:[#allocation2] sm:$0xff] %v4047
  %4052 = vst [vmem:[#allocation2 + $0x8] sm:$0xff] %v4048
  %4053 = vst [vmem:[#allocation2 + $0x10] sm:$0xff] %v4049
  %4054 = vst [vmem:[#allocation2 + $0x18] sm:$0xff] %v4050
  %v4055 = vpack.c.bf16 %v3988, %v3987
  %v4056 = vpack.c.bf16 %v3990, %v3989
  %v4057 = vpack.c.bf16 %v3992, %v3991
  %v4058 = vpack.c.bf16 %v3994, %v3993
  %4059 = vst [vmem:[#allocation2 + $0x20] sm:$0xff] %v4055
  %4060 = vst [vmem:[#allocation2 + $0x28] sm:$0xff] %v4056
  %4061 = vst [vmem:[#allocation2 + $0x30] sm:$0xff] %v4057
  %4062 = vst [vmem:[#allocation2 + $0x38] sm:$0xff] %v4058
  %v4063 = vpack.c.bf16 %v4040, %v4039
  %v4064 = vpack.c.bf16 %v4042, %v4041
  %v4065 = vpack.c.bf16 %v4044, %v4043
  %v4066 = vpack.c.bf16 %v4046, %v4045
  %4067 = vst [vmem:[#allocation2 + $0x40] sm:$0xff] %v4063
  %4068 = vst [vmem:[#allocation2 + $0x48] sm:$0xff] %v4064
  %4069 = vst [vmem:[#allocation2 + $0x50] sm:$0xff] %v4065
  %4070 = vst [vmem:[#allocation2 + $0x58] sm:$0xff] %v4066
  %v4071 = vld [vmem:[%s8] sm:$0xff]
  %v4072 = vld [vmem:[%s8 + $0x8] sm:$0xff]
  %v4073 = vld [vmem:[%s8 + $0x10] sm:$0xff]
  %v4074 = vld [vmem:[%s8 + $0x18] sm:$0xff]
  %v4075 = vld [vmem:[%s8 + $0x20] sm:$0xff]
  %v4076 = vld [vmem:[%s8 + $0x28] sm:$0xff]
  %v4077 = vld [vmem:[%s8 + $0x30] sm:$0xff]
  %v4078 = vld [vmem:[%s8 + $0x38] sm:$0xff]
  %v4079 = vld [vmem:[#allocation2] sm:$0xff]
  %v4080 = vld [vmem:[#allocation2 + $0x8] sm:$0xff]
  %v4081 = vld [vmem:[#allocation2 + $0x10] sm:$0xff]
  %v4082 = vld [vmem:[#allocation2 + $0x18] sm:$0xff]
  %v4083 = vld [vmem:[#allocation2 + $0x20] sm:$0xff]
  %v4084 = vld [vmem:[#allocation2 + $0x28] sm:$0xff]
  %v4085 = vld [vmem:[#allocation2 + $0x30] sm:$0xff]
  %v4086 = vld [vmem:[#allocation2 + $0x38] sm:$0xff]
  %v4087 = vld [vmem:[#allocation2 + $0x40] sm:$0xff]
  %v4088 = vld [vmem:[#allocation2 + $0x48] sm:$0xff]
  %v4089 = vld [vmem:[#allocation2 + $0x50] sm:$0xff]
  %v4090 = vld [vmem:[#allocation2 + $0x58] sm:$0xff]
  %v4091 = vld [vmem:[%s9] sm:$0xff]
  %v4092 = vld [vmem:[%s9 + $0x8] sm:$0xff]
  %v4093 = vld [vmem:[%s9 + $0x10] sm:$0xff]
  %v4094 = vld [vmem:[%s9 + $0x18] sm:$0xff]
  %v4095 = vld [vmem:[%s9 + $0x20] sm:$0xff]
  %v4096 = vld [vmem:[%s9 + $0x28] sm:$0xff]
  %v4097 = vld [vmem:[%s9 + $0x30] sm:$0xff]
  %v4098 = vld [vmem:[%s9 + $0x38] sm:$0xff]
  %4100 = vset.pattern.permute.xlu0 0
  %4101 = vperm.xlu0 %4100, %v4091
  %v4102 = vpop.permute.xlu0 %4101
  %4105 = vset.pattern.permute.xlu0 0
  %4106 = vperm.xlu0 %4105, %v4092
  %v4107 = vpop.permute.xlu0 %4106
  %4110 = vset.pattern.permute.xlu0 0
  %4111 = vperm.xlu0 %4110, %v4093
  %v4112 = vpop.permute.xlu0 %4111
  %4115 = vset.pattern.permute.xlu0 0
  %4116 = vperm.xlu0 %4115, %v4094
  %v4117 = vpop.permute.xlu0 %4116
  %4120 = vset.pattern.permute.xlu0 0
  %4121 = vperm.xlu0 %4120, %v4095
  %v4122 = vpop.permute.xlu0 %4121
  %4125 = vset.pattern.permute.xlu0 0
  %4126 = vperm.xlu0 %4125, %v4096
  %v4127 = vpop.permute.xlu0 %4126
  %4130 = vset.pattern.permute.xlu0 0
  %4131 = vperm.xlu0 %4130, %v4097
  %v4132 = vpop.permute.xlu0 %4131
  %4135 = vset.pattern.permute.xlu0 0
  %4136 = vperm.xlu0 %4135, %v4098
  %v4137 = vpop.permute.xlu0 %4136
  %v4147 = vunpack.c.l.b16 %v4071
  %v4148 = vunpack.c.h.b16 %v4071
  %v4149 = vunpack.c.l.b16 %v4072
  %v4150 = vunpack.c.h.b16 %v4072
  %v4151 = vunpack.c.l.b16 %v4073
  %v4152 = vunpack.c.h.b16 %v4073
  %v4153 = vunpack.c.l.b16 %v4074
  %v4154 = vunpack.c.h.b16 %v4074
  %v4155 = vunpack.c.l.b16 %v4075
  %v4156 = vunpack.c.h.b16 %v4075
  %v4157 = vunpack.c.l.b16 %v4076
  %v4158 = vunpack.c.h.b16 %v4076
  %v4159 = vunpack.c.l.b16 %v4077
  %v4160 = vunpack.c.h.b16 %v4077
  %v4161 = vunpack.c.l.b16 %v4078
  %v4162 = vunpack.c.h.b16 %v4078
  %v4163 = vpack.c.b16 %v4149, %v4147
  %v4164 = vpack.c.b16 %v4150, %v4148
  %v4165 = vpack.c.b16 %v4153, %v4151
  %v4166 = vpack.c.b16 %v4154, %v4152
  %v4167 = vpack.c.b16 %v4157, %v4155
  %v4168 = vpack.c.b16 %v4158, %v4156
  %v4169 = vpack.c.b16 %v4161, %v4159
  %v4170 = vpack.c.b16 %v4162, %v4160
  %v4176 = vsel %vm650, %v4164, 0
  %v4179 = vsel %vm650, %v4166, 0
  %v4182 = vsel %vm650, %v4168, 0
  %v4185 = vsel %vm650, %v4170, 0
  %4187 = vmatprep.subr.bf16.mxu0 0
  %4188 = vmatpush1.bf16.msra.mxu0 %v4079
  %4189 = vmatprep.subr.bf16.mxu0 0
  %4190 = vmatpush1.bf16.msra.mxu0 %v4080
  %4191 = vmatprep.subr.bf16.mxu0 0
  %4192 = vmatpush1.bf16.msra.mxu0 %v4081
  %4193 = vmatprep.subr.bf16.mxu0 0
  %4194 = vmatpush1.bf16.msra.mxu0 %v4082
  %4195 = vmatprep.subr.bf16.mxu0 0
  %4196 = vmatpush1.bf16.msra.mxu0 %v4083
  %4197 = vmatprep.subr.bf16.mxu0 0
  %4198 = vmatpush1.bf16.msra.mxu0 %v4084
  %4199 = vmatprep.subr.bf16.mxu0 0
  %4200 = vmatpush1.bf16.msra.mxu0 %v4085
  %4201 = vmatprep.subr.bf16.mxu0 0
  %4202 = vmatpush1.bf16.msra.mxu0 %v4086
  %4203 = vmatprep.subr.bf16.mxu0 0
  %4204 = vmatpush1.bf16.msra.mxu0 %v4087
  %4205 = vmatprep.subr.bf16.mxu0 0
  %4206 = vmatpush1.bf16.msra.mxu0 %v4088
  %4207 = vmatprep.subr.bf16.mxu0 0
  %4208 = vmatpush1.bf16.msra.mxu0 %v4089
  %4209 = vmatprep.subr.bf16.mxu0 0
  %4210 = vmatpush1.bf16.msra.mxu0 %v4090
  %4211 = vmatprep.subr.bf16.mxu0 0
  %4212 = vmatpush1.bf16.msra.mxu0 0
  %4213 = vmatprep.subr.bf16.mxu0 0
  %4214 = vmatpush1.bf16.msra.mxu0 0
  %4215 = vmatprep.subr.bf16.mxu0 0
  %4216 = vmatpush1.bf16.msra.mxu0 0
  %4217 = vmatprep.subr.bf16.mxu0 0
  %4218 = vmatpush1.bf16.msra.mxu0 0
  %4219 = vmatprep.mubr.bf16.mxu0 %v4176
  %4220 = vmatmul.mubr.bf16.gmra.mrb[0].mxu0 %v4163
  %v4221 = vpop.f32.mrb[0].mxu0
  %v4222 = vadd.f32 %v4102, %v4221
  %v4223 = vpop.f32.mrb[0].mxu0
  %v4224 = vpop.f32.mrb[0].mxu0
  %v4225 = vadd.f32 %v4107, %v4224
  %v4226 = vpop.f32.mrb[0].mxu0
  %4227 = vmatprep.mubr.bf16.mxu0 %v4179
  %4228 = vmatmul.mubr.bf16.gmra.mrb[0].mxu0 %v4165
  %v4229 = vpop.f32.mrb[0].mxu0
  %v4230 = vadd.f32 %v4112, %v4229
  %v4231 = vpop.f32.mrb[0].mxu0
  %v4232 = vpop.f32.mrb[0].mxu0
  %v4233 = vadd.f32 %v4117, %v4232
  %v4234 = vpop.f32.mrb[0].mxu0
  %4235 = vmatprep.mubr.bf16.mxu0 %v4182
  %4236 = vmatmul.mubr.bf16.gmra.mrb[0].mxu0 %v4167
  %v4237 = vpop.f32.mrb[0].mxu0
  %v4238 = vadd.f32 %v4122, %v4237
  %v4239 = vpop.f32.mrb[0].mxu0
  %v4240 = vpop.f32.mrb[0].mxu0
  %v4241 = vadd.f32 %v4127, %v4240
  %v4242 = vpop.f32.mrb[0].mxu0
  %4243 = vmatprep.mubr.bf16.mxu0 %v4185
  %4244 = vmatmul.mubr.bf16.gmra.mrb[0].mxu0 %v4169
  %v4245 = vpop.f32.mrb[0].mxu0
  %v4246 = vadd.f32 %v4132, %v4245
  %v4247 = vpop.f32.mrb[0].mxu0
  %v4248 = vpop.f32.mrb[0].mxu0
  %v4249 = vadd.f32 %v4137, %v4248
  %v4250 = vpop.f32.mrb[0].mxu0
  %4251 = vdwg.mxu0
  %v4252 = vmax.f32 %v4222, 0.0
  %v4253 = vmax.f32 %v4225, 0.0
  %v4254 = vmax.f32 %v4230, 0.0
  %v4255 = vmax.f32 %v4233, 0.0
  %v4256 = vmax.f32 %v4238, 0.0
  %v4257 = vmax.f32 %v4241, 0.0
  %v4258 = vmax.f32 %v4246, 0.0
  %v4259 = vmax.f32 %v4249, 0.0
  %4260 = vrot.lane.b32.xlu0 %v4252, 2
  %v4261 = vpop.permute.xlu0 %4260
  %4262 = vrot.lane.b32.xlu0 %v4253, 2
  %v4263 = vpop.permute.xlu0 %4262
  %4264 = vrot.lane.b32.xlu0 %v4254, 2
  %v4265 = vpop.permute.xlu0 %4264
  %4266 = vrot.lane.b32.xlu0 %v4255, 2
  %v4267 = vpop.permute.xlu0 %4266
  %4268 = vrot.lane.b32.xlu0 %v4256, 2
  %v4269 = vpop.permute.xlu0 %4268
  %4270 = vrot.lane.b32.xlu0 %v4257, 2
  %v4271 = vpop.permute.xlu0 %4270
  %4272 = vrot.lane.b32.xlu0 %v4258, 2
  %v4273 = vpop.permute.xlu0 %4272
  %4274 = vrot.lane.b32.xlu0 %v4259, 2
  %v4275 = vpop.permute.xlu0 %4274
  %v4276 = vsel %vm4012, %v4261, 0.0
  %v4277 = vsel %vm4012, %v4263, 0.0
  %v4278 = vsel %vm4012, %v4265, 0.0
  %v4279 = vsel %vm4012, %v4267, 0.0
  %v4280 = vsel %vm4012, %v4269, 0.0
  %v4281 = vsel %vm4012, %v4271, 0.0
  %v4282 = vsel %vm4012, %v4273, 0.0
  %v4283 = vsel %vm4012, %v4275, 0.0
  %4284 = vrot.lane.b32.xlu0 %v4252, 126
  %v4285 = vpop.permute.xlu0 %4284
  %4286 = vrot.lane.b32.xlu0 %v4253, 126
  %v4287 = vpop.permute.xlu0 %4286
  %4288 = vrot.lane.b32.xlu0 %v4254, 126
  %v4289 = vpop.permute.xlu0 %4288
  %4290 = vrot.lane.b32.xlu0 %v4255, 126
  %v4291 = vpop.permute.xlu0 %4290
  %4292 = vrot.lane.b32.xlu0 %v4256, 126
  %v4293 = vpop.permute.xlu0 %4292
  %4294 = vrot.lane.b32.xlu0 %v4257, 126
  %v4295 = vpop.permute.xlu0 %4294
  %4296 = vrot.lane.b32.xlu0 %v4258, 126
  %v4297 = vpop.permute.xlu0 %4296
  %4298 = vrot.lane.b32.xlu0 %v4259, 126
  %v4299 = vpop.permute.xlu0 %4298
  %v4300 = vsel %vm4038, %v4285, 0.0
  %v4301 = vsel %vm4038, %v4287, 0.0
  %v4302 = vsel %vm4038, %v4289, 0.0
  %v4303 = vsel %vm4038, %v4291, 0.0
  %v4304 = vsel %vm4038, %v4293, 0.0
  %v4305 = vsel %vm4038, %v4295, 0.0
  %v4306 = vsel %vm4038, %v4297, 0.0
  %v4307 = vsel %vm4038, %v4299, 0.0
  %v4308 = vpack.c.bf16 %v4277, %v4276
  %v4309 = vpack.c.bf16 %v4279, %v4278
  %v4310 = vpack.c.bf16 %v4281, %v4280
  %v4311 = vpack.c.bf16 %v4283, %v4282
  %4312 = vst [vmem:[#allocation2] sm:$0xff] %v4308
  %4313 = vst [vmem:[#allocation2 + $0x8] sm:$0xff] %v4309
  %4314 = vst [vmem:[#allocation2 + $0x10] sm:$0xff] %v4310
  %4315 = vst [vmem:[#allocation2 + $0x18] sm:$0xff] %v4311
  %v4316 = vpack.c.bf16 %v4253, %v4252
  %v4317 = vpack.c.bf16 %v4255, %v4254
  %v4318 = vpack.c.bf16 %v4257, %v4256
  %v4319 = vpack.c.bf16 %v4259, %v4258
  %4320 = vst [vmem:[#allocation2 + $0x20] sm:$0xff] %v4316
  %4321 = vst [vmem:[#allocation2 + $0x28] sm:$0xff] %v4317
  %4322 = vst [vmem:[#allocation2 + $0x30] sm:$0xff] %v4318
  %4323 = vst [vmem:[#allocation2 + $0x38] sm:$0xff] %v4319
  %v4324 = vpack.c.bf16 %v4301, %v4300
  %v4325 = vpack.c.bf16 %v4303, %v4302
  %v4326 = vpack.c.bf16 %v4305, %v4304
  %v4327 = vpack.c.bf16 %v4307, %v4306
  %4328 = vst [vmem:[#allocation2 + $0x40] sm:$0xff] %v4324
  %4329 = vst [vmem:[#allocation2 + $0x48] sm:$0xff] %v4325
  %4330 = vst [vmem:[#allocation2 + $0x50] sm:$0xff] %v4326
  %4331 = vst [vmem:[#allocation2 + $0x58] sm:$0xff] %v4327
  %v4332 = vld [vmem:[%s10] sm:$0xff]
  %v4333 = vld [vmem:[%s10 + $0x8] sm:$0x11]
  %v4334 = vld [vmem:[#allocation2] sm:$0xff]
  %v4335 = vld [vmem:[#allocation2 + $0x8] sm:$0xff]
  %v4336 = vld [vmem:[#allocation2 + $0x10] sm:$0xff]
  %v4337 = vld [vmem:[#allocation2 + $0x18] sm:$0xff]
  %v4338 = vld [vmem:[#allocation2 + $0x20] sm:$0xff]
  %v4339 = vld [vmem:[#allocation2 + $0x28] sm:$0xff]
  %v4340 = vld [vmem:[#allocation2 + $0x30] sm:$0xff]
  %v4341 = vld [vmem:[#allocation2 + $0x38] sm:$0xff]
  %v4342 = vld [vmem:[#allocation2 + $0x40] sm:$0xff]
  %v4343 = vld [vmem:[#allocation2 + $0x48] sm:$0xff]
  %v4344 = vld [vmem:[#allocation2 + $0x50] sm:$0xff]
  %v4345 = vld [vmem:[#allocation2 + $0x58] sm:$0xff]
  %v4348 = vunpack.c.l.b16 %v4332
  %v4349 = vunpack.c.h.b16 %v4332
  %v4350 = vunpack.c.l.b16 %v4333
  %v4351 = vunpack.c.h.b16 %v4333
  %v4352 = vpack.c.b16 %v4350, %v4348
  %v4353 = vpack.c.b16 %v4351, %v4349
  %v4356 = vsel %vm650, %v4353, 0
  %4358 = vmatprep.subr.bf16.mxu0 0
  %4359 = vmatpush1.bf16.msra.mxu0 %v4334
  %4360 = vmatprep.subr.bf16.mxu0 0
  %4361 = vmatpush1.bf16.msra.mxu0 %v4335
  %4362 = vmatprep.subr.bf16.mxu0 0
  %4363 = vmatpush1.bf16.msra.mxu0 %v4336
  %4364 = vmatprep.subr.bf16.mxu0 0
  %4365 = vmatpush1.bf16.msra.mxu0 %v4337
  %4366 = vmatprep.subr.bf16.mxu0 0
  %4367 = vmatpush1.bf16.msra.mxu0 %v4338
  %4368 = vmatprep.subr.bf16.mxu0 0
  %4369 = vmatpush1.bf16.msra.mxu0 %v4339
  %4370 = vmatprep.subr.bf16.mxu0 0
  %4371 = vmatpush1.bf16.msra.mxu0 %v4340
  %4372 = vmatprep.subr.bf16.mxu0 0
  %4373 = vmatpush1.bf16.msra.mxu0 %v4341
  %4374 = vmatprep.subr.bf16.mxu0 0
  %4375 = vmatpush1.bf16.msra.mxu0 %v4342
  %4376 = vmatprep.subr.bf16.mxu0 0
  %4377 = vmatpush1.bf16.msra.mxu0 %v4343
  %4378 = vmatprep.subr.bf16.mxu0 0
  %4379 = vmatpush1.bf16.msra.mxu0 %v4344
  %4380 = vmatprep.subr.bf16.mxu0 0
  %4381 = vmatpush1.bf16.msra.mxu0 %v4345
  %4382 = vmatprep.subr.bf16.mxu0 0
  %4383 = vmatpush1.bf16.msra.mxu0 0
  %4384 = vmatprep.subr.bf16.mxu0 0
  %4385 = vmatpush1.bf16.msra.mxu0 0
  %4386 = vmatprep.subr.bf16.mxu0 0
  %4387 = vmatpush1.bf16.msra.mxu0 0
  %4388 = vmatprep.subr.bf16.mxu0 0
  %4389 = vmatpush1.bf16.msra.mxu0 0
  %4390 = vmatprep.mubr.bf16.mxu0 %v4356
  %4391 = vmatmul.mubr.bf16.gmra.mrb[0].mxu0 %v4352
  %v4392 = vpop.f32.mrb[0].mxu0
  %v4393 = vadd.f32 0.0, %v4392
  %v4394 = vpop.f32.mrb[0].mxu0
  %v4395 = vpop.f32.mrb[0].mxu0
  %v4396 = vadd.f32 0.0, %v4395
  %v4397 = vpop.f32.mrb[0].mxu0
  %4398 = vdwg.mxu0
  %4399 = vst [vmem:[%s11] sm:$0xff] %v4393
  %4400 = vst [vmem:[%s11 + $0x8] sm:$0x3] %v4396
  // Predicated region
  $region46: #{auwgcn_forward.1} parent=0 // pred_check
    _
  $region47: #{auwgcn_forward.1} parent=0 // pred_check_branch
    %4402 = sbr.rel (0) target = $region49
  $region48: #{auwgcn_forward.1} parent=0 // pred_region
    _
  $region49: #{auwgcn_forward.1} parent=0 // pred_fallthru
    _
  // Predicated region
  $region50: #{auwgcn_forward.1} parent=0 // pred_check
    _
  $region51: #{auwgcn_forward.1} parent=0 // pred_check_branch
    %4404 = sbr.rel (0) target = $region53
  $region52: #{auwgcn_forward.1} parent=0 // pred_region
    _
  $region53: #{auwgcn_forward.1} parent=0 // pred_fallthru
    _

</llo_original>
